<compile_context>
chip_gen: v7x
topology: tpu7x:2x2x1
jax: 0.10.0
libtpu: 0.0.40
codegen_flags: <defaults>
</compile_context>

<pallas_src>
import functools

import jax
import jax.numpy as jnp
from jax.experimental import pallas as pl
from jax.experimental.pallas import tpu as pltpu


# ---------------------------------------------------------------------------
# In-kernel helpers.  All feature maps are (C, n) with n = N*H*W: channels on
# the sublane axis, the whole lane-packed batch of flattened spatial
# positions on the lane axis.
# ---------------------------------------------------------------------------
def _shift(f, d):
    """g[:, p] = f[:, (p + d) mod n] for a static integer shift d."""
    n = f.shape[-1]
    s = (-d) % n
    if s == 0:
        return f
    if n % 128 == 0:
        return pltpu.roll(f, shift=s, axis=1)   # XLU lane rotate (otherwise-idle slot)
    d = d % n                                   # tiny deepest level: concat fallback
    return jnp.concatenate([f[:, d:], f[:, :d]], axis=-1)


def _edge_masks(n, H, W):
    """Nine (1, n) f32 0/1 masks (index 4 is None), one per 3x3 tap.

    Lane p of a packed (C, n=B*H*W) map is pixel (row, col) of image
    p // (H*W); a tap (dh, dw) is valid iff it stays inside that image, which
    also kills any roll wrap-around across image boundaries.
    """
    pos = jax.lax.broadcasted_iota(jnp.int32, (1, n), 1)
    hw = H * W
    if (hw & (hw - 1)) == 0 and (W & (W - 1)) == 0:   # power-of-two fast path
        local = jnp.bitwise_and(pos, hw - 1)
        col = jnp.bitwise_and(local, W - 1)
        row = jnp.right_shift(local, W.bit_length() - 1)
    else:
        local = pos % hw
        col = local % W
        row = local // W
    ok_w = {-1: col > 0, 0: None, 1: col < W - 1}
    ok_h = {-1: row > 0, 0: None, 1: row < H - 1}
    masks = []
    for dh in (-1, 0, 1):
        for dw in (-1, 0, 1):
            conds = [c for c in (ok_h[dh], ok_w[dw]) if c is not None]
            if not conds:
                masks.append(None)                    # center tap: never masked
            else:
                ok = conds[0]
                for c in conds[1:]:
                    ok = jnp.logical_and(ok, c)
                masks.append(ok.astype(jnp.float32))
    return masks


def _conv3x3(f, w_ref, b_ref, masks, patch_ref, *, W, relu):
    """3x3 'same' conv as ONE im2col matmul: (Cin, n) -> (Cout, n) in f32.

    Taps gathered with lane rolls + hoisted border masks, stored as bf16 into
    the shared `patch_ref` scratch, then one bf16 x bf16 -> f32 MXU matmul
    against the packed (Cout, 9*Cin) weight.
    """
    cin, n = f.shape
    for k in range(9):
        dh, dw = k // 3 - 1, k % 3 - 1
        t = _shift(f, dh * W + dw)
        if masks[k] is not None:
            t = t * masks[k]                           # zero padding at borders
        patch_ref[k * cin:(k + 1) * cin, :n] = t.astype(jnp.bfloat16)
    out = jnp.dot(w_ref[...], patch_ref[:9 * cin, :n],
                  preferred_element_type=jnp.float32)  # (Cout, n) on the MXU
    out = out + b_ref[...]                             # (Cout, 1) broadcast
    if relu:
        out = jnp.maximum(out, 0.0)
    return out


def _maxpool2x2(f, sel_ref, *, W):
    """2x2/stride-2 maxpool: lane-shift window max + 0/1 selection matmul."""
    a = jnp.maximum(f, _shift(f, 1))                   # max over (w, w+1)
    m = jnp.maximum(a, _shift(a, W))                   # max over (h, h+1)
    return jnp.dot(m.astype(jnp.bfloat16), sel_ref[...],
                   preferred_element_type=jnp.float32)


def _upsample2x(f, sel_ref):
    """Nearest-neighbour 2x upsample as a 0/1 selection matmul."""
    return jnp.dot(f.astype(jnp.bfloat16), sel_ref[...],
                   preferred_element_type=jnp.float32)


# ---------------------------------------------------------------------------
# Fused UNet kernel: the whole lane-packed batch in one invocation.
# ---------------------------------------------------------------------------
def _unet_kernel(x_ref,
                 w0, b0, w1, b1, w2, b2, wd1, bd1, wd0, bd0, wh, bh,
                 p0, p1, u1, u0,
                 o_ref, patch_ref, *, H, W):
    H1, W1 = H // 2, W // 2
    H2, W2 = H // 4, W // 4
    n0 = x_ref.shape[-1]                               # N*H*W (batch on lanes)
    n1, n2 = n0 // 4, n0 // 16

    # Border masks: hoisted, computed once per resolution, reused by all convs.
    masks0 = _edge_masks(n0, H, W)
    masks1 = _edge_masks(n1, H1, W1)
    masks2 = _edge_masks(n2, H2, W2)

    x = x_ref[...]                                                    # (Cin_p, n0)

    # encoder
    f0 = _conv3x3(x, w0, b0, masks0, patch_ref, W=W, relu=True)       # (16, n0)
    f1 = _conv3x3(_maxpool2x2(f0, p0, W=W), w1, b1, masks1, patch_ref,
                  W=W1, relu=True)                                    # (32, n1)
    f2 = _conv3x3(_maxpool2x2(f1, p1, W=W1), w2, b2, masks2, patch_ref,
                  W=W2, relu=True)                                    # (64, n2)

    # decoder (upsample + skip-concat + conv)
    d1 = _conv3x3(jnp.concatenate([_upsample2x(f2, u1), f1], axis=0),
                  wd1, bd1, masks1, patch_ref, W=W1, relu=True)       # (32, n1)
    d0 = _conv3x3(jnp.concatenate([_upsample2x(d1, u0), f0], axis=0),
                  wd0, bd0, masks0, patch_ref, W=W, relu=True)        # (16, n0)

    # segmentation head: Conv2d(dec_ch, out_ch, 3, padding=1), identity act.
    o_ref[...] = _conv3x3(d0, wh, bh, masks0, patch_ref, W=W, relu=False)


# ---------------------------------------------------------------------------
# Host-side packing helpers (all MXU operands produced in bf16).
# ---------------------------------------------------------------------------
def _as_matmul_weight(w):
    """(3, 3, Cin, Cout) -> bf16 (Cout, 9*Cin), rows tap-major / channel-minor."""
    cout = w.shape[-1]
    return jnp.transpose(w, (3, 0, 1, 2)).reshape(cout, -1).astype(jnp.bfloat16)


def _pool_matrix(B, H, W):
    """bf16 (B*H*W, B*(H/2)*(W/2)) 0/1 matrix selecting the top-left pixel of
    each 2x2 window; block-diagonal over the lane-packed batch."""
    H2, W2 = H // 2, W // 2
    p = jnp.arange(B * H * W)
    b, local = p // (H * W), p % (H * W)
    h, w = local // W, local % W
    q = b * (H2 * W2) + (h // 2) * W2 + (w // 2)
    sel = ((h % 2) == 0) & ((w % 2) == 0)
    m = jnp.where(sel[:, None],
                  jax.nn.one_hot(q, B * H2 * W2, dtype=jnp.float32), 0.0)
    return m.astype(jnp.bfloat16)


def _upsample_matrix(B, H2, W2):
    """bf16 (B*H2*W2, B*(2H2)*(2W2)) 0/1 nearest-neighbour upsample matrix."""
    H, W = 2 * H2, 2 * W2
    p = jnp.arange(B * H * W)
    b, local = p // (H * W), p % (H * W)
    h, w = local // W, local % W
    q = b * (H2 * W2) + (h // 2) * W2 + (w // 2)
    return jnp.transpose(
        jax.nn.one_hot(q, B * H2 * W2, dtype=jnp.float32)).astype(jnp.bfloat16)


# ---------------------------------------------------------------------------
# Parameters (deterministic, Kaiming-ish scaling)
# ---------------------------------------------------------------------------
def _conv_params(key, cin, cout):
    kw_, kb_ = jax.random.split(key)
    scale = jnp.sqrt(2.0 / (9.0 * cin))
    w = jax.random.normal(kw_, (3, 3, cin, cout), jnp.float32) * scale
    b = jax.random.normal(kb_, (cout,), jnp.float32) * 0.01
    return w, b


def init_params(key, in_ch=3, out_ch=2):
    keys = jax.random.split(key, 6)
    return {
        "enc0": _conv_params(keys[0], in_ch, 16),     # full-res feature
        "enc1": _conv_params(keys[1], 16, 32),        # 1/2-res feature
        "enc2": _conv_params(keys[2], 32, 64),        # 1/4-res feature (deepest)
        "dec1": _conv_params(keys[3], 64 + 32, 32),
        "dec0": _conv_params(keys[4], 32 + 16, 16),
        "head": _conv_params(keys[5], 16, out_ch),    # segmentation head
    }


# ---------------------------------------------------------------------------
# Forward pass (eval mode): one fused, grid-free pallas_call.
# ---------------------------------------------------------------------------
def net_forward(params, x_nchw):
    N, cin, H, W = x_nchw.shape
    assert H % 4 == 0 and W % 4 == 0 and H >= 4 and W >= 4, (H, W)
    HW = H * W
    out_ch = params["head"][0].shape[-1]

    # NCHW -> (C, N*HW): whole batch packed onto the lane axis (lane-dense).
    x = jnp.transpose(x_nchw.reshape(N, cin, HW), (1, 0, 2)).reshape(cin, N * HW)

    # Pad input channels to a multiple of 16 (bf16 sublane packing alignment).
    pad_c = (-cin) % 16
    w_enc0, b_enc0 = params["enc0"]
    if pad_c:
        x = jnp.pad(x, ((0, pad_c), (0, 0)))
        w_enc0 = jnp.pad(w_enc0, ((0, 0), (0, 0), (0, pad_c), (0, 0)))

    layer_params = [(w_enc0, b_enc0)] + [
        params[k] for k in ("enc1", "enc2", "dec1", "dec0", "head")]
    mats = []
    for w, b in layer_params:
        mats.append(_as_matmul_weight(w))                     # bf16 (Cout, 9*Cin)
        mats.append(b.reshape(-1, 1).astype(jnp.float32))     # f32  (Cout, 1)

    # Pool / upsample selection matrices (bf16, block-diagonal over the batch).
    # TODO(synk): these are O((N*H*W)^2); for realistic resolutions factor them
    # per-axis (or use strided copies) and spatially tile with 1-pixel halos so
    # the fused working set fits the per-generation VMEM budget (64 MiB v7x).
    sels = [_pool_matrix(N, H, W), _pool_matrix(N, H // 2, W // 2),
            _upsample_matrix(N, H // 4, W // 4),
            _upsample_matrix(N, H // 2, W // 2)]

    # One shared bf16 scratch reused for every conv's im2col patches.
    max_patch_rows = max(m.shape[1] for m in mats[0::2])      # max 9*Cin
    scratch = pltpu.VMEM((max_patch_rows, N * HW), jnp.bfloat16)

    kernel = functools.partial(_unet_kernel, H=H, W=W)

    # Single grid-free invocation: the whole (tiny) batch is one lane-packed
    # step, so grid-invariant weights are not double-buffered and there is no
    # per-grid-step overhead.
    # TODO(synk): above a per-core work threshold, chunk the batch over a
    # grid marked "parallel" so v7x's two TensorCores each get real work.
    out = pl.pallas_call(
        kernel,
        out_shape=jax.ShapeDtypeStruct((out_ch, N * HW), jnp.float32),
        scratch_shapes=[scratch],
    )(x, *mats, *sels)

    # (out_ch, N*HW) -> NCHW
    return jnp.transpose(out.reshape(out_ch, N, H, W), (1, 0, 2, 3))


if __name__ == "__main__":
    key = jax.random.PRNGKey(0)
    k_param, k_x = jax.random.split(key)

    in_ch, out_ch = 3, 2
    N, H, W = 2, 16, 16

    params = init_params(k_param, in_ch=in_ch, out_ch=out_ch)
    x = jax.random.normal(k_x, (N, in_ch, H, W), jnp.float32)   # NCHW, like PyTorch

    out = jax.jit(net_forward)(params, x)
    jax.block_until_ready(out)

    assert out.shape == (N, out_ch, H, W), out.shape
    assert bool(jnp.all(jnp.isfinite(out))), "non-finite output"
    print("KERNEL_OK")
</pallas_src>

<mosaic_0001>
module attributes {stable_mosaic.version = 11 : i64} {
  func.func @_unet_kernel(%arg0: memref<16x512xf32, #tpu.memory_space<vmem>>, %arg1: memref<16x144xbf16, #tpu.memory_space<vmem>>, %arg2: memref<16x1xf32, #tpu.memory_space<vmem>>, %arg3: memref<32x144xbf16, #tpu.memory_space<vmem>>, %arg4: memref<32x1xf32, #tpu.memory_space<vmem>>, %arg5: memref<64x288xbf16, #tpu.memory_space<vmem>>, %arg6: memref<64x1xf32, #tpu.memory_space<vmem>>, %arg7: memref<32x864xbf16, #tpu.memory_space<vmem>>, %arg8: memref<32x1xf32, #tpu.memory_space<vmem>>, %arg9: memref<16x432xbf16, #tpu.memory_space<vmem>>, %arg10: memref<16x1xf32, #tpu.memory_space<vmem>>, %arg11: memref<2x144xbf16, #tpu.memory_space<vmem>>, %arg12: memref<2x1xf32, #tpu.memory_space<vmem>>, %arg13: memref<512x128xbf16, #tpu.memory_space<vmem>>, %arg14: memref<128x32xbf16, #tpu.memory_space<vmem>>, %arg15: memref<32x128xbf16, #tpu.memory_space<vmem>>, %arg16: memref<128x512xbf16, #tpu.memory_space<vmem>>, %arg17: memref<2x512xf32, #tpu.memory_space<vmem>>, %arg18: memref<864x512xbf16, #tpu.memory_space<vmem>>) attributes {dimension_semantics = [], scalar_prefetch = 0 : i64, scratch_operands = 1 : i64, tpu.core_type = #tpu.core_type<tc>} {
    %0 = tpu.iota {dimensions = array<i32: 1>} : vector<1x512xi32>
    %c255_i32 = arith.constant 255 : i32
    %1 = vector.broadcast %c255_i32 : i32 to vector<1x512xi32>
    %2 = arith.andi %0, %1 : vector<1x512xi32>
    %c15_i32 = arith.constant 15 : i32
    %3 = vector.broadcast %c15_i32 : i32 to vector<1x512xi32>
    %4 = arith.andi %2, %3 : vector<1x512xi32>
    %c4_i32 = arith.constant 4 : i32
    %5 = vector.broadcast %c4_i32 : i32 to vector<1x512xi32>
    %6 = arith.shrsi %2, %5 : vector<1x512xi32>
    %c0_i32 = arith.constant 0 : i32
    %7 = vector.broadcast %c0_i32 : i32 to vector<1x512xi32>
    %8 = arith.cmpi sgt, %4, %7 : vector<1x512xi32>
    %c15_i32_0 = arith.constant 15 : i32
    %9 = vector.broadcast %c15_i32_0 : i32 to vector<1x512xi32>
    %10 = arith.cmpi slt, %4, %9 : vector<1x512xi32>
    %c0_i32_1 = arith.constant 0 : i32
    %11 = vector.broadcast %c0_i32_1 : i32 to vector<1x512xi32>
    %12 = arith.cmpi sgt, %6, %11 : vector<1x512xi32>
    %c15_i32_2 = arith.constant 15 : i32
    %13 = vector.broadcast %c15_i32_2 : i32 to vector<1x512xi32>
    %14 = arith.cmpi slt, %6, %13 : vector<1x512xi32>
    %15 = arith.andi %12, %8 : vector<1x512xi1>
    %16 = arith.extui %15 : vector<1x512xi1> to vector<1x512xi32>
    %17 = arith.sitofp %16 : vector<1x512xi32> to vector<1x512xf32>
    %18 = arith.extui %12 : vector<1x512xi1> to vector<1x512xi32>
    %19 = arith.sitofp %18 : vector<1x512xi32> to vector<1x512xf32>
    %20 = arith.andi %12, %10 : vector<1x512xi1>
    %21 = arith.extui %20 : vector<1x512xi1> to vector<1x512xi32>
    %22 = arith.sitofp %21 : vector<1x512xi32> to vector<1x512xf32>
    %23 = arith.extui %8 : vector<1x512xi1> to vector<1x512xi32>
    %24 = arith.sitofp %23 : vector<1x512xi32> to vector<1x512xf32>
    %25 = arith.extui %10 : vector<1x512xi1> to vector<1x512xi32>
    %26 = arith.sitofp %25 : vector<1x512xi32> to vector<1x512xf32>
    %27 = arith.andi %14, %8 : vector<1x512xi1>
    %28 = arith.extui %27 : vector<1x512xi1> to vector<1x512xi32>
    %29 = arith.sitofp %28 : vector<1x512xi32> to vector<1x512xf32>
    %30 = arith.extui %14 : vector<1x512xi1> to vector<1x512xi32>
    %31 = arith.sitofp %30 : vector<1x512xi32> to vector<1x512xf32>
    %32 = arith.andi %14, %10 : vector<1x512xi1>
    %33 = arith.extui %32 : vector<1x512xi1> to vector<1x512xi32>
    %34 = arith.sitofp %33 : vector<1x512xi32> to vector<1x512xf32>
    %35 = tpu.iota {dimensions = array<i32: 1>} : vector<1x128xi32>
    %c63_i32 = arith.constant 63 : i32
    %36 = vector.broadcast %c63_i32 : i32 to vector<1x128xi32>
    %37 = arith.andi %35, %36 : vector<1x128xi32>
    %c7_i32 = arith.constant 7 : i32
    %38 = vector.broadcast %c7_i32 : i32 to vector<1x128xi32>
    %39 = arith.andi %37, %38 : vector<1x128xi32>
    %c3_i32 = arith.constant 3 : i32
    %40 = vector.broadcast %c3_i32 : i32 to vector<1x128xi32>
    %41 = arith.shrsi %37, %40 : vector<1x128xi32>
    %c0_i32_3 = arith.constant 0 : i32
    %42 = vector.broadcast %c0_i32_3 : i32 to vector<1x128xi32>
    %43 = arith.cmpi sgt, %39, %42 : vector<1x128xi32>
    %c7_i32_4 = arith.constant 7 : i32
    %44 = vector.broadcast %c7_i32_4 : i32 to vector<1x128xi32>
    %45 = arith.cmpi slt, %39, %44 : vector<1x128xi32>
    %c0_i32_5 = arith.constant 0 : i32
    %46 = vector.broadcast %c0_i32_5 : i32 to vector<1x128xi32>
    %47 = arith.cmpi sgt, %41, %46 : vector<1x128xi32>
    %c7_i32_6 = arith.constant 7 : i32
    %48 = vector.broadcast %c7_i32_6 : i32 to vector<1x128xi32>
    %49 = arith.cmpi slt, %41, %48 : vector<1x128xi32>
    %50 = arith.andi %47, %43 : vector<1x128xi1>
    %51 = arith.extui %50 : vector<1x128xi1> to vector<1x128xi32>
    %52 = arith.sitofp %51 : vector<1x128xi32> to vector<1x128xf32>
    %53 = arith.extui %47 : vector<1x128xi1> to vector<1x128xi32>
    %54 = arith.sitofp %53 : vector<1x128xi32> to vector<1x128xf32>
    %55 = arith.andi %47, %45 : vector<1x128xi1>
    %56 = arith.extui %55 : vector<1x128xi1> to vector<1x128xi32>
    %57 = arith.sitofp %56 : vector<1x128xi32> to vector<1x128xf32>
    %58 = arith.extui %43 : vector<1x128xi1> to vector<1x128xi32>
    %59 = arith.sitofp %58 : vector<1x128xi32> to vector<1x128xf32>
    %60 = arith.extui %45 : vector<1x128xi1> to vector<1x128xi32>
    %61 = arith.sitofp %60 : vector<1x128xi32> to vector<1x128xf32>
    %62 = arith.andi %49, %43 : vector<1x128xi1>
    %63 = arith.extui %62 : vector<1x128xi1> to vector<1x128xi32>
    %64 = arith.sitofp %63 : vector<1x128xi32> to vector<1x128xf32>
    %65 = arith.extui %49 : vector<1x128xi1> to vector<1x128xi32>
    %66 = arith.sitofp %65 : vector<1x128xi32> to vector<1x128xf32>
    %67 = arith.andi %49, %45 : vector<1x128xi1>
    %68 = arith.extui %67 : vector<1x128xi1> to vector<1x128xi32>
    %69 = arith.sitofp %68 : vector<1x128xi32> to vector<1x128xf32>
    %70 = tpu.iota {dimensions = array<i32: 1>} : vector<1x32xi32>
    %c15_i32_7 = arith.constant 15 : i32
    %71 = vector.broadcast %c15_i32_7 : i32 to vector<1x32xi32>
    %72 = arith.andi %70, %71 : vector<1x32xi32>
    %c3_i32_8 = arith.constant 3 : i32
    %73 = vector.broadcast %c3_i32_8 : i32 to vector<1x32xi32>
    %74 = arith.andi %72, %73 : vector<1x32xi32>
    %c2_i32 = arith.constant 2 : i32
    %75 = vector.broadcast %c2_i32 : i32 to vector<1x32xi32>
    %76 = arith.shrsi %72, %75 : vector<1x32xi32>
    %c0_i32_9 = arith.constant 0 : i32
    %77 = vector.broadcast %c0_i32_9 : i32 to vector<1x32xi32>
    %78 = arith.cmpi sgt, %74, %77 : vector<1x32xi32>
    %c3_i32_10 = arith.constant 3 : i32
    %79 = vector.broadcast %c3_i32_10 : i32 to vector<1x32xi32>
    %80 = arith.cmpi slt, %74, %79 : vector<1x32xi32>
    %c0_i32_11 = arith.constant 0 : i32
    %81 = vector.broadcast %c0_i32_11 : i32 to vector<1x32xi32>
    %82 = arith.cmpi sgt, %76, %81 : vector<1x32xi32>
    %c3_i32_12 = arith.constant 3 : i32
    %83 = vector.broadcast %c3_i32_12 : i32 to vector<1x32xi32>
    %84 = arith.cmpi slt, %76, %83 : vector<1x32xi32>
    %85 = arith.andi %82, %78 : vector<1x32xi1>
    %86 = arith.extui %85 : vector<1x32xi1> to vector<1x32xi32>
    %87 = arith.sitofp %86 : vector<1x32xi32> to vector<1x32xf32>
    %88 = arith.extui %82 : vector<1x32xi1> to vector<1x32xi32>
    %89 = arith.sitofp %88 : vector<1x32xi32> to vector<1x32xf32>
    %90 = arith.andi %82, %80 : vector<1x32xi1>
    %91 = arith.extui %90 : vector<1x32xi1> to vector<1x32xi32>
    %92 = arith.sitofp %91 : vector<1x32xi32> to vector<1x32xf32>
    %93 = arith.extui %78 : vector<1x32xi1> to vector<1x32xi32>
    %94 = arith.sitofp %93 : vector<1x32xi32> to vector<1x32xf32>
    %95 = arith.extui %80 : vector<1x32xi1> to vector<1x32xi32>
    %96 = arith.sitofp %95 : vector<1x32xi32> to vector<1x32xf32>
    %97 = arith.andi %84, %78 : vector<1x32xi1>
    %98 = arith.extui %97 : vector<1x32xi1> to vector<1x32xi32>
    %99 = arith.sitofp %98 : vector<1x32xi32> to vector<1x32xf32>
    %100 = arith.extui %84 : vector<1x32xi1> to vector<1x32xi32>
    %101 = arith.sitofp %100 : vector<1x32xi32> to vector<1x32xf32>
    %102 = arith.andi %84, %80 : vector<1x32xi1>
    %103 = arith.extui %102 : vector<1x32xi1> to vector<1x32xi32>
    %104 = arith.sitofp %103 : vector<1x32xi32> to vector<1x32xf32>
    %c0 = arith.constant 0 : index
    %c0_13 = arith.constant 0 : index
    %105 = vector.load %arg0[%c0, %c0_13] : memref<16x512xf32, #tpu.memory_space<vmem>>, vector<16x512xf32>
    %c17_i32 = arith.constant 17 : i32
    %106 = tpu.dynamic_rotate %105 by %c17_i32 dim 1 : vector<16x512xf32>, i32 -> vector<16x512xf32>
    %107 = vector.broadcast %17 : vector<1x512xf32> to vector<16x512xf32>
    %108 = arith.mulf %106, %107 : vector<16x512xf32>
    %109 = arith.truncf %108 : vector<16x512xf32> to vector<16x512xbf16>
    %c0_14 = arith.constant 0 : index
    %c0_15 = arith.constant 0 : index
    %110 = vector.load %arg18[%c0_14, %c0_15] : memref<864x512xbf16, #tpu.memory_space<vmem>>, vector<16x512xbf16>
    tpu.vector_store %arg18[%c0_14, %c0_15], %109 {strides = array<i32>} : memref<864x512xbf16, #tpu.memory_space<vmem>>, vector<16x512xbf16>,
    %c16_i32 = arith.constant 16 : i32
    %111 = tpu.dynamic_rotate %105 by %c16_i32 dim 1 : vector<16x512xf32>, i32 -> vector<16x512xf32>
    %112 = vector.broadcast %19 : vector<1x512xf32> to vector<16x512xf32>
    %113 = arith.mulf %111, %112 : vector<16x512xf32>
    %114 = arith.truncf %113 : vector<16x512xf32> to vector<16x512xbf16>
    %c16 = arith.constant 16 : index
    %c0_16 = arith.constant 0 : index
    %115 = vector.load %arg18[%c16, %c0_16] : memref<864x512xbf16, #tpu.memory_space<vmem>>, vector<16x512xbf16>
    tpu.vector_store %arg18[%c16, %c0_16], %114 {strides = array<i32>} : memref<864x512xbf16, #tpu.memory_space<vmem>>, vector<16x512xbf16>,
    %c15_i32_17 = arith.constant 15 : i32
    %116 = tpu.dynamic_rotate %105 by %c15_i32_17 dim 1 : vector<16x512xf32>, i32 -> vector<16x512xf32>
    %117 = vector.broadcast %22 : vector<1x512xf32> to vector<16x512xf32>
    %118 = arith.mulf %116, %117 : vector<16x512xf32>
    %119 = arith.truncf %118 : vector<16x512xf32> to vector<16x512xbf16>
    %c32 = arith.constant 32 : index
    %c0_18 = arith.constant 0 : index
    %120 = vector.load %arg18[%c32, %c0_18] : memref<864x512xbf16, #tpu.memory_space<vmem>>, vector<16x512xbf16>
    tpu.vector_store %arg18[%c32, %c0_18], %119 {strides = array<i32>} : memref<864x512xbf16, #tpu.memory_space<vmem>>, vector<16x512xbf16>,
    %c1_i32 = arith.constant 1 : i32
    %121 = tpu.dynamic_rotate %105 by %c1_i32 dim 1 : vector<16x512xf32>, i32 -> vector<16x512xf32>
    %122 = vector.broadcast %24 : vector<1x512xf32> to vector<16x512xf32>
    %123 = arith.mulf %121, %122 : vector<16x512xf32>
    %124 = arith.truncf %123 : vector<16x512xf32> to vector<16x512xbf16>
    %c48 = arith.constant 48 : index
    %c0_19 = arith.constant 0 : index
    %125 = vector.load %arg18[%c48, %c0_19] : memref<864x512xbf16, #tpu.memory_space<vmem>>, vector<16x512xbf16>
    tpu.vector_store %arg18[%c48, %c0_19], %124 {strides = array<i32>} : memref<864x512xbf16, #tpu.memory_space<vmem>>, vector<16x512xbf16>,
    %126 = arith.truncf %105 : vector<16x512xf32> to vector<16x512xbf16>
    %c64 = arith.constant 64 : index
    %c0_20 = arith.constant 0 : index
    %127 = vector.load %arg18[%c64, %c0_20] : memref<864x512xbf16, #tpu.memory_space<vmem>>, vector<16x512xbf16>
    tpu.vector_store %arg18[%c64, %c0_20], %126 {strides = array<i32>} : memref<864x512xbf16, #tpu.memory_space<vmem>>, vector<16x512xbf16>,
    %c511_i32 = arith.constant 511 : i32
    %128 = tpu.dynamic_rotate %105 by %c511_i32 dim 1 : vector<16x512xf32>, i32 -> vector<16x512xf32>
    %129 = vector.broadcast %26 : vector<1x512xf32> to vector<16x512xf32>
    %130 = arith.mulf %128, %129 : vector<16x512xf32>
    %131 = arith.truncf %130 : vector<16x512xf32> to vector<16x512xbf16>
    %c80 = arith.constant 80 : index
    %c0_21 = arith.constant 0 : index
    %132 = vector.load %arg18[%c80, %c0_21] : memref<864x512xbf16, #tpu.memory_space<vmem>>, vector<16x512xbf16>
    tpu.vector_store %arg18[%c80, %c0_21], %131 {strides = array<i32>} : memref<864x512xbf16, #tpu.memory_space<vmem>>, vector<16x512xbf16>,
    %c497_i32 = arith.constant 497 : i32
    %133 = tpu.dynamic_rotate %105 by %c497_i32 dim 1 : vector<16x512xf32>, i32 -> vector<16x512xf32>
    %134 = vector.broadcast %29 : vector<1x512xf32> to vector<16x512xf32>
    %135 = arith.mulf %133, %134 : vector<16x512xf32>
    %136 = arith.truncf %135 : vector<16x512xf32> to vector<16x512xbf16>
    %c96 = arith.constant 96 : index
    %c0_22 = arith.constant 0 : index
    %137 = vector.load %arg18[%c96, %c0_22] : memref<864x512xbf16, #tpu.memory_space<vmem>>, vector<16x512xbf16>
    tpu.vector_store %arg18[%c96, %c0_22], %136 {strides = array<i32>} : memref<864x512xbf16, #tpu.memory_space<vmem>>, vector<16x512xbf16>,
    %c496_i32 = arith.constant 496 : i32
    %138 = tpu.dynamic_rotate %105 by %c496_i32 dim 1 : vector<16x512xf32>, i32 -> vector<16x512xf32>
    %139 = vector.broadcast %31 : vector<1x512xf32> to vector<16x512xf32>
    %140 = arith.mulf %138, %139 : vector<16x512xf32>
    %141 = arith.truncf %140 : vector<16x512xf32> to vector<16x512xbf16>
    %c112 = arith.constant 112 : index
    %c0_23 = arith.constant 0 : index
    %142 = vector.load %arg18[%c112, %c0_23] : memref<864x512xbf16, #tpu.memory_space<vmem>>, vector<16x512xbf16>
    tpu.vector_store %arg18[%c112, %c0_23], %141 {strides = array<i32>} : memref<864x512xbf16, #tpu.memory_space<vmem>>, vector<16x512xbf16>,
    %c495_i32 = arith.constant 495 : i32
    %143 = tpu.dynamic_rotate %105 by %c495_i32 dim 1 : vector<16x512xf32>, i32 -> vector<16x512xf32>
    %144 = vector.broadcast %34 : vector<1x512xf32> to vector<16x512xf32>
    %145 = arith.mulf %143, %144 : vector<16x512xf32>
    %146 = arith.truncf %145 : vector<16x512xf32> to vector<16x512xbf16>
    %c128 = arith.constant 128 : index
    %c0_24 = arith.constant 0 : index
    %147 = vector.load %arg18[%c128, %c0_24] : memref<864x512xbf16, #tpu.memory_space<vmem>>, vector<16x512xbf16>
    tpu.vector_store %arg18[%c128, %c0_24], %146 {strides = array<i32>} : memref<864x512xbf16, #tpu.memory_space<vmem>>, vector<16x512xbf16>,
    %c0_25 = arith.constant 0 : index
    %c0_26 = arith.constant 0 : index
    %148 = vector.load %arg1[%c0_25, %c0_26] : memref<16x144xbf16, #tpu.memory_space<vmem>>, vector<16x144xbf16>
    %c0_27 = arith.constant 0 : index
    %c0_28 = arith.constant 0 : index
    %149 = vector.load %arg18[%c0_27, %c0_28] : memref<864x512xbf16, #tpu.memory_space<vmem>>, vector<144x512xbf16>
    %cst = arith.constant dense<0.000000e+00> : vector<16x512xf32>
    %150 = tpu.matmul %148, %149, %cst {dimension_numbers = #tpu.dot_dimension_numbers<[1], [0], [0], [1], [0, 0, 1, 1], [], []>} : vector<16x144xbf16>, vector<144x512xbf16>, vector<16x512xf32> -> vector<16x512xf32>
    %c0_29 = arith.constant 0 : index
    %c0_30 = arith.constant 0 : index
    %151 = vector.load %arg2[%c0_29, %c0_30] : memref<16x1xf32, #tpu.memory_space<vmem>>, vector<16x1xf32>
    %152 = vector.broadcast %151 : vector<16x1xf32> to vector<16x512xf32>
    %153 = arith.addf %150, %152 : vector<16x512xf32>
    %cst_31 = arith.constant 0.000000e+00 : f32
    %154 = vector.broadcast %cst_31 : f32 to vector<16x512xf32>
    %155 = arith.maximumf %153, %154 : vector<16x512xf32>
    %c511_i32_32 = arith.constant 511 : i32
    %156 = tpu.dynamic_rotate %155 by %c511_i32_32 dim 1 : vector<16x512xf32>, i32 -> vector<16x512xf32>
    %157 = arith.maximumf %155, %156 : vector<16x512xf32>
    %c496_i32_33 = arith.constant 496 : i32
    %158 = tpu.dynamic_rotate %157 by %c496_i32_33 dim 1 : vector<16x512xf32>, i32 -> vector<16x512xf32>
    %159 = arith.maximumf %157, %158 : vector<16x512xf32>
    %160 = arith.truncf %159 : vector<16x512xf32> to vector<16x512xbf16>
    %c0_34 = arith.constant 0 : index
    %c0_35 = arith.constant 0 : index
    %161 = vector.load %arg13[%c0_34, %c0_35] : memref<512x128xbf16, #tpu.memory_space<vmem>>, vector<512x128xbf16>
    %cst_36 = arith.constant dense<0.000000e+00> : vector<16x128xf32>
    %162 = tpu.matmul %160, %161, %cst_36 {dimension_numbers = #tpu.dot_dimension_numbers<[1], [0], [0], [1], [0, 0, 1, 1], [], []>} : vector<16x512xbf16>, vector<512x128xbf16>, vector<16x128xf32> -> vector<16x128xf32>
    %c9_i32 = arith.constant 9 : i32
    %163 = tpu.dynamic_rotate %162 by %c9_i32 dim 1 : vector<16x128xf32>, i32 -> vector<16x128xf32>
    %164 = vector.broadcast %52 : vector<1x128xf32> to vector<16x128xf32>
    %165 = arith.mulf %163, %164 : vector<16x128xf32>
    %166 = arith.truncf %165 : vector<16x128xf32> to vector<16x128xbf16>
    %c0_37 = arith.constant 0 : index
    %c0_38 = arith.constant 0 : index
    %167 = vector.load %arg18[%c0_37, %c0_38] : memref<864x512xbf16, #tpu.memory_space<vmem>>, vector<16x128xbf16>
    tpu.vector_store %arg18[%c0_37, %c0_38], %166 {strides = array<i32>} : memref<864x512xbf16, #tpu.memory_space<vmem>>, vector<16x128xbf16>,
    %c8_i32 = arith.constant 8 : i32
    %168 = tpu.dynamic_rotate %162 by %c8_i32 dim 1 : vector<16x128xf32>, i32 -> vector<16x128xf32>
    %169 = vector.broadcast %54 : vector<1x128xf32> to vector<16x128xf32>
    %170 = arith.mulf %168, %169 : vector<16x128xf32>
    %171 = arith.truncf %170 : vector<16x128xf32> to vector<16x128xbf16>
    %c16_39 = arith.constant 16 : index
    %c0_40 = arith.constant 0 : index
    %172 = vector.load %arg18[%c16_39, %c0_40] : memref<864x512xbf16, #tpu.memory_space<vmem>>, vector<16x128xbf16>
    tpu.vector_store %arg18[%c16_39, %c0_40], %171 {strides = array<i32>} : memref<864x512xbf16, #tpu.memory_space<vmem>>, vector<16x128xbf16>,
    %c7_i32_41 = arith.constant 7 : i32
    %173 = tpu.dynamic_rotate %162 by %c7_i32_41 dim 1 : vector<16x128xf32>, i32 -> vector<16x128xf32>
    %174 = vector.broadcast %57 : vector<1x128xf32> to vector<16x128xf32>
    %175 = arith.mulf %173, %174 : vector<16x128xf32>
    %176 = arith.truncf %175 : vector<16x128xf32> to vector<16x128xbf16>
    %c32_42 = arith.constant 32 : index
    %c0_43 = arith.constant 0 : index
    %177 = vector.load %arg18[%c32_42, %c0_43] : memref<864x512xbf16, #tpu.memory_space<vmem>>, vector<16x128xbf16>
    tpu.vector_store %arg18[%c32_42, %c0_43], %176 {strides = array<i32>} : memref<864x512xbf16, #tpu.memory_space<vmem>>, vector<16x128xbf16>,
    %c1_i32_44 = arith.constant 1 : i32
    %178 = tpu.dynamic_rotate %162 by %c1_i32_44 dim 1 : vector<16x128xf32>, i32 -> vector<16x128xf32>
    %179 = vector.broadcast %59 : vector<1x128xf32> to vector<16x128xf32>
    %180 = arith.mulf %178, %179 : vector<16x128xf32>
    %181 = arith.truncf %180 : vector<16x128xf32> to vector<16x128xbf16>
    %c48_45 = arith.constant 48 : index
    %c0_46 = arith.constant 0 : index
    %182 = vector.load %arg18[%c48_45, %c0_46] : memref<864x512xbf16, #tpu.memory_space<vmem>>, vector<16x128xbf16>
    tpu.vector_store %arg18[%c48_45, %c0_46], %181 {strides = array<i32>} : memref<864x512xbf16, #tpu.memory_space<vmem>>, vector<16x128xbf16>,
    %183 = arith.truncf %162 : vector<16x128xf32> to vector<16x128xbf16>
    %c64_47 = arith.constant 64 : index
    %c0_48 = arith.constant 0 : index
    %184 = vector.load %arg18[%c64_47, %c0_48] : memref<864x512xbf16, #tpu.memory_space<vmem>>, vector<16x128xbf16>
    tpu.vector_store %arg18[%c64_47, %c0_48], %183 {strides = array<i32>} : memref<864x512xbf16, #tpu.memory_space<vmem>>, vector<16x128xbf16>,
    %c127_i32 = arith.constant 127 : i32
    %185 = tpu.dynamic_rotate %162 by %c127_i32 dim 1 : vector<16x128xf32>, i32 -> vector<16x128xf32>
    %186 = vector.broadcast %61 : vector<1x128xf32> to vector<16x128xf32>
    %187 = arith.mulf %185, %186 : vector<16x128xf32>
    %188 = arith.truncf %187 : vector<16x128xf32> to vector<16x128xbf16>
    %c80_49 = arith.constant 80 : index
    %c0_50 = arith.constant 0 : index
    %189 = vector.load %arg18[%c80_49, %c0_50] : memref<864x512xbf16, #tpu.memory_space<vmem>>, vector<16x128xbf16>
    tpu.vector_store %arg18[%c80_49, %c0_50], %188 {strides = array<i32>} : memref<864x512xbf16, #tpu.memory_space<vmem>>, vector<16x128xbf16>,
    %c121_i32 = arith.constant 121 : i32
    %190 = tpu.dynamic_rotate %162 by %c121_i32 dim 1 : vector<16x128xf32>, i32 -> vector<16x128xf32>
    %191 = vector.broadcast %64 : vector<1x128xf32> to vector<16x128xf32>
    %192 = arith.mulf %190, %191 : vector<16x128xf32>
    %193 = arith.truncf %192 : vector<16x128xf32> to vector<16x128xbf16>
    %c96_51 = arith.constant 96 : index
    %c0_52 = arith.constant 0 : index
    %194 = vector.load %arg18[%c96_51, %c0_52] : memref<864x512xbf16, #tpu.memory_space<vmem>>, vector<16x128xbf16>
    tpu.vector_store %arg18[%c96_51, %c0_52], %193 {strides = array<i32>} : memref<864x512xbf16, #tpu.memory_space<vmem>>, vector<16x128xbf16>,
    %c120_i32 = arith.constant 120 : i32
    %195 = tpu.dynamic_rotate %162 by %c120_i32 dim 1 : vector<16x128xf32>, i32 -> vector<16x128xf32>
    %196 = vector.broadcast %66 : vector<1x128xf32> to vector<16x128xf32>
    %197 = arith.mulf %195, %196 : vector<16x128xf32>
    %198 = arith.truncf %197 : vector<16x128xf32> to vector<16x128xbf16>
    %c112_53 = arith.constant 112 : index
    %c0_54 = arith.constant 0 : index
    %199 = vector.load %arg18[%c112_53, %c0_54] : memref<864x512xbf16, #tpu.memory_space<vmem>>, vector<16x128xbf16>
    tpu.vector_store %arg18[%c112_53, %c0_54], %198 {strides = array<i32>} : memref<864x512xbf16, #tpu.memory_space<vmem>>, vector<16x128xbf16>,
    %c119_i32 = arith.constant 119 : i32
    %200 = tpu.dynamic_rotate %162 by %c119_i32 dim 1 : vector<16x128xf32>, i32 -> vector<16x128xf32>
    %201 = vector.broadcast %69 : vector<1x128xf32> to vector<16x128xf32>
    %202 = arith.mulf %200, %201 : vector<16x128xf32>
    %203 = arith.truncf %202 : vector<16x128xf32> to vector<16x128xbf16>
    %c128_55 = arith.constant 128 : index
    %c0_56 = arith.constant 0 : index
    %204 = vector.load %arg18[%c128_55, %c0_56] : memref<864x512xbf16, #tpu.memory_space<vmem>>, vector<16x128xbf16>
    tpu.vector_store %arg18[%c128_55, %c0_56], %203 {strides = array<i32>} : memref<864x512xbf16, #tpu.memory_space<vmem>>, vector<16x128xbf16>,
    %c0_57 = arith.constant 0 : index
    %c0_58 = arith.constant 0 : index
    %205 = vector.load %arg3[%c0_57, %c0_58] : memref<32x144xbf16, #tpu.memory_space<vmem>>, vector<32x144xbf16>
    %c0_59 = arith.constant 0 : index
    %c0_60 = arith.constant 0 : index
    %206 = vector.load %arg18[%c0_59, %c0_60] : memref<864x512xbf16, #tpu.memory_space<vmem>>, vector<144x128xbf16>
    %cst_61 = arith.constant dense<0.000000e+00> : vector<32x128xf32>
    %207 = tpu.matmul %205, %206, %cst_61 {dimension_numbers = #tpu.dot_dimension_numbers<[1], [0], [0], [1], [0, 0, 1, 1], [], []>} : vector<32x144xbf16>, vector<144x128xbf16>, vector<32x128xf32> -> vector<32x128xf32>
    %c0_62 = arith.constant 0 : index
    %c0_63 = arith.constant 0 : index
    %208 = vector.load %arg4[%c0_62, %c0_63] : memref<32x1xf32, #tpu.memory_space<vmem>>, vector<32x1xf32>
    %209 = vector.broadcast %208 : vector<32x1xf32> to vector<32x128xf32>
    %210 = arith.addf %207, %209 : vector<32x128xf32>
    %cst_64 = arith.constant 0.000000e+00 : f32
    %211 = vector.broadcast %cst_64 : f32 to vector<32x128xf32>
    %212 = arith.maximumf %210, %211 : vector<32x128xf32>
    %c127_i32_65 = arith.constant 127 : i32
    %213 = tpu.dynamic_rotate %212 by %c127_i32_65 dim 1 : vector<32x128xf32>, i32 -> vector<32x128xf32>
    %214 = arith.maximumf %212, %213 : vector<32x128xf32>
    %c120_i32_66 = arith.constant 120 : i32
    %215 = tpu.dynamic_rotate %214 by %c120_i32_66 dim 1 : vector<32x128xf32>, i32 -> vector<32x128xf32>
    %216 = arith.maximumf %214, %215 : vector<32x128xf32>
    %217 = arith.truncf %216 : vector<32x128xf32> to vector<32x128xbf16>
    %c0_67 = arith.constant 0 : index
    %c0_68 = arith.constant 0 : index
    %218 = vector.load %arg14[%c0_67, %c0_68] : memref<128x32xbf16, #tpu.memory_space<vmem>>, vector<128x32xbf16>
    %cst_69 = arith.constant dense<0.000000e+00> : vector<32x32xf32>
    %219 = tpu.matmul %217, %218, %cst_69 {dimension_numbers = #tpu.dot_dimension_numbers<[1], [0], [0], [1], [0, 0, 1, 1], [], []>} : vector<32x128xbf16>, vector<128x32xbf16>, vector<32x32xf32> -> vector<32x32xf32>
    %220 = vector.extract_strided_slice %219 {offsets = [0, 27], sizes = [32, 5], strides = [1, 1]} : vector<32x32xf32> to vector<32x5xf32>
    %221 = vector.extract_strided_slice %219 {offsets = [0, 0], sizes = [32, 27], strides = [1, 1]} : vector<32x32xf32> to vector<32x27xf32>
    %222 = tpu.concatenate %220, %221 in 1 : vector<32x5xf32>, vector<32x27xf32> -> vector<32x32xf32>
    %223 = vector.broadcast %87 : vector<1x32xf32> to vector<32x32xf32>
    %224 = arith.mulf %222, %223 : vector<32x32xf32>
    %225 = arith.truncf %224 : vector<32x32xf32> to vector<32x32xbf16>
    %c0_70 = arith.constant 0 : index
    %c0_71 = arith.constant 0 : index
    %226 = vector.load %arg18[%c0_70, %c0_71] : memref<864x512xbf16, #tpu.memory_space<vmem>>, vector<32x32xbf16>
    tpu.vector_store %arg18[%c0_70, %c0_71], %225 {strides = array<i32>} : memref<864x512xbf16, #tpu.memory_space<vmem>>, vector<32x32xbf16>,
    %227 = vector.extract_strided_slice %219 {offsets = [0, 28], sizes = [32, 4], strides = [1, 1]} : vector<32x32xf32> to vector<32x4xf32>
    %228 = vector.extract_strided_slice %219 {offsets = [0, 0], sizes = [32, 28], strides = [1, 1]} : vector<32x32xf32> to vector<32x28xf32>
    %229 = tpu.concatenate %227, %228 in 1 : vector<32x4xf32>, vector<32x28xf32> -> vector<32x32xf32>
    %230 = vector.broadcast %89 : vector<1x32xf32> to vector<32x32xf32>
    %231 = arith.mulf %229, %230 : vector<32x32xf32>
    %232 = arith.truncf %231 : vector<32x32xf32> to vector<32x32xbf16>
    %c32_72 = arith.constant 32 : index
    %c0_73 = arith.constant 0 : index
    %233 = vector.load %arg18[%c32_72, %c0_73] : memref<864x512xbf16, #tpu.memory_space<vmem>>, vector<32x32xbf16>
    tpu.vector_store %arg18[%c32_72, %c0_73], %232 {strides = array<i32>} : memref<864x512xbf16, #tpu.memory_space<vmem>>, vector<32x32xbf16>,
    %234 = vector.extract_strided_slice %219 {offsets = [0, 29], sizes = [32, 3], strides = [1, 1]} : vector<32x32xf32> to vector<32x3xf32>
    %235 = vector.extract_strided_slice %219 {offsets = [0, 0], sizes = [32, 29], strides = [1, 1]} : vector<32x32xf32> to vector<32x29xf32>
    %236 = tpu.concatenate %234, %235 in 1 : vector<32x3xf32>, vector<32x29xf32> -> vector<32x32xf32>
    %237 = vector.broadcast %92 : vector<1x32xf32> to vector<32x32xf32>
    %238 = arith.mulf %236, %237 : vector<32x32xf32>
    %239 = arith.truncf %238 : vector<32x32xf32> to vector<32x32xbf16>
    %c64_74 = arith.constant 64 : index
    %c0_75 = arith.constant 0 : index
    %240 = vector.load %arg18[%c64_74, %c0_75] : memref<864x512xbf16, #tpu.memory_space<vmem>>, vector<32x32xbf16>
    tpu.vector_store %arg18[%c64_74, %c0_75], %239 {strides = array<i32>} : memref<864x512xbf16, #tpu.memory_space<vmem>>, vector<32x32xbf16>,
    %241 = vector.extract_strided_slice %219 {offsets = [0, 31], sizes = [32, 1], strides = [1, 1]} : vector<32x32xf32> to vector<32x1xf32>
    %242 = vector.extract_strided_slice %219 {offsets = [0, 0], sizes = [32, 31], strides = [1, 1]} : vector<32x32xf32> to vector<32x31xf32>
    %243 = tpu.concatenate %241, %242 in 1 : vector<32x1xf32>, vector<32x31xf32> -> vector<32x32xf32>
    %244 = vector.broadcast %94 : vector<1x32xf32> to vector<32x32xf32>
    %245 = arith.mulf %243, %244 : vector<32x32xf32>
    %246 = arith.truncf %245 : vector<32x32xf32> to vector<32x32xbf16>
    %c96_76 = arith.constant 96 : index
    %c0_77 = arith.constant 0 : index
    %247 = vector.load %arg18[%c96_76, %c0_77] : memref<864x512xbf16, #tpu.memory_space<vmem>>, vector<32x32xbf16>
    tpu.vector_store %arg18[%c96_76, %c0_77], %246 {strides = array<i32>} : memref<864x512xbf16, #tpu.memory_space<vmem>>, vector<32x32xbf16>,
    %248 = arith.truncf %219 : vector<32x32xf32> to vector<32x32xbf16>
    %c128_78 = arith.constant 128 : index
    %c0_79 = arith.constant 0 : index
    %249 = vector.load %arg18[%c128_78, %c0_79] : memref<864x512xbf16, #tpu.memory_space<vmem>>, vector<32x32xbf16>
    tpu.vector_store %arg18[%c128_78, %c0_79], %248 {strides = array<i32>} : memref<864x512xbf16, #tpu.memory_space<vmem>>, vector<32x32xbf16>,
    %250 = vector.extract_strided_slice %219 {offsets = [0, 1], sizes = [32, 31], strides = [1, 1]} : vector<32x32xf32> to vector<32x31xf32>
    %251 = vector.extract_strided_slice %219 {offsets = [0, 0], sizes = [32, 1], strides = [1, 1]} : vector<32x32xf32> to vector<32x1xf32>
    %252 = tpu.concatenate %250, %251 in 1 : vector<32x31xf32>, vector<32x1xf32> -> vector<32x32xf32>
    %253 = vector.broadcast %96 : vector<1x32xf32> to vector<32x32xf32>
    %254 = arith.mulf %252, %253 : vector<32x32xf32>
    %255 = arith.truncf %254 : vector<32x32xf32> to vector<32x32xbf16>
    %c160 = arith.constant 160 : index
    %c0_80 = arith.constant 0 : index
    %256 = vector.load %arg18[%c160, %c0_80] : memref<864x512xbf16, #tpu.memory_space<vmem>>, vector<32x32xbf16>
    tpu.vector_store %arg18[%c160, %c0_80], %255 {strides = array<i32>} : memref<864x512xbf16, #tpu.memory_space<vmem>>, vector<32x32xbf16>,
    %257 = vector.extract_strided_slice %219 {offsets = [0, 3], sizes = [32, 29], strides = [1, 1]} : vector<32x32xf32> to vector<32x29xf32>
    %258 = vector.extract_strided_slice %219 {offsets = [0, 0], sizes = [32, 3], strides = [1, 1]} : vector<32x32xf32> to vector<32x3xf32>
    %259 = tpu.concatenate %257, %258 in 1 : vector<32x29xf32>, vector<32x3xf32> -> vector<32x32xf32>
    %260 = vector.broadcast %99 : vector<1x32xf32> to vector<32x32xf32>
    %261 = arith.mulf %259, %260 : vector<32x32xf32>
    %262 = arith.truncf %261 : vector<32x32xf32> to vector<32x32xbf16>
    %c192 = arith.constant 192 : index
    %c0_81 = arith.constant 0 : index
    %263 = vector.load %arg18[%c192, %c0_81] : memref<864x512xbf16, #tpu.memory_space<vmem>>, vector<32x32xbf16>
    tpu.vector_store %arg18[%c192, %c0_81], %262 {strides = array<i32>} : memref<864x512xbf16, #tpu.memory_space<vmem>>, vector<32x32xbf16>,
    %264 = vector.extract_strided_slice %219 {offsets = [0, 4], sizes = [32, 28], strides = [1, 1]} : vector<32x32xf32> to vector<32x28xf32>
    %265 = vector.extract_strided_slice %219 {offsets = [0, 0], sizes = [32, 4], strides = [1, 1]} : vector<32x32xf32> to vector<32x4xf32>
    %266 = tpu.concatenate %264, %265 in 1 : vector<32x28xf32>, vector<32x4xf32> -> vector<32x32xf32>
    %267 = vector.broadcast %101 : vector<1x32xf32> to vector<32x32xf32>
    %268 = arith.mulf %266, %267 : vector<32x32xf32>
    %269 = arith.truncf %268 : vector<32x32xf32> to vector<32x32xbf16>
    %c224 = arith.constant 224 : index
    %c0_82 = arith.constant 0 : index
    %270 = vector.load %arg18[%c224, %c0_82] : memref<864x512xbf16, #tpu.memory_space<vmem>>, vector<32x32xbf16>
    tpu.vector_store %arg18[%c224, %c0_82], %269 {strides = array<i32>} : memref<864x512xbf16, #tpu.memory_space<vmem>>, vector<32x32xbf16>,
    %271 = vector.extract_strided_slice %219 {offsets = [0, 5], sizes = [32, 27], strides = [1, 1]} : vector<32x32xf32> to vector<32x27xf32>
    %272 = vector.extract_strided_slice %219 {offsets = [0, 0], sizes = [32, 5], strides = [1, 1]} : vector<32x32xf32> to vector<32x5xf32>
    %273 = tpu.concatenate %271, %272 in 1 : vector<32x27xf32>, vector<32x5xf32> -> vector<32x32xf32>
    %274 = vector.broadcast %104 : vector<1x32xf32> to vector<32x32xf32>
    %275 = arith.mulf %273, %274 : vector<32x32xf32>
    %276 = arith.truncf %275 : vector<32x32xf32> to vector<32x32xbf16>
    %c256 = arith.constant 256 : index
    %c0_83 = arith.constant 0 : index
    %277 = vector.load %arg18[%c256, %c0_83] : memref<864x512xbf16, #tpu.memory_space<vmem>>, vector<32x32xbf16>
    tpu.vector_store %arg18[%c256, %c0_83], %276 {strides = array<i32>} : memref<864x512xbf16, #tpu.memory_space<vmem>>, vector<32x32xbf16>,
    %c0_84 = arith.constant 0 : index
    %c0_85 = arith.constant 0 : index
    %278 = vector.load %arg5[%c0_84, %c0_85] : memref<64x288xbf16, #tpu.memory_space<vmem>>, vector<64x288xbf16>
    %c0_86 = arith.constant 0 : index
    %c0_87 = arith.constant 0 : index
    %279 = vector.load %arg18[%c0_86, %c0_87] : memref<864x512xbf16, #tpu.memory_space<vmem>>, vector<288x32xbf16>
    %cst_88 = arith.constant dense<0.000000e+00> : vector<64x32xf32>
    %280 = tpu.matmul %278, %279, %cst_88 {dimension_numbers = #tpu.dot_dimension_numbers<[1], [0], [0], [1], [0, 0, 1, 1], [], []>} : vector<64x288xbf16>, vector<288x32xbf16>, vector<64x32xf32> -> vector<64x32xf32>
    %c0_89 = arith.constant 0 : index
    %c0_90 = arith.constant 0 : index
    %281 = vector.load %arg6[%c0_89, %c0_90] : memref<64x1xf32, #tpu.memory_space<vmem>>, vector<64x1xf32>
    %282 = vector.broadcast %281 : vector<64x1xf32> to vector<64x32xf32>
    %283 = arith.addf %280, %282 : vector<64x32xf32>
    %cst_91 = arith.constant 0.000000e+00 : f32
    %284 = vector.broadcast %cst_91 : f32 to vector<64x32xf32>
    %285 = arith.maximumf %283, %284 : vector<64x32xf32>
    %286 = arith.truncf %285 : vector<64x32xf32> to vector<64x32xbf16>
    %c0_92 = arith.constant 0 : index
    %c0_93 = arith.constant 0 : index
    %287 = vector.load %arg15[%c0_92, %c0_93] : memref<32x128xbf16, #tpu.memory_space<vmem>>, vector<32x128xbf16>
    %cst_94 = arith.constant dense<0.000000e+00> : vector<64x128xf32>
    %288 = tpu.matmul %286, %287, %cst_94 {dimension_numbers = #tpu.dot_dimension_numbers<[1], [0], [0], [1], [0, 0, 1, 1], [], []>} : vector<64x32xbf16>, vector<32x128xbf16>, vector<64x128xf32> -> vector<64x128xf32>
    %289 = tpu.concatenate %288, %212 in 0 : vector<64x128xf32>, vector<32x128xf32> -> vector<96x128xf32>
    %c9_i32_95 = arith.constant 9 : i32
    %290 = tpu.dynamic_rotate %289 by %c9_i32_95 dim 1 : vector<96x128xf32>, i32 -> vector<96x128xf32>
    %291 = vector.broadcast %52 : vector<1x128xf32> to vector<96x128xf32>
    %292 = arith.mulf %290, %291 : vector<96x128xf32>
    %293 = arith.truncf %292 : vector<96x128xf32> to vector<96x128xbf16>
    %c0_96 = arith.constant 0 : index
    %c0_97 = arith.constant 0 : index
    %294 = vector.load %arg18[%c0_96, %c0_97] : memref<864x512xbf16, #tpu.memory_space<vmem>>, vector<96x128xbf16>
    tpu.vector_store %arg18[%c0_96, %c0_97], %293 {strides = array<i32>} : memref<864x512xbf16, #tpu.memory_space<vmem>>, vector<96x128xbf16>,
    %c8_i32_98 = arith.constant 8 : i32
    %295 = tpu.dynamic_rotate %289 by %c8_i32_98 dim 1 : vector<96x128xf32>, i32 -> vector<96x128xf32>
    %296 = vector.broadcast %54 : vector<1x128xf32> to vector<96x128xf32>
    %297 = arith.mulf %295, %296 : vector<96x128xf32>
    %298 = arith.truncf %297 : vector<96x128xf32> to vector<96x128xbf16>
    %c96_99 = arith.constant 96 : index
    %c0_100 = arith.constant 0 : index
    %299 = vector.load %arg18[%c96_99, %c0_100] : memref<864x512xbf16, #tpu.memory_space<vmem>>, vector<96x128xbf16>
    tpu.vector_store %arg18[%c96_99, %c0_100], %298 {strides = array<i32>} : memref<864x512xbf16, #tpu.memory_space<vmem>>, vector<96x128xbf16>,
    %c7_i32_101 = arith.constant 7 : i32
    %300 = tpu.dynamic_rotate %289 by %c7_i32_101 dim 1 : vector<96x128xf32>, i32 -> vector<96x128xf32>
    %301 = vector.broadcast %57 : vector<1x128xf32> to vector<96x128xf32>
    %302 = arith.mulf %300, %301 : vector<96x128xf32>
    %303 = arith.truncf %302 : vector<96x128xf32> to vector<96x128xbf16>
    %c192_102 = arith.constant 192 : index
    %c0_103 = arith.constant 0 : index
    %304 = vector.load %arg18[%c192_102, %c0_103] : memref<864x512xbf16, #tpu.memory_space<vmem>>, vector<96x128xbf16>
    tpu.vector_store %arg18[%c192_102, %c0_103], %303 {strides = array<i32>} : memref<864x512xbf16, #tpu.memory_space<vmem>>, vector<96x128xbf16>,
    %c1_i32_104 = arith.constant 1 : i32
    %305 = tpu.dynamic_rotate %289 by %c1_i32_104 dim 1 : vector<96x128xf32>, i32 -> vector<96x128xf32>
    %306 = vector.broadcast %59 : vector<1x128xf32> to vector<96x128xf32>
    %307 = arith.mulf %305, %306 : vector<96x128xf32>
    %308 = arith.truncf %307 : vector<96x128xf32> to vector<96x128xbf16>
    %c288 = arith.constant 288 : index
    %c0_105 = arith.constant 0 : index
    %309 = vector.load %arg18[%c288, %c0_105] : memref<864x512xbf16, #tpu.memory_space<vmem>>, vector<96x128xbf16>
    tpu.vector_store %arg18[%c288, %c0_105], %308 {strides = array<i32>} : memref<864x512xbf16, #tpu.memory_space<vmem>>, vector<96x128xbf16>,
    %310 = arith.truncf %289 : vector<96x128xf32> to vector<96x128xbf16>
    %c384 = arith.constant 384 : index
    %c0_106 = arith.constant 0 : index
    %311 = vector.load %arg18[%c384, %c0_106] : memref<864x512xbf16, #tpu.memory_space<vmem>>, vector<96x128xbf16>
    tpu.vector_store %arg18[%c384, %c0_106], %310 {strides = array<i32>} : memref<864x512xbf16, #tpu.memory_space<vmem>>, vector<96x128xbf16>,
    %c127_i32_107 = arith.constant 127 : i32
    %312 = tpu.dynamic_rotate %289 by %c127_i32_107 dim 1 : vector<96x128xf32>, i32 -> vector<96x128xf32>
    %313 = vector.broadcast %61 : vector<1x128xf32> to vector<96x128xf32>
    %314 = arith.mulf %312, %313 : vector<96x128xf32>
    %315 = arith.truncf %314 : vector<96x128xf32> to vector<96x128xbf16>
    %c480 = arith.constant 480 : index
    %c0_108 = arith.constant 0 : index
    %316 = vector.load %arg18[%c480, %c0_108] : memref<864x512xbf16, #tpu.memory_space<vmem>>, vector<96x128xbf16>
    tpu.vector_store %arg18[%c480, %c0_108], %315 {strides = array<i32>} : memref<864x512xbf16, #tpu.memory_space<vmem>>, vector<96x128xbf16>,
    %c121_i32_109 = arith.constant 121 : i32
    %317 = tpu.dynamic_rotate %289 by %c121_i32_109 dim 1 : vector<96x128xf32>, i32 -> vector<96x128xf32>
    %318 = vector.broadcast %64 : vector<1x128xf32> to vector<96x128xf32>
    %319 = arith.mulf %317, %318 : vector<96x128xf32>
    %320 = arith.truncf %319 : vector<96x128xf32> to vector<96x128xbf16>
    %c576 = arith.constant 576 : index
    %c0_110 = arith.constant 0 : index
    %321 = vector.load %arg18[%c576, %c0_110] : memref<864x512xbf16, #tpu.memory_space<vmem>>, vector<96x128xbf16>
    tpu.vector_store %arg18[%c576, %c0_110], %320 {strides = array<i32>} : memref<864x512xbf16, #tpu.memory_space<vmem>>, vector<96x128xbf16>,
    %c120_i32_111 = arith.constant 120 : i32
    %322 = tpu.dynamic_rotate %289 by %c120_i32_111 dim 1 : vector<96x128xf32>, i32 -> vector<96x128xf32>
    %323 = vector.broadcast %66 : vector<1x128xf32> to vector<96x128xf32>
    %324 = arith.mulf %322, %323 : vector<96x128xf32>
    %325 = arith.truncf %324 : vector<96x128xf32> to vector<96x128xbf16>
    %c672 = arith.constant 672 : index
    %c0_112 = arith.constant 0 : index
    %326 = vector.load %arg18[%c672, %c0_112] : memref<864x512xbf16, #tpu.memory_space<vmem>>, vector<96x128xbf16>
    tpu.vector_store %arg18[%c672, %c0_112], %325 {strides = array<i32>} : memref<864x512xbf16, #tpu.memory_space<vmem>>, vector<96x128xbf16>,
    %c119_i32_113 = arith.constant 119 : i32
    %327 = tpu.dynamic_rotate %289 by %c119_i32_113 dim 1 : vector<96x128xf32>, i32 -> vector<96x128xf32>
    %328 = vector.broadcast %69 : vector<1x128xf32> to vector<96x128xf32>
    %329 = arith.mulf %327, %328 : vector<96x128xf32>
    %330 = arith.truncf %329 : vector<96x128xf32> to vector<96x128xbf16>
    %c768 = arith.constant 768 : index
    %c0_114 = arith.constant 0 : index
    %331 = vector.load %arg18[%c768, %c0_114] : memref<864x512xbf16, #tpu.memory_space<vmem>>, vector<96x128xbf16>
    tpu.vector_store %arg18[%c768, %c0_114], %330 {strides = array<i32>} : memref<864x512xbf16, #tpu.memory_space<vmem>>, vector<96x128xbf16>,
    %c0_115 = arith.constant 0 : index
    %c0_116 = arith.constant 0 : index
    %332 = vector.load %arg7[%c0_115, %c0_116] : memref<32x864xbf16, #tpu.memory_space<vmem>>, vector<32x864xbf16>
    %c0_117 = arith.constant 0 : index
    %c0_118 = arith.constant 0 : index
    %333 = vector.load %arg18[%c0_117, %c0_118] : memref<864x512xbf16, #tpu.memory_space<vmem>>, vector<864x128xbf16>
    %cst_119 = arith.constant dense<0.000000e+00> : vector<32x128xf32>
    %334 = tpu.matmul %332, %333, %cst_119 {dimension_numbers = #tpu.dot_dimension_numbers<[1], [0], [0], [1], [0, 0, 1, 1], [], []>} : vector<32x864xbf16>, vector<864x128xbf16>, vector<32x128xf32> -> vector<32x128xf32>
    %c0_120 = arith.constant 0 : index
    %c0_121 = arith.constant 0 : index
    %335 = vector.load %arg8[%c0_120, %c0_121] : memref<32x1xf32, #tpu.memory_space<vmem>>, vector<32x1xf32>
    %336 = vector.broadcast %335 : vector<32x1xf32> to vector<32x128xf32>
    %337 = arith.addf %334, %336 : vector<32x128xf32>
    %cst_122 = arith.constant 0.000000e+00 : f32
    %338 = vector.broadcast %cst_122 : f32 to vector<32x128xf32>
    %339 = arith.maximumf %337, %338 : vector<32x128xf32>
    %340 = arith.truncf %339 : vector<32x128xf32> to vector<32x128xbf16>
    %c0_123 = arith.constant 0 : index
    %c0_124 = arith.constant 0 : index
    %341 = vector.load %arg16[%c0_123, %c0_124] : memref<128x512xbf16, #tpu.memory_space<vmem>>, vector<128x512xbf16>
    %cst_125 = arith.constant dense<0.000000e+00> : vector<32x512xf32>
    %342 = tpu.matmul %340, %341, %cst_125 {dimension_numbers = #tpu.dot_dimension_numbers<[1], [0], [0], [1], [0, 0, 1, 1], [], []>} : vector<32x128xbf16>, vector<128x512xbf16>, vector<32x512xf32> -> vector<32x512xf32>
    %343 = tpu.concatenate %342, %155 in 0 : vector<32x512xf32>, vector<16x512xf32> -> vector<48x512xf32>
    %c17_i32_126 = arith.constant 17 : i32
    %344 = tpu.dynamic_rotate %343 by %c17_i32_126 dim 1 : vector<48x512xf32>, i32 -> vector<48x512xf32>
    %345 = vector.broadcast %17 : vector<1x512xf32> to vector<48x512xf32>
    %346 = arith.mulf %344, %345 : vector<48x512xf32>
    %347 = arith.truncf %346 : vector<48x512xf32> to vector<48x512xbf16>
    %c0_127 = arith.constant 0 : index
    %c0_128 = arith.constant 0 : index
    %348 = vector.load %arg18[%c0_127, %c0_128] : memref<864x512xbf16, #tpu.memory_space<vmem>>, vector<48x512xbf16>
    tpu.vector_store %arg18[%c0_127, %c0_128], %347 {strides = array<i32>} : memref<864x512xbf16, #tpu.memory_space<vmem>>, vector<48x512xbf16>,
    %c16_i32_129 = arith.constant 16 : i32
    %349 = tpu.dynamic_rotate %343 by %c16_i32_129 dim 1 : vector<48x512xf32>, i32 -> vector<48x512xf32>
    %350 = vector.broadcast %19 : vector<1x512xf32> to vector<48x512xf32>
    %351 = arith.mulf %349, %350 : vector<48x512xf32>
    %352 = arith.truncf %351 : vector<48x512xf32> to vector<48x512xbf16>
    %c48_130 = arith.constant 48 : index
    %c0_131 = arith.constant 0 : index
    %353 = vector.load %arg18[%c48_130, %c0_131] : memref<864x512xbf16, #tpu.memory_space<vmem>>, vector<48x512xbf16>
    tpu.vector_store %arg18[%c48_130, %c0_131], %352 {strides = array<i32>} : memref<864x512xbf16, #tpu.memory_space<vmem>>, vector<48x512xbf16>,
    %c15_i32_132 = arith.constant 15 : i32
    %354 = tpu.dynamic_rotate %343 by %c15_i32_132 dim 1 : vector<48x512xf32>, i32 -> vector<48x512xf32>
    %355 = vector.broadcast %22 : vector<1x512xf32> to vector<48x512xf32>
    %356 = arith.mulf %354, %355 : vector<48x512xf32>
    %357 = arith.truncf %356 : vector<48x512xf32> to vector<48x512xbf16>
    %c96_133 = arith.constant 96 : index
    %c0_134 = arith.constant 0 : index
    %358 = vector.load %arg18[%c96_133, %c0_134] : memref<864x512xbf16, #tpu.memory_space<vmem>>, vector<48x512xbf16>
    tpu.vector_store %arg18[%c96_133, %c0_134], %357 {strides = array<i32>} : memref<864x512xbf16, #tpu.memory_space<vmem>>, vector<48x512xbf16>,
    %c1_i32_135 = arith.constant 1 : i32
    %359 = tpu.dynamic_rotate %343 by %c1_i32_135 dim 1 : vector<48x512xf32>, i32 -> vector<48x512xf32>
    %360 = vector.broadcast %24 : vector<1x512xf32> to vector<48x512xf32>
    %361 = arith.mulf %359, %360 : vector<48x512xf32>
    %362 = arith.truncf %361 : vector<48x512xf32> to vector<48x512xbf16>
    %c144 = arith.constant 144 : index
    %c0_136 = arith.constant 0 : index
    %363 = vector.load %arg18[%c144, %c0_136] : memref<864x512xbf16, #tpu.memory_space<vmem>>, vector<48x512xbf16>
    tpu.vector_store %arg18[%c144, %c0_136], %362 {strides = array<i32>} : memref<864x512xbf16, #tpu.memory_space<vmem>>, vector<48x512xbf16>,
    %364 = arith.truncf %343 : vector<48x512xf32> to vector<48x512xbf16>
    %c192_137 = arith.constant 192 : index
    %c0_138 = arith.constant 0 : index
    %365 = vector.load %arg18[%c192_137, %c0_138] : memref<864x512xbf16, #tpu.memory_space<vmem>>, vector<48x512xbf16>
    tpu.vector_store %arg18[%c192_137, %c0_138], %364 {strides = array<i32>} : memref<864x512xbf16, #tpu.memory_space<vmem>>, vector<48x512xbf16>,
    %c511_i32_139 = arith.constant 511 : i32
    %366 = tpu.dynamic_rotate %343 by %c511_i32_139 dim 1 : vector<48x512xf32>, i32 -> vector<48x512xf32>
    %367 = vector.broadcast %26 : vector<1x512xf32> to vector<48x512xf32>
    %368 = arith.mulf %366, %367 : vector<48x512xf32>
    %369 = arith.truncf %368 : vector<48x512xf32> to vector<48x512xbf16>
    %c240 = arith.constant 240 : index
    %c0_140 = arith.constant 0 : index
    %370 = vector.load %arg18[%c240, %c0_140] : memref<864x512xbf16, #tpu.memory_space<vmem>>, vector<48x512xbf16>
    tpu.vector_store %arg18[%c240, %c0_140], %369 {strides = array<i32>} : memref<864x512xbf16, #tpu.memory_space<vmem>>, vector<48x512xbf16>,
    %c497_i32_141 = arith.constant 497 : i32
    %371 = tpu.dynamic_rotate %343 by %c497_i32_141 dim 1 : vector<48x512xf32>, i32 -> vector<48x512xf32>
    %372 = vector.broadcast %29 : vector<1x512xf32> to vector<48x512xf32>
    %373 = arith.mulf %371, %372 : vector<48x512xf32>
    %374 = arith.truncf %373 : vector<48x512xf32> to vector<48x512xbf16>
    %c288_142 = arith.constant 288 : index
    %c0_143 = arith.constant 0 : index
    %375 = vector.load %arg18[%c288_142, %c0_143] : memref<864x512xbf16, #tpu.memory_space<vmem>>, vector<48x512xbf16>
    tpu.vector_store %arg18[%c288_142, %c0_143], %374 {strides = array<i32>} : memref<864x512xbf16, #tpu.memory_space<vmem>>, vector<48x512xbf16>,
    %c496_i32_144 = arith.constant 496 : i32
    %376 = tpu.dynamic_rotate %343 by %c496_i32_144 dim 1 : vector<48x512xf32>, i32 -> vector<48x512xf32>
    %377 = vector.broadcast %31 : vector<1x512xf32> to vector<48x512xf32>
    %378 = arith.mulf %376, %377 : vector<48x512xf32>
    %379 = arith.truncf %378 : vector<48x512xf32> to vector<48x512xbf16>
    %c336 = arith.constant 336 : index
    %c0_145 = arith.constant 0 : index
    %380 = vector.load %arg18[%c336, %c0_145] : memref<864x512xbf16, #tpu.memory_space<vmem>>, vector<48x512xbf16>
    tpu.vector_store %arg18[%c336, %c0_145], %379 {strides = array<i32>} : memref<864x512xbf16, #tpu.memory_space<vmem>>, vector<48x512xbf16>,
    %c495_i32_146 = arith.constant 495 : i32
    %381 = tpu.dynamic_rotate %343 by %c495_i32_146 dim 1 : vector<48x512xf32>, i32 -> vector<48x512xf32>
    %382 = vector.broadcast %34 : vector<1x512xf32> to vector<48x512xf32>
    %383 = arith.mulf %381, %382 : vector<48x512xf32>
    %384 = arith.truncf %383 : vector<48x512xf32> to vector<48x512xbf16>
    %c384_147 = arith.constant 384 : index
    %c0_148 = arith.constant 0 : index
    %385 = vector.load %arg18[%c384_147, %c0_148] : memref<864x512xbf16, #tpu.memory_space<vmem>>, vector<48x512xbf16>
    tpu.vector_store %arg18[%c384_147, %c0_148], %384 {strides = array<i32>} : memref<864x512xbf16, #tpu.memory_space<vmem>>, vector<48x512xbf16>,
    %c0_149 = arith.constant 0 : index
    %c0_150 = arith.constant 0 : index
    %386 = vector.load %arg9[%c0_149, %c0_150] : memref<16x432xbf16, #tpu.memory_space<vmem>>, vector<16x432xbf16>
    %c0_151 = arith.constant 0 : index
    %c0_152 = arith.constant 0 : index
    %387 = vector.load %arg18[%c0_151, %c0_152] : memref<864x512xbf16, #tpu.memory_space<vmem>>, vector<432x512xbf16>
    %cst_153 = arith.constant dense<0.000000e+00> : vector<16x512xf32>
    %388 = tpu.matmul %386, %387, %cst_153 {dimension_numbers = #tpu.dot_dimension_numbers<[1], [0], [0], [1], [0, 0, 1, 1], [], []>} : vector<16x432xbf16>, vector<432x512xbf16>, vector<16x512xf32> -> vector<16x512xf32>
    %c0_154 = arith.constant 0 : index
    %c0_155 = arith.constant 0 : index
    %389 = vector.load %arg10[%c0_154, %c0_155] : memref<16x1xf32, #tpu.memory_space<vmem>>, vector<16x1xf32>
    %390 = vector.broadcast %389 : vector<16x1xf32> to vector<16x512xf32>
    %391 = arith.addf %388, %390 : vector<16x512xf32>
    %cst_156 = arith.constant 0.000000e+00 : f32
    %392 = vector.broadcast %cst_156 : f32 to vector<16x512xf32>
    %393 = arith.maximumf %391, %392 : vector<16x512xf32>
    %c17_i32_157 = arith.constant 17 : i32
    %394 = tpu.dynamic_rotate %393 by %c17_i32_157 dim 1 : vector<16x512xf32>, i32 -> vector<16x512xf32>
    %395 = vector.broadcast %17 : vector<1x512xf32> to vector<16x512xf32>
    %396 = arith.mulf %394, %395 : vector<16x512xf32>
    %397 = arith.truncf %396 : vector<16x512xf32> to vector<16x512xbf16>
    %c0_158 = arith.constant 0 : index
    %c0_159 = arith.constant 0 : index
    %398 = vector.load %arg18[%c0_158, %c0_159] : memref<864x512xbf16, #tpu.memory_space<vmem>>, vector<16x512xbf16>
    tpu.vector_store %arg18[%c0_158, %c0_159], %397 {strides = array<i32>} : memref<864x512xbf16, #tpu.memory_space<vmem>>, vector<16x512xbf16>,
    %c16_i32_160 = arith.constant 16 : i32
    %399 = tpu.dynamic_rotate %393 by %c16_i32_160 dim 1 : vector<16x512xf32>, i32 -> vector<16x512xf32>
    %400 = vector.broadcast %19 : vector<1x512xf32> to vector<16x512xf32>
    %401 = arith.mulf %399, %400 : vector<16x512xf32>
    %402 = arith.truncf %401 : vector<16x512xf32> to vector<16x512xbf16>
    %c16_161 = arith.constant 16 : index
    %c0_162 = arith.constant 0 : index
    %403 = vector.load %arg18[%c16_161, %c0_162] : memref<864x512xbf16, #tpu.memory_space<vmem>>, vector<16x512xbf16>
    tpu.vector_store %arg18[%c16_161, %c0_162], %402 {strides = array<i32>} : memref<864x512xbf16, #tpu.memory_space<vmem>>, vector<16x512xbf16>,
    %c15_i32_163 = arith.constant 15 : i32
    %404 = tpu.dynamic_rotate %393 by %c15_i32_163 dim 1 : vector<16x512xf32>, i32 -> vector<16x512xf32>
    %405 = vector.broadcast %22 : vector<1x512xf32> to vector<16x512xf32>
    %406 = arith.mulf %404, %405 : vector<16x512xf32>
    %407 = arith.truncf %406 : vector<16x512xf32> to vector<16x512xbf16>
    %c32_164 = arith.constant 32 : index
    %c0_165 = arith.constant 0 : index
    %408 = vector.load %arg18[%c32_164, %c0_165] : memref<864x512xbf16, #tpu.memory_space<vmem>>, vector<16x512xbf16>
    tpu.vector_store %arg18[%c32_164, %c0_165], %407 {strides = array<i32>} : memref<864x512xbf16, #tpu.memory_space<vmem>>, vector<16x512xbf16>,
    %c1_i32_166 = arith.constant 1 : i32
    %409 = tpu.dynamic_rotate %393 by %c1_i32_166 dim 1 : vector<16x512xf32>, i32 -> vector<16x512xf32>
    %410 = vector.broadcast %24 : vector<1x512xf32> to vector<16x512xf32>
    %411 = arith.mulf %409, %410 : vector<16x512xf32>
    %412 = arith.truncf %411 : vector<16x512xf32> to vector<16x512xbf16>
    %c48_167 = arith.constant 48 : index
    %c0_168 = arith.constant 0 : index
    %413 = vector.load %arg18[%c48_167, %c0_168] : memref<864x512xbf16, #tpu.memory_space<vmem>>, vector<16x512xbf16>
    tpu.vector_store %arg18[%c48_167, %c0_168], %412 {strides = array<i32>} : memref<864x512xbf16, #tpu.memory_space<vmem>>, vector<16x512xbf16>,
    %414 = arith.truncf %393 : vector<16x512xf32> to vector<16x512xbf16>
    %c64_169 = arith.constant 64 : index
    %c0_170 = arith.constant 0 : index
    %415 = vector.load %arg18[%c64_169, %c0_170] : memref<864x512xbf16, #tpu.memory_space<vmem>>, vector<16x512xbf16>
    tpu.vector_store %arg18[%c64_169, %c0_170], %414 {strides = array<i32>} : memref<864x512xbf16, #tpu.memory_space<vmem>>, vector<16x512xbf16>,
    %c511_i32_171 = arith.constant 511 : i32
    %416 = tpu.dynamic_rotate %393 by %c511_i32_171 dim 1 : vector<16x512xf32>, i32 -> vector<16x512xf32>
    %417 = vector.broadcast %26 : vector<1x512xf32> to vector<16x512xf32>
    %418 = arith.mulf %416, %417 : vector<16x512xf32>
    %419 = arith.truncf %418 : vector<16x512xf32> to vector<16x512xbf16>
    %c80_172 = arith.constant 80 : index
    %c0_173 = arith.constant 0 : index
    %420 = vector.load %arg18[%c80_172, %c0_173] : memref<864x512xbf16, #tpu.memory_space<vmem>>, vector<16x512xbf16>
    tpu.vector_store %arg18[%c80_172, %c0_173], %419 {strides = array<i32>} : memref<864x512xbf16, #tpu.memory_space<vmem>>, vector<16x512xbf16>,
    %c497_i32_174 = arith.constant 497 : i32
    %421 = tpu.dynamic_rotate %393 by %c497_i32_174 dim 1 : vector<16x512xf32>, i32 -> vector<16x512xf32>
    %422 = vector.broadcast %29 : vector<1x512xf32> to vector<16x512xf32>
    %423 = arith.mulf %421, %422 : vector<16x512xf32>
    %424 = arith.truncf %423 : vector<16x512xf32> to vector<16x512xbf16>
    %c96_175 = arith.constant 96 : index
    %c0_176 = arith.constant 0 : index
    %425 = vector.load %arg18[%c96_175, %c0_176] : memref<864x512xbf16, #tpu.memory_space<vmem>>, vector<16x512xbf16>
    tpu.vector_store %arg18[%c96_175, %c0_176], %424 {strides = array<i32>} : memref<864x512xbf16, #tpu.memory_space<vmem>>, vector<16x512xbf16>,
    %c496_i32_177 = arith.constant 496 : i32
    %426 = tpu.dynamic_rotate %393 by %c496_i32_177 dim 1 : vector<16x512xf32>, i32 -> vector<16x512xf32>
    %427 = vector.broadcast %31 : vector<1x512xf32> to vector<16x512xf32>
    %428 = arith.mulf %426, %427 : vector<16x512xf32>
    %429 = arith.truncf %428 : vector<16x512xf32> to vector<16x512xbf16>
    %c112_178 = arith.constant 112 : index
    %c0_179 = arith.constant 0 : index
    %430 = vector.load %arg18[%c112_178, %c0_179] : memref<864x512xbf16, #tpu.memory_space<vmem>>, vector<16x512xbf16>
    tpu.vector_store %arg18[%c112_178, %c0_179], %429 {strides = array<i32>} : memref<864x512xbf16, #tpu.memory_space<vmem>>, vector<16x512xbf16>,
    %c495_i32_180 = arith.constant 495 : i32
    %431 = tpu.dynamic_rotate %393 by %c495_i32_180 dim 1 : vector<16x512xf32>, i32 -> vector<16x512xf32>
    %432 = vector.broadcast %34 : vector<1x512xf32> to vector<16x512xf32>
    %433 = arith.mulf %431, %432 : vector<16x512xf32>
    %434 = arith.truncf %433 : vector<16x512xf32> to vector<16x512xbf16>
    %c128_181 = arith.constant 128 : index
    %c0_182 = arith.constant 0 : index
    %435 = vector.load %arg18[%c128_181, %c0_182] : memref<864x512xbf16, #tpu.memory_space<vmem>>, vector<16x512xbf16>
    tpu.vector_store %arg18[%c128_181, %c0_182], %434 {strides = array<i32>} : memref<864x512xbf16, #tpu.memory_space<vmem>>, vector<16x512xbf16>,
    %c0_183 = arith.constant 0 : index
    %c0_184 = arith.constant 0 : index
    %436 = vector.load %arg11[%c0_183, %c0_184] : memref<2x144xbf16, #tpu.memory_space<vmem>>, vector<2x144xbf16>
    %c0_185 = arith.constant 0 : index
    %c0_186 = arith.constant 0 : index
    %437 = vector.load %arg18[%c0_185, %c0_186] : memref<864x512xbf16, #tpu.memory_space<vmem>>, vector<144x512xbf16>
    %cst_187 = arith.constant dense<0.000000e+00> : vector<2x512xf32>
    %438 = tpu.matmul %436, %437, %cst_187 {dimension_numbers = #tpu.dot_dimension_numbers<[1], [0], [0], [1], [0, 0, 1, 1], [], []>} : vector<2x144xbf16>, vector<144x512xbf16>, vector<2x512xf32> -> vector<2x512xf32>
    %c0_188 = arith.constant 0 : index
    %c0_189 = arith.constant 0 : index
    %439 = vector.load %arg12[%c0_188, %c0_189] : memref<2x1xf32, #tpu.memory_space<vmem>>, vector<2x1xf32>
    %440 = vector.broadcast %439 : vector<2x1xf32> to vector<2x512xf32>
    %441 = arith.addf %438, %440 : vector<2x512xf32>
    %c0_190 = arith.constant 0 : index
    %c0_191 = arith.constant 0 : index
    %442 = vector.load %arg17[%c0_190, %c0_191] : memref<2x512xf32, #tpu.memory_space<vmem>>, vector<2x512xf32>
    tpu.vector_store %arg17[%c0_190, %c0_191], %441 {strides = array<i32>} : memref<2x512xf32, #tpu.memory_space<vmem>>, vector<2x512xf32>,
    return
  }
}

</mosaic_0001>

<llo_original>
// kernel: net_forward.1
$region0: #{net_forward.1}
  #allocation0 [shape = 'u32[]', space=smem, size = 0x4, offset = 0x4, fixed_abs, tag = 'smem constant byte address 0x4 - core index']
  #allocation1 [shape = 'u32[144,128]{1,0:T(1,128)}', space=vmem, size = 0x12000, scoped, tag = 'internal scratch']
  #allocation2 [shape = 'bf16[864,512]{1,0:T(16,128)(2,1)}', space=vmem, size = 0xd8000, scoped, tag = 'scratch operand']
  %s0 = inlined_call_operand.vmem [shape: f32[16,512], index: 0, kind: input, shape index: {}]
  %s1 = inlined_call_operand.vmem [shape: bf16[16,144], index: 1, kind: input, shape index: {}]
  %s2 = inlined_call_operand.vmem [shape: f32[16,1], index: 2, kind: input, shape index: {}]
  %s3 = inlined_call_operand.vmem [shape: bf16[32,144], index: 3, kind: input, shape index: {}]
  %s4 = inlined_call_operand.vmem [shape: f32[32,1], index: 4, kind: input, shape index: {}]
  %s5 = inlined_call_operand.vmem [shape: bf16[64,288], index: 5, kind: input, shape index: {}]
  %s6 = inlined_call_operand.vmem [shape: f32[64,1], index: 6, kind: input, shape index: {}]
  %s7 = inlined_call_operand.vmem [shape: bf16[32,864], index: 7, kind: input, shape index: {}]
  %s8 = inlined_call_operand.vmem [shape: f32[32,1], index: 8, kind: input, shape index: {}]
  %s9 = inlined_call_operand.vmem [shape: bf16[16,432], index: 9, kind: input, shape index: {}]
  %s10 = inlined_call_operand.vmem [shape: f32[16,1], index: 10, kind: input, shape index: {}]
  %s11 = inlined_call_operand.vmem [shape: bf16[2,144], index: 11, kind: input, shape index: {}]
  %s12 = inlined_call_operand.vmem [shape: f32[2,1], index: 12, kind: input, shape index: {}]
  %s13 = inlined_call_operand.vmem [shape: bf16[512,128], index: 13, kind: input, shape index: {}]
  %s14 = inlined_call_operand.vmem [shape: bf16[128,32], index: 14, kind: input, shape index: {}]
  %s15 = inlined_call_operand.vmem [shape: bf16[32,128], index: 15, kind: input, shape index: {}]
  %s16 = inlined_call_operand.vmem [shape: bf16[128,512], index: 16, kind: input, shape index: {}]
  %s17 = inlined_call_operand.vmem [shape: f32[2,512], index: 17, kind: output, shape index: {}]
  %s18 = sld [smem:[#allocation0]]
  $region78: #{net_forward.1} parent=0
    _
  %s20 = ssub.s32 1, %s18
  %s21 = scalar_select 0, %s20, %s18
  // Predicated region
  $region2: #{net_forward.1} parent=0 // pred_check
    _
  $region3: #{net_forward.1} parent=0 // pred_check_branch
    %23 = sbr.rel (0) target = $region5
  $region4: #{net_forward.1} parent=0 // pred_region
    _
  $region5: #{net_forward.1} parent=0 // pred_fallthru
    _
  // Predicated region
  $region6: #{net_forward.1} parent=0 // pred_check
    _
  $region7: #{net_forward.1} parent=0 // pred_check_branch
    %25 = sbr.rel (0) target = $region9
  $region8: #{net_forward.1} parent=0 // pred_region
    _
  $region9: #{net_forward.1} parent=0 // pred_fallthru
    _
  // Predicated region
  $region10: #{net_forward.1} parent=0 // pred_check
    _
  $region11: #{net_forward.1} parent=0 // pred_check_branch
    %27 = sbr.rel (0) target = $region13
  $region12: #{net_forward.1} parent=0 // pred_region
    _
  $region13: #{net_forward.1} parent=0 // pred_fallthru
    _
  // Predicated region
  $region14: #{net_forward.1} parent=0 // pred_check
    _
  $region15: #{net_forward.1} parent=0 // pred_check_branch
    %29 = sbr.rel (0) target = $region17
  $region16: #{net_forward.1} parent=0 // pred_region
    _
  $region17: #{net_forward.1} parent=0 // pred_fallthru
    _
  // Predicated region
  $region18: #{net_forward.1} parent=0 // pred_check
    _
  $region19: #{net_forward.1} parent=0 // pred_check_branch
    %31 = sbr.rel (0) target = $region21
  $region20: #{net_forward.1} parent=0 // pred_region
    _
  $region21: #{net_forward.1} parent=0 // pred_fallthru
    _
  // Predicated region
  $region22: #{net_forward.1} parent=0 // pred_check
    _
  $region23: #{net_forward.1} parent=0 // pred_check_branch
    %33 = sbr.rel (0) target = $region25
  $region24: #{net_forward.1} parent=0 // pred_region
    _
  $region25: #{net_forward.1} parent=0 // pred_fallthru
    _
  // Predicated region
  $region26: #{net_forward.1} parent=0 // pred_check
    _
  $region27: #{net_forward.1} parent=0 // pred_check_branch
    %35 = sbr.rel (0) target = $region29
  $region28: #{net_forward.1} parent=0 // pred_region
    _
  $region29: #{net_forward.1} parent=0 // pred_fallthru
    _
  // Predicated region
  $region30: #{net_forward.1} parent=0 // pred_check
    _
  $region31: #{net_forward.1} parent=0 // pred_check_branch
    %37 = sbr.rel (0) target = $region33
  $region32: #{net_forward.1} parent=0 // pred_region
    _
  $region33: #{net_forward.1} parent=0 // pred_fallthru
    _
  // Predicated region
  $region34: #{net_forward.1} parent=0 // pred_check
    _
  $region35: #{net_forward.1} parent=0 // pred_check_branch
    %39 = sbr.rel (0) target = $region37
  $region36: #{net_forward.1} parent=0 // pred_region
    _
  $region37: #{net_forward.1} parent=0 // pred_fallthru
    _
  // Predicated region
  $region38: #{net_forward.1} parent=0 // pred_check
    _
  $region39: #{net_forward.1} parent=0 // pred_check_branch
    %41 = sbr.rel (0) target = $region41
  $region40: #{net_forward.1} parent=0 // pred_region
    _
  $region41: #{net_forward.1} parent=0 // pred_fallthru
    _
  // Predicated region
  $region42: #{net_forward.1} parent=0 // pred_check
    _
  $region43: #{net_forward.1} parent=0 // pred_check_branch
    %43 = sbr.rel (0) target = $region45
  $region44: #{net_forward.1} parent=0 // pred_region
    _
  $region45: #{net_forward.1} parent=0 // pred_fallthru
    _
  // Predicated region
  $region46: #{net_forward.1} parent=0 // pred_check
    _
  $region47: #{net_forward.1} parent=0 // pred_check_branch
    %45 = sbr.rel (0) target = $region49
  $region48: #{net_forward.1} parent=0 // pred_region
    _
  $region49: #{net_forward.1} parent=0 // pred_fallthru
    _
  // Predicated region
  $region50: #{net_forward.1} parent=0 // pred_check
    _
  $region51: #{net_forward.1} parent=0 // pred_check_branch
    %47 = sbr.rel (0) target = $region53
  $region52: #{net_forward.1} parent=0 // pred_region
    _
  $region53: #{net_forward.1} parent=0 // pred_fallthru
    _
  // Predicated region
  $region54: #{net_forward.1} parent=0 // pred_check
    _
  $region55: #{net_forward.1} parent=0 // pred_check_branch
    %49 = sbr.rel (0) target = $region57
  $region56: #{net_forward.1} parent=0 // pred_region
    _
  $region57: #{net_forward.1} parent=0 // pred_fallthru
    _
  // Predicated region
  $region58: #{net_forward.1} parent=0 // pred_check
    _
  $region59: #{net_forward.1} parent=0 // pred_check_branch
    %51 = sbr.rel (0) target = $region61
  $region60: #{net_forward.1} parent=0 // pred_region
    _
  $region61: #{net_forward.1} parent=0 // pred_fallthru
    _
  // Predicated region
  $region62: #{net_forward.1} parent=0 // pred_check
    _
  $region63: #{net_forward.1} parent=0 // pred_check_branch
    %53 = sbr.rel (0) target = $region65
  $region64: #{net_forward.1} parent=0 // pred_region
    _
  $region65: #{net_forward.1} parent=0 // pred_fallthru
    _
  // Predicated region
  $region66: #{net_forward.1} parent=0 // pred_check
    _
  $region67: #{net_forward.1} parent=0 // pred_check_branch
    %55 = sbr.rel (0) target = $region69
  $region68: #{net_forward.1} parent=0 // pred_region
    _
  $region69: #{net_forward.1} parent=0 // pred_fallthru
    _
  %v57 = vlaneseq
  %v58 = vand.u32 %v57, 127
  %v59 = vadd.s32 %v58, 128
  %v60 = vadd.s32 %v58, 256
  %v61 = vadd.s32 %v58, 384
  %v62 = vand.u32 %v58, 255
  %v63 = vand.u32 %v59, 255
  %v64 = vand.u32 %v60, 255
  %v65 = vand.u32 %v61, 255
  %v66 = vand.u32 %v62, 15
  %v67 = vand.u32 %v63, 15
  %v68 = vand.u32 %v64, 15
  %v69 = vand.u32 %v65, 15
  %v70 = vshra.s32 %v62, 4
  %v71 = vshra.s32 %v63, 4
  %v72 = vshra.s32 %v64, 4
  %v73 = vshra.s32 %v65, 4
  %vm74 = vcmp.gt.s32.totalorder %v66, 0
  %vm75 = vcmp.gt.s32.totalorder %v67, 0
  %vm76 = vcmp.gt.s32.totalorder %v68, 0
  %vm77 = vcmp.gt.s32.totalorder %v69, 0
  %vm78 = vcmp.lt.s32.totalorder %v66, 15
  %vm79 = vcmp.lt.s32.totalorder %v67, 15
  %vm80 = vcmp.lt.s32.totalorder %v68, 15
  %vm81 = vcmp.lt.s32.totalorder %v69, 15
  %vm82 = vcmp.gt.s32.totalorder %v70, 0
  %vm83 = vcmp.gt.s32.totalorder %v71, 0
  %vm84 = vcmp.gt.s32.totalorder %v72, 0
  %vm85 = vcmp.gt.s32.totalorder %v73, 0
  %vm86 = vcmp.lt.s32.totalorder %v70, 15
  %vm87 = vcmp.lt.s32.totalorder %v71, 15
  %vm88 = vcmp.lt.s32.totalorder %v72, 15
  %vm89 = vcmp.lt.s32.totalorder %v73, 15
  %vm90 = vmand %vm82, %vm74
  %vm91 = vmand %vm83, %vm75
  %vm92 = vmand %vm84, %vm76
  %vm93 = vmand %vm85, %vm77
  %v94 = vsel %vm90, 1, 0
  %v95 = vsel %vm91, 1, 0
  %v96 = vsel %vm92, 1, 0
  %v97 = vsel %vm93, 1, 0
  %v98 = vcvt.s32.f32 %v94
  %v99 = vcvt.s32.f32 %v95
  %v100 = vcvt.s32.f32 %v96
  %v101 = vcvt.s32.f32 %v97
  %v102 = vsel %vm82, 1, 0
  %v103 = vsel %vm83, 1, 0
  %v104 = vsel %vm84, 1, 0
  %v105 = vsel %vm85, 1, 0
  %v106 = vcvt.s32.f32 %v102
  %v107 = vcvt.s32.f32 %v103
  %v108 = vcvt.s32.f32 %v104
  %v109 = vcvt.s32.f32 %v105
  %vm110 = vmand %vm82, %vm78
  %vm111 = vmand %vm83, %vm79
  %vm112 = vmand %vm84, %vm80
  %vm113 = vmand %vm85, %vm81
  %v114 = vsel %vm110, 1, 0
  %v115 = vsel %vm111, 1, 0
  %v116 = vsel %vm112, 1, 0
  %v117 = vsel %vm113, 1, 0
  %v118 = vcvt.s32.f32 %v114
  %v119 = vcvt.s32.f32 %v115
  %v120 = vcvt.s32.f32 %v116
  %v121 = vcvt.s32.f32 %v117
  %v122 = vsel %vm74, 1, 0
  %v123 = vsel %vm75, 1, 0
  %v124 = vsel %vm76, 1, 0
  %v125 = vsel %vm77, 1, 0
  %v126 = vcvt.s32.f32 %v122
  %v127 = vcvt.s32.f32 %v123
  %v128 = vcvt.s32.f32 %v124
  %v129 = vcvt.s32.f32 %v125
  %v130 = vsel %vm78, 1, 0
  %v131 = vsel %vm79, 1, 0
  %v132 = vsel %vm80, 1, 0
  %v133 = vsel %vm81, 1, 0
  %v134 = vcvt.s32.f32 %v130
  %v135 = vcvt.s32.f32 %v131
  %v136 = vcvt.s32.f32 %v132
  %v137 = vcvt.s32.f32 %v133
  %vm138 = vmand %vm86, %vm74
  %vm139 = vmand %vm87, %vm75
  %vm140 = vmand %vm88, %vm76
  %vm141 = vmand %vm89, %vm77
  %v142 = vsel %vm138, 1, 0
  %v143 = vsel %vm139, 1, 0
  %v144 = vsel %vm140, 1, 0
  %v145 = vsel %vm141, 1, 0
  %v146 = vcvt.s32.f32 %v142
  %v147 = vcvt.s32.f32 %v143
  %v148 = vcvt.s32.f32 %v144
  %v149 = vcvt.s32.f32 %v145
  %v150 = vsel %vm86, 1, 0
  %v151 = vsel %vm87, 1, 0
  %v152 = vsel %vm88, 1, 0
  %v153 = vsel %vm89, 1, 0
  %v154 = vcvt.s32.f32 %v150
  %v155 = vcvt.s32.f32 %v151
  %v156 = vcvt.s32.f32 %v152
  %v157 = vcvt.s32.f32 %v153
  %vm158 = vmand %vm86, %vm78
  %vm159 = vmand %vm87, %vm79
  %vm160 = vmand %vm88, %vm80
  %vm161 = vmand %vm89, %vm81
  %v162 = vsel %vm158, 1, 0
  %v163 = vsel %vm159, 1, 0
  %v164 = vsel %vm160, 1, 0
  %v165 = vsel %vm161, 1, 0
  %v166 = vcvt.s32.f32 %v162
  %v167 = vcvt.s32.f32 %v163
  %v168 = vcvt.s32.f32 %v164
  %v169 = vcvt.s32.f32 %v165
  %v170 = vand.u32 %v58, 63
  %v171 = vand.u32 %v170, 7
  %v172 = vshra.s32 %v170, 3
  %vm173 = vcmp.gt.s32.totalorder %v171, 0
  %vm174 = vcmp.lt.s32.totalorder %v171, 7
  %vm175 = vcmp.gt.s32.totalorder %v172, 0
  %vm176 = vcmp.lt.s32.totalorder %v172, 7
  %vm177 = vmand %vm175, %vm173
  %v178 = vsel %vm177, 1, 0
  %v179 = vcvt.s32.f32 %v178
  %v180 = vsel %vm175, 1, 0
  %v181 = vcvt.s32.f32 %v180
  %vm182 = vmand %vm175, %vm174
  %v183 = vsel %vm182, 1, 0
  %v184 = vcvt.s32.f32 %v183
  %v185 = vsel %vm173, 1, 0
  %v186 = vcvt.s32.f32 %v185
  %v187 = vsel %vm174, 1, 0
  %v188 = vcvt.s32.f32 %v187
  %vm189 = vmand %vm176, %vm173
  %v190 = vsel %vm189, 1, 0
  %v191 = vcvt.s32.f32 %v190
  %v192 = vsel %vm176, 1, 0
  %v193 = vcvt.s32.f32 %v192
  %vm194 = vmand %vm176, %vm174
  %v195 = vsel %vm194, 1, 0
  %v196 = vcvt.s32.f32 %v195
  %v197 = vand.u32 %v58, 15
  %v198 = vand.u32 %v197, 3
  %v199 = vshra.s32 %v197, 2
  %vm200 = vcmp.gt.s32.totalorder %v198, 0
  %vm201 = vcmp.lt.s32.totalorder %v198, 3
  %vm202 = vcmp.gt.s32.totalorder %v199, 0
  %vm203 = vcmp.lt.s32.totalorder %v199, 3
  %vm204 = vmand %vm202, %vm200
  %v205 = vsel %vm204, 1, 0
  %v206 = vcvt.s32.f32 %v205
  %v207 = vsel %vm202, 1, 0
  %v208 = vcvt.s32.f32 %v207
  %vm209 = vmand %vm202, %vm201
  %v210 = vsel %vm209, 1, 0
  %v211 = vcvt.s32.f32 %v210
  %v212 = vsel %vm200, 1, 0
  %v213 = vcvt.s32.f32 %v212
  %v214 = vsel %vm201, 1, 0
  %v215 = vcvt.s32.f32 %v214
  %vm216 = vmand %vm203, %vm200
  %v217 = vsel %vm216, 1, 0
  %v218 = vcvt.s32.f32 %v217
  %v219 = vsel %vm203, 1, 0
  %v220 = vcvt.s32.f32 %v219
  %vm221 = vmand %vm203, %vm201
  %v222 = vsel %vm221, 1, 0
  %v223 = vcvt.s32.f32 %v222
  %v224 = vld [vmem:[%s0] sm:$0xff]
  %v225 = vld [vmem:[%s0 + $0x8] sm:$0xff]
  %v226 = vld [vmem:[%s0 + $0x10] sm:$0xff]
  %v227 = vld [vmem:[%s0 + $0x18] sm:$0xff]
  %v228 = vld [vmem:[%s0 + $0x20] sm:$0xff]
  %v229 = vld [vmem:[%s0 + $0x28] sm:$0xff]
  %v230 = vld [vmem:[%s0 + $0x30] sm:$0xff]
  %v231 = vld [vmem:[%s0 + $0x38] sm:$0xff]
  %232 = vrot.lane.b32.xlu0 %v224, 17
  %v233 = vpop.permute.xlu0 %232
  %234 = vrot.lane.b32.xlu0 %v228, 17
  %v235 = vpop.permute.xlu0 %234
  %236 = vrot.lane.b32.xlu0 %v225, 17
  %v237 = vpop.permute.xlu0 %236
  %238 = vrot.lane.b32.xlu0 %v229, 17
  %v239 = vpop.permute.xlu0 %238
  %240 = vrot.lane.b32.xlu0 %v226, 17
  %v241 = vpop.permute.xlu0 %240
  %242 = vrot.lane.b32.xlu0 %v230, 17
  %v243 = vpop.permute.xlu0 %242
  %244 = vrot.lane.b32.xlu0 %v227, 17
  %v245 = vpop.permute.xlu0 %244
  %246 = vrot.lane.b32.xlu0 %v231, 17
  %v247 = vpop.permute.xlu0 %246
  %vm248 = vcmp.lt.s32.totalorder %v58, 17
  %v249 = vsel %vm248, %v241, %v245
  %v250 = vsel %vm248, %v243, %v247
  %v251 = vsel %vm248, %v237, %v241
  %v252 = vsel %vm248, %v239, %v243
  %v253 = vsel %vm248, %v233, %v237
  %v254 = vsel %vm248, %v235, %v239
  %v255 = vsel %vm248, %v245, %v233
  %v256 = vsel %vm248, %v247, %v235
  %v257 = vmul.f32 %v255, %v98
  %v258 = vmul.f32 %v253, %v99
  %v259 = vmul.f32 %v251, %v100
  %v260 = vmul.f32 %v249, %v101
  %v261 = vmul.f32 %v256, %v98
  %v262 = vmul.f32 %v254, %v99
  %v263 = vmul.f32 %v252, %v100
  %v264 = vmul.f32 %v250, %v101
  %v265 = vpack.c.bf16 %v261, %v257
  %v266 = vpack.c.bf16 %v262, %v258
  %v267 = vpack.c.bf16 %v263, %v259
  %v268 = vpack.c.bf16 %v264, %v260
  %269 = vst [vmem:[#allocation2] sm:$0xff] %v265
  %270 = vst [vmem:[#allocation2 + $0x8] sm:$0xff] %v266
  %271 = vst [vmem:[#allocation2 + $0x10] sm:$0xff] %v267
  %272 = vst [vmem:[#allocation2 + $0x18] sm:$0xff] %v268
  %273 = vrot.lane.b32.xlu0 %v224, 16
  %v274 = vpop.permute.xlu0 %273
  %275 = vrot.lane.b32.xlu0 %v228, 16
  %v276 = vpop.permute.xlu0 %275
  %277 = vrot.lane.b32.xlu0 %v225, 16
  %v278 = vpop.permute.xlu0 %277
  %279 = vrot.lane.b32.xlu0 %v229, 16
  %v280 = vpop.permute.xlu0 %279
  %281 = vrot.lane.b32.xlu0 %v226, 16
  %v282 = vpop.permute.xlu0 %281
  %283 = vrot.lane.b32.xlu0 %v230, 16
  %v284 = vpop.permute.xlu0 %283
  %285 = vrot.lane.b32.xlu0 %v227, 16
  %v286 = vpop.permute.xlu0 %285
  %287 = vrot.lane.b32.xlu0 %v231, 16
  %v288 = vpop.permute.xlu0 %287
  %vm289 = vcmp.lt.s32.totalorder %v58, 16
  %v290 = vsel %vm289, %v282, %v286
  %v291 = vsel %vm289, %v284, %v288
  %v292 = vsel %vm289, %v278, %v282
  %v293 = vsel %vm289, %v280, %v284
  %v294 = vsel %vm289, %v274, %v278
  %v295 = vsel %vm289, %v276, %v280
  %v296 = vsel %vm289, %v286, %v274
  %v297 = vsel %vm289, %v288, %v276
  %v298 = vmul.f32 %v296, %v106
  %v299 = vmul.f32 %v294, %v107
  %v300 = vmul.f32 %v292, %v108
  %v301 = vmul.f32 %v290, %v109
  %v302 = vmul.f32 %v297, %v106
  %v303 = vmul.f32 %v295, %v107
  %v304 = vmul.f32 %v293, %v108
  %v305 = vmul.f32 %v291, %v109
  %v306 = vpack.c.bf16 %v302, %v298
  %v307 = vpack.c.bf16 %v303, %v299
  %v308 = vpack.c.bf16 %v304, %v300
  %v309 = vpack.c.bf16 %v305, %v301
  %310 = vst [vmem:[#allocation2 + $0x20] sm:$0xff] %v306
  %311 = vst [vmem:[#allocation2 + $0x28] sm:$0xff] %v307
  %312 = vst [vmem:[#allocation2 + $0x30] sm:$0xff] %v308
  %313 = vst [vmem:[#allocation2 + $0x38] sm:$0xff] %v309
  %314 = vrot.lane.b32.xlu0 %v224, 15
  %v315 = vpop.permute.xlu0 %314
  %316 = vrot.lane.b32.xlu0 %v228, 15
  %v317 = vpop.permute.xlu0 %316
  %318 = vrot.lane.b32.xlu0 %v225, 15
  %v319 = vpop.permute.xlu0 %318
  %320 = vrot.lane.b32.xlu0 %v229, 15
  %v321 = vpop.permute.xlu0 %320
  %322 = vrot.lane.b32.xlu0 %v226, 15
  %v323 = vpop.permute.xlu0 %322
  %324 = vrot.lane.b32.xlu0 %v230, 15
  %v325 = vpop.permute.xlu0 %324
  %326 = vrot.lane.b32.xlu0 %v227, 15
  %v327 = vpop.permute.xlu0 %326
  %328 = vrot.lane.b32.xlu0 %v231, 15
  %v329 = vpop.permute.xlu0 %328
  %vm330 = vcmp.lt.s32.totalorder %v58, 15
  %v331 = vsel %vm330, %v323, %v327
  %v332 = vsel %vm330, %v325, %v329
  %v333 = vsel %vm330, %v319, %v323
  %v334 = vsel %vm330, %v321, %v325
  %v335 = vsel %vm330, %v315, %v319
  %v336 = vsel %vm330, %v317, %v321
  %v337 = vsel %vm330, %v327, %v315
  %v338 = vsel %vm330, %v329, %v317
  %v339 = vmul.f32 %v337, %v118
  %v340 = vmul.f32 %v335, %v119
  %v341 = vmul.f32 %v333, %v120
  %v342 = vmul.f32 %v331, %v121
  %v343 = vmul.f32 %v338, %v118
  %v344 = vmul.f32 %v336, %v119
  %v345 = vmul.f32 %v334, %v120
  %v346 = vmul.f32 %v332, %v121
  %v347 = vpack.c.bf16 %v343, %v339
  %v348 = vpack.c.bf16 %v344, %v340
  %v349 = vpack.c.bf16 %v345, %v341
  %v350 = vpack.c.bf16 %v346, %v342
  %351 = vst [vmem:[#allocation2 + $0x40] sm:$0xff] %v347
  %352 = vst [vmem:[#allocation2 + $0x48] sm:$0xff] %v348
  %353 = vst [vmem:[#allocation2 + $0x50] sm:$0xff] %v349
  %354 = vst [vmem:[#allocation2 + $0x58] sm:$0xff] %v350
  %355 = vrot.lane.b32.xlu0 %v224, 1
  %v356 = vpop.permute.xlu0 %355
  %357 = vrot.lane.b32.xlu0 %v228, 1
  %v358 = vpop.permute.xlu0 %357
  %359 = vrot.lane.b32.xlu0 %v225, 1
  %v360 = vpop.permute.xlu0 %359
  %361 = vrot.lane.b32.xlu0 %v229, 1
  %v362 = vpop.permute.xlu0 %361
  %363 = vrot.lane.b32.xlu0 %v226, 1
  %v364 = vpop.permute.xlu0 %363
  %365 = vrot.lane.b32.xlu0 %v230, 1
  %v366 = vpop.permute.xlu0 %365
  %367 = vrot.lane.b32.xlu0 %v227, 1
  %v368 = vpop.permute.xlu0 %367
  %369 = vrot.lane.b32.xlu0 %v231, 1
  %v370 = vpop.permute.xlu0 %369
  %vm371 = vcmp.lt.s32.totalorder %v58, 1
  %v372 = vsel %vm371, %v364, %v368
  %v373 = vsel %vm371, %v366, %v370
  %v374 = vsel %vm371, %v360, %v364
  %v375 = vsel %vm371, %v362, %v366
  %v376 = vsel %vm371, %v356, %v360
  %v377 = vsel %vm371, %v358, %v362
  %v378 = vsel %vm371, %v368, %v356
  %v379 = vsel %vm371, %v370, %v358
  %v380 = vmul.f32 %v378, %v126
  %v381 = vmul.f32 %v376, %v127
  %v382 = vmul.f32 %v374, %v128
  %v383 = vmul.f32 %v372, %v129
  %v384 = vmul.f32 %v379, %v126
  %v385 = vmul.f32 %v377, %v127
  %v386 = vmul.f32 %v375, %v128
  %v387 = vmul.f32 %v373, %v129
  %v388 = vpack.c.bf16 %v384, %v380
  %v389 = vpack.c.bf16 %v385, %v381
  %v390 = vpack.c.bf16 %v386, %v382
  %v391 = vpack.c.bf16 %v387, %v383
  %392 = vst [vmem:[#allocation2 + $0x60] sm:$0xff] %v388
  %393 = vst [vmem:[#allocation2 + $0x68] sm:$0xff] %v389
  %394 = vst [vmem:[#allocation2 + $0x70] sm:$0xff] %v390
  %395 = vst [vmem:[#allocation2 + $0x78] sm:$0xff] %v391
  %v396 = vpack.c.bf16 %v228, %v224
  %v397 = vpack.c.bf16 %v229, %v225
  %v398 = vpack.c.bf16 %v230, %v226
  %v399 = vpack.c.bf16 %v231, %v227
  %400 = vst [vmem:[#allocation2 + $0x80] sm:$0xff] %v396
  %401 = vst [vmem:[#allocation2 + $0x88] sm:$0xff] %v397
  %402 = vst [vmem:[#allocation2 + $0x90] sm:$0xff] %v398
  %403 = vst [vmem:[#allocation2 + $0x98] sm:$0xff] %v399
  %404 = vrot.lane.b32.xlu0 %v224, 127
  %v405 = vpop.permute.xlu0 %404
  %406 = vrot.lane.b32.xlu0 %v228, 127
  %v407 = vpop.permute.xlu0 %406
  %408 = vrot.lane.b32.xlu0 %v225, 127
  %v409 = vpop.permute.xlu0 %408
  %410 = vrot.lane.b32.xlu0 %v229, 127
  %v411 = vpop.permute.xlu0 %410
  %412 = vrot.lane.b32.xlu0 %v226, 127
  %v413 = vpop.permute.xlu0 %412
  %414 = vrot.lane.b32.xlu0 %v230, 127
  %v415 = vpop.permute.xlu0 %414
  %416 = vrot.lane.b32.xlu0 %v227, 127
  %v417 = vpop.permute.xlu0 %416
  %418 = vrot.lane.b32.xlu0 %v231, 127
  %v419 = vpop.permute.xlu0 %418
  %vm420 = vcmp.lt.s32.totalorder %v58, 127
  %v421 = vsel %vm420, %v413, %v417
  %v422 = vsel %vm420, %v415, %v419
  %v423 = vsel %vm420, %v409, %v413
  %v424 = vsel %vm420, %v411, %v415
  %v425 = vsel %vm420, %v405, %v409
  %v426 = vsel %vm420, %v407, %v411
  %v427 = vsel %vm420, %v417, %v405
  %v428 = vsel %vm420, %v419, %v407
  %v429 = vmul.f32 %v425, %v134
  %v430 = vmul.f32 %v423, %v135
  %v431 = vmul.f32 %v421, %v136
  %v432 = vmul.f32 %v427, %v137
  %v433 = vmul.f32 %v426, %v134
  %v434 = vmul.f32 %v424, %v135
  %v435 = vmul.f32 %v422, %v136
  %v436 = vmul.f32 %v428, %v137
  %v437 = vpack.c.bf16 %v433, %v429
  %v438 = vpack.c.bf16 %v434, %v430
  %v439 = vpack.c.bf16 %v435, %v431
  %v440 = vpack.c.bf16 %v436, %v432
  %441 = vst [vmem:[#allocation2 + $0xa0] sm:$0xff] %v437
  %442 = vst [vmem:[#allocation2 + $0xa8] sm:$0xff] %v438
  %443 = vst [vmem:[#allocation2 + $0xb0] sm:$0xff] %v439
  %444 = vst [vmem:[#allocation2 + $0xb8] sm:$0xff] %v440
  %445 = vrot.lane.b32.xlu0 %v224, 113
  %v446 = vpop.permute.xlu0 %445
  %447 = vrot.lane.b32.xlu0 %v228, 113
  %v448 = vpop.permute.xlu0 %447
  %449 = vrot.lane.b32.xlu0 %v225, 113
  %v450 = vpop.permute.xlu0 %449
  %451 = vrot.lane.b32.xlu0 %v229, 113
  %v452 = vpop.permute.xlu0 %451
  %453 = vrot.lane.b32.xlu0 %v226, 113
  %v454 = vpop.permute.xlu0 %453
  %455 = vrot.lane.b32.xlu0 %v230, 113
  %v456 = vpop.permute.xlu0 %455
  %457 = vrot.lane.b32.xlu0 %v227, 113
  %v458 = vpop.permute.xlu0 %457
  %459 = vrot.lane.b32.xlu0 %v231, 113
  %v460 = vpop.permute.xlu0 %459
  %vm461 = vcmp.lt.s32.totalorder %v58, 113
  %v462 = vsel %vm461, %v454, %v458
  %v463 = vsel %vm461, %v456, %v460
  %v464 = vsel %vm461, %v450, %v454
  %v465 = vsel %vm461, %v452, %v456
  %v466 = vsel %vm461, %v446, %v450
  %v467 = vsel %vm461, %v448, %v452
  %v468 = vsel %vm461, %v458, %v446
  %v469 = vsel %vm461, %v460, %v448
  %v470 = vmul.f32 %v466, %v146
  %v471 = vmul.f32 %v464, %v147
  %v472 = vmul.f32 %v462, %v148
  %v473 = vmul.f32 %v468, %v149
  %v474 = vmul.f32 %v467, %v146
  %v475 = vmul.f32 %v465, %v147
  %v476 = vmul.f32 %v463, %v148
  %v477 = vmul.f32 %v469, %v149
  %v478 = vpack.c.bf16 %v474, %v470
  %v479 = vpack.c.bf16 %v475, %v471
  %v480 = vpack.c.bf16 %v476, %v472
  %v481 = vpack.c.bf16 %v477, %v473
  %482 = vst [vmem:[#allocation2 + $0xc0] sm:$0xff] %v478
  %483 = vst [vmem:[#allocation2 + $0xc8] sm:$0xff] %v479
  %484 = vst [vmem:[#allocation2 + $0xd0] sm:$0xff] %v480
  %485 = vst [vmem:[#allocation2 + $0xd8] sm:$0xff] %v481
  %486 = vrot.lane.b32.xlu0 %v224, 112
  %v487 = vpop.permute.xlu0 %486
  %488 = vrot.lane.b32.xlu0 %v228, 112
  %v489 = vpop.permute.xlu0 %488
  %490 = vrot.lane.b32.xlu0 %v225, 112
  %v491 = vpop.permute.xlu0 %490
  %492 = vrot.lane.b32.xlu0 %v229, 112
  %v493 = vpop.permute.xlu0 %492
  %494 = vrot.lane.b32.xlu0 %v226, 112
  %v495 = vpop.permute.xlu0 %494
  %496 = vrot.lane.b32.xlu0 %v230, 112
  %v497 = vpop.permute.xlu0 %496
  %498 = vrot.lane.b32.xlu0 %v227, 112
  %v499 = vpop.permute.xlu0 %498
  %500 = vrot.lane.b32.xlu0 %v231, 112
  %v501 = vpop.permute.xlu0 %500
  %vm502 = vcmp.lt.s32.totalorder %v58, 112
  %v503 = vsel %vm502, %v495, %v499
  %v504 = vsel %vm502, %v497, %v501
  %v505 = vsel %vm502, %v491, %v495
  %v506 = vsel %vm502, %v493, %v497
  %v507 = vsel %vm502, %v487, %v491
  %v508 = vsel %vm502, %v489, %v493
  %v509 = vsel %vm502, %v499, %v487
  %v510 = vsel %vm502, %v501, %v489
  %v511 = vmul.f32 %v507, %v154
  %v512 = vmul.f32 %v505, %v155
  %v513 = vmul.f32 %v503, %v156
  %v514 = vmul.f32 %v509, %v157
  %v515 = vmul.f32 %v508, %v154
  %v516 = vmul.f32 %v506, %v155
  %v517 = vmul.f32 %v504, %v156
  %v518 = vmul.f32 %v510, %v157
  %v519 = vpack.c.bf16 %v515, %v511
  %v520 = vpack.c.bf16 %v516, %v512
  %v521 = vpack.c.bf16 %v517, %v513
  %v522 = vpack.c.bf16 %v518, %v514
  %523 = vst [vmem:[#allocation2 + $0xe0] sm:$0xff] %v519
  %524 = vst [vmem:[#allocation2 + $0xe8] sm:$0xff] %v520
  %525 = vst [vmem:[#allocation2 + $0xf0] sm:$0xff] %v521
  %526 = vst [vmem:[#allocation2 + $0xf8] sm:$0xff] %v522
  %527 = vrot.lane.b32.xlu0 %v224, 111
  %v528 = vpop.permute.xlu0 %527
  %529 = vrot.lane.b32.xlu0 %v228, 111
  %v530 = vpop.permute.xlu0 %529
  %531 = vrot.lane.b32.xlu0 %v225, 111
  %v532 = vpop.permute.xlu0 %531
  %533 = vrot.lane.b32.xlu0 %v229, 111
  %v534 = vpop.permute.xlu0 %533
  %535 = vrot.lane.b32.xlu0 %v226, 111
  %v536 = vpop.permute.xlu0 %535
  %537 = vrot.lane.b32.xlu0 %v230, 111
  %v538 = vpop.permute.xlu0 %537
  %539 = vrot.lane.b32.xlu0 %v227, 111
  %v540 = vpop.permute.xlu0 %539
  %541 = vrot.lane.b32.xlu0 %v231, 111
  %v542 = vpop.permute.xlu0 %541
  %vm543 = vcmp.lt.s32.totalorder %v58, 111
  %v544 = vsel %vm543, %v536, %v540
  %v545 = vsel %vm543, %v538, %v542
  %v546 = vsel %vm543, %v532, %v536
  %v547 = vsel %vm543, %v534, %v538
  %v548 = vsel %vm543, %v528, %v532
  %v549 = vsel %vm543, %v530, %v534
  %v550 = vsel %vm543, %v540, %v528
  %v551 = vsel %vm543, %v542, %v530
  %v552 = vmul.f32 %v548, %v166
  %v553 = vmul.f32 %v546, %v167
  %v554 = vmul.f32 %v544, %v168
  %v555 = vmul.f32 %v550, %v169
  %v556 = vmul.f32 %v549, %v166
  %v557 = vmul.f32 %v547, %v167
  %v558 = vmul.f32 %v545, %v168
  %v559 = vmul.f32 %v551, %v169
  %v560 = vpack.c.bf16 %v556, %v552
  %v561 = vpack.c.bf16 %v557, %v553
  %v562 = vpack.c.bf16 %v558, %v554
  %v563 = vpack.c.bf16 %v559, %v555
  %564 = vst [vmem:[#allocation2 + $0x100] sm:$0xff] %v560
  %565 = vst [vmem:[#allocation2 + $0x108] sm:$0xff] %v561
  %566 = vst [vmem:[#allocation2 + $0x110] sm:$0xff] %v562
  %567 = vst [vmem:[#allocation2 + $0x118] sm:$0xff] %v563
  %v568 = vld [vmem:[%s1] sm:$0xff]
  %v569 = vld [vmem:[%s1 + $0x8] sm:$0xff]
  %v570 = vld [vmem:[#allocation2] sm:$0xff]
  %v571 = vld [vmem:[#allocation2 + $0x8] sm:$0xff]
  %v572 = vld [vmem:[#allocation2 + $0x10] sm:$0xff]
  %v573 = vld [vmem:[#allocation2 + $0x18] sm:$0xff]
  %v574 = vld [vmem:[#allocation2 + $0x20] sm:$0xff]
  %v575 = vld [vmem:[#allocation2 + $0x28] sm:$0xff]
  %v576 = vld [vmem:[#allocation2 + $0x30] sm:$0xff]
  %v577 = vld [vmem:[#allocation2 + $0x38] sm:$0xff]
  %v578 = vld [vmem:[#allocation2 + $0x40] sm:$0xff]
  %v579 = vld [vmem:[#allocation2 + $0x48] sm:$0xff]
  %v580 = vld [vmem:[#allocation2 + $0x50] sm:$0xff]
  %v581 = vld [vmem:[#allocation2 + $0x58] sm:$0xff]
  %v582 = vld [vmem:[#allocation2 + $0x60] sm:$0xff]
  %v583 = vld [vmem:[#allocation2 + $0x68] sm:$0xff]
  %v584 = vld [vmem:[#allocation2 + $0x70] sm:$0xff]
  %v585 = vld [vmem:[#allocation2 + $0x78] sm:$0xff]
  %v586 = vld [vmem:[#allocation2 + $0x80] sm:$0xff]
  %v587 = vld [vmem:[#allocation2 + $0x88] sm:$0xff]
  %v588 = vld [vmem:[#allocation2 + $0x90] sm:$0xff]
  %v589 = vld [vmem:[#allocation2 + $0x98] sm:$0xff]
  %v590 = vld [vmem:[#allocation2 + $0xa0] sm:$0xff]
  %v591 = vld [vmem:[#allocation2 + $0xa8] sm:$0xff]
  %v592 = vld [vmem:[#allocation2 + $0xb0] sm:$0xff]
  %v593 = vld [vmem:[#allocation2 + $0xb8] sm:$0xff]
  %v594 = vld [vmem:[#allocation2 + $0xc0] sm:$0xff]
  %v595 = vld [vmem:[#allocation2 + $0xc8] sm:$0xff]
  %v596 = vld [vmem:[#allocation2 + $0xd0] sm:$0xff]
  %v597 = vld [vmem:[#allocation2 + $0xd8] sm:$0xff]
  %v598 = vld [vmem:[#allocation2 + $0xe0] sm:$0xff]
  %v599 = vld [vmem:[#allocation2 + $0xe8] sm:$0xff]
  %v600 = vld [vmem:[#allocation2 + $0xf0] sm:$0xff]
  %v601 = vld [vmem:[#allocation2 + $0xf8] sm:$0xff]
  %v602 = vld [vmem:[#allocation2 + $0x100] sm:$0xff]
  %v603 = vld [vmem:[#allocation2 + $0x108] sm:$0xff]
  %v604 = vld [vmem:[#allocation2 + $0x110] sm:$0xff]
  %v605 = vld [vmem:[#allocation2 + $0x118] sm:$0xff]
  %v606 = vld [vmem:[%s2] sm:$0xff]
  %v607 = vld [vmem:[%s2 + $0x8] sm:$0xff]
  %609 = vset.pattern.permute.xlu0 0
  %610 = vperm.xlu0 %609, %v606
  %v611 = vpop.permute.xlu0 %610
  %614 = vset.pattern.permute.xlu0 0
  %615 = vperm.xlu0 %614, %v607
  %v616 = vpop.permute.xlu0 %615
  %v620 = vunpack.c.l.b16 %v568
  %v621 = vunpack.c.h.b16 %v568
  %v622 = vunpack.c.l.b16 %v569
  %v623 = vunpack.c.h.b16 %v569
  %v624 = vpack.c.b16 %v622, %v620
  %v625 = vpack.c.b16 %v623, %v621
  %vm627 = vcmask 130048
  %v629 = vsel %vm627, %v625, 0
  %631 = vmatprep.subr.bf16.mxu0 %v571
  %632 = vmatpush1.bf16.msra.mxu0 %v570
  %633 = vmatprep.subr.bf16.mxu0 %v575
  %634 = vmatpush1.bf16.msra.mxu0 %v574
  %635 = vmatprep.subr.bf16.mxu0 %v579
  %636 = vmatpush1.bf16.msra.mxu0 %v578
  %637 = vmatprep.subr.bf16.mxu0 %v583
  %638 = vmatpush1.bf16.msra.mxu0 %v582
  %639 = vmatprep.subr.bf16.mxu0 %v587
  %640 = vmatpush1.bf16.msra.mxu0 %v586
  %641 = vmatprep.subr.bf16.mxu0 %v591
  %642 = vmatpush1.bf16.msra.mxu0 %v590
  %643 = vmatprep.subr.bf16.mxu0 %v595
  %644 = vmatpush1.bf16.msra.mxu0 %v594
  %645 = vmatprep.subr.bf16.mxu0 %v599
  %646 = vmatpush1.bf16.msra.mxu0 %v598
  %647 = vmatprep.subr.bf16.mxu0 %v603
  %648 = vmatpush1.bf16.msra.mxu0 %v602
  %649 = vmatprep.subr.bf16.mxu0 0
  %650 = vmatpush1.bf16.msra.mxu0 0
  %651 = vmatprep.subr.bf16.mxu0 0
  %652 = vmatpush1.bf16.msra.mxu0 0
  %653 = vmatprep.subr.bf16.mxu0 0
  %654 = vmatpush1.bf16.msra.mxu0 0
  %655 = vmatprep.subr.bf16.mxu0 0
  %656 = vmatpush1.bf16.msra.mxu0 0
  %657 = vmatprep.subr.bf16.mxu0 0
  %658 = vmatpush1.bf16.msra.mxu0 0
  %659 = vmatprep.subr.bf16.mxu0 0
  %660 = vmatpush1.bf16.msra.mxu0 0
  %661 = vmatprep.subr.bf16.mxu0 0
  %662 = vmatpush1.bf16.msra.mxu0 0
  %663 = vmatprep.mubr.bf16.mxu0 %v629
  %664 = vmatmul.mubr.bf16.gmra.mrb[0].mxu0 %v624
  %v665 = vpop.f32.mrb[0].mxu0
  %v666 = vadd.f32 %v611, %v665
  %v667 = vpop.f32.mrb[0].mxu0
  %v668 = vadd.f32 %v611, %v667
  %v669 = vpop.f32.mrb[0].mxu0
  %v670 = vadd.f32 %v616, %v669
  %v671 = vpop.f32.mrb[0].mxu0
  %v672 = vadd.f32 %v616, %v671
  %673 = vdwg.mxu0
  %674 = vmatprep.subr.bf16.mxu0 %v573
  %675 = vmatpush1.bf16.msra.mxu0 %v572
  %676 = vmatprep.subr.bf16.mxu0 %v577
  %677 = vmatpush1.bf16.msra.mxu0 %v576
  %678 = vmatprep.subr.bf16.mxu0 %v581
  %679 = vmatpush1.bf16.msra.mxu0 %v580
  %680 = vmatprep.subr.bf16.mxu0 %v585
  %681 = vmatpush1.bf16.msra.mxu0 %v584
  %682 = vmatprep.subr.bf16.mxu0 %v589
  %683 = vmatpush1.bf16.msra.mxu0 %v588
  %684 = vmatprep.subr.bf16.mxu0 %v593
  %685 = vmatpush1.bf16.msra.mxu0 %v592
  %686 = vmatprep.subr.bf16.mxu0 %v597
  %687 = vmatpush1.bf16.msra.mxu0 %v596
  %688 = vmatprep.subr.bf16.mxu0 %v601
  %689 = vmatpush1.bf16.msra.mxu0 %v600
  %690 = vmatprep.subr.bf16.mxu0 %v605
  %691 = vmatpush1.bf16.msra.mxu0 %v604
  %692 = vmatprep.subr.bf16.mxu0 0
  %693 = vmatpush1.bf16.msra.mxu0 0
  %694 = vmatprep.subr.bf16.mxu0 0
  %695 = vmatpush1.bf16.msra.mxu0 0
  %696 = vmatprep.subr.bf16.mxu0 0
  %697 = vmatpush1.bf16.msra.mxu0 0
  %698 = vmatprep.subr.bf16.mxu0 0
  %699 = vmatpush1.bf16.msra.mxu0 0
  %700 = vmatprep.subr.bf16.mxu0 0
  %701 = vmatpush1.bf16.msra.mxu0 0
  %702 = vmatprep.subr.bf16.mxu0 0
  %703 = vmatpush1.bf16.msra.mxu0 0
  %704 = vmatprep.subr.bf16.mxu0 0
  %705 = vmatpush1.bf16.msra.mxu0 0
  %706 = vmatprep.mubr.bf16.mxu0 %v629
  %707 = vmatmul.mubr.bf16.gmra.mrb[0].mxu0 %v624
  %v708 = vpop.f32.mrb[0].mxu0
  %v709 = vadd.f32 %v611, %v708
  %v710 = vpop.f32.mrb[0].mxu0
  %v711 = vadd.f32 %v611, %v710
  %v712 = vpop.f32.mrb[0].mxu0
  %v713 = vadd.f32 %v616, %v712
  %v714 = vpop.f32.mrb[0].mxu0
  %v715 = vadd.f32 %v616, %v714
  %716 = vdwg.mxu0
  %v717 = vmax.f32 %v666, 0.0
  %v718 = vmax.f32 %v668, 0.0
  %v719 = vmax.f32 %v709, 0.0
  %v720 = vmax.f32 %v711, 0.0
  %v721 = vmax.f32 %v670, 0.0
  %v722 = vmax.f32 %v672, 0.0
  %v723 = vmax.f32 %v713, 0.0
  %v724 = vmax.f32 %v715, 0.0
  %725 = vrot.lane.b32.xlu0 %v717, 127
  %v726 = vpop.permute.xlu0 %725
  %727 = vrot.lane.b32.xlu0 %v721, 127
  %v728 = vpop.permute.xlu0 %727
  %729 = vrot.lane.b32.xlu0 %v718, 127
  %v730 = vpop.permute.xlu0 %729
  %731 = vrot.lane.b32.xlu0 %v722, 127
  %v732 = vpop.permute.xlu0 %731
  %733 = vrot.lane.b32.xlu0 %v719, 127
  %v734 = vpop.permute.xlu0 %733
  %735 = vrot.lane.b32.xlu0 %v723, 127
  %v736 = vpop.permute.xlu0 %735
  %737 = vrot.lane.b32.xlu0 %v720, 127
  %v738 = vpop.permute.xlu0 %737
  %739 = vrot.lane.b32.xlu0 %v724, 127
  %v740 = vpop.permute.xlu0 %739
  %v741 = vsel %vm420, %v734, %v738
  %v742 = vsel %vm420, %v736, %v740
  %v743 = vsel %vm420, %v730, %v734
  %v744 = vsel %vm420, %v732, %v736
  %v745 = vsel %vm420, %v726, %v730
  %v746 = vsel %vm420, %v728, %v732
  %v747 = vsel %vm420, %v738, %v726
  %v748 = vsel %vm420, %v740, %v728
  %v749 = vmax.f32 %v717, %v745
  %v750 = vmax.f32 %v718, %v743
  %v751 = vmax.f32 %v719, %v741
  %v752 = vmax.f32 %v720, %v747
  %v753 = vmax.f32 %v721, %v746
  %v754 = vmax.f32 %v722, %v744
  %v755 = vmax.f32 %v723, %v742
  %v756 = vmax.f32 %v724, %v748
  %757 = vrot.lane.b32.xlu0 %v749, 112
  %v758 = vpop.permute.xlu0 %757
  %759 = vrot.lane.b32.xlu0 %v753, 112
  %v760 = vpop.permute.xlu0 %759
  %761 = vrot.lane.b32.xlu0 %v750, 112
  %v762 = vpop.permute.xlu0 %761
  %763 = vrot.lane.b32.xlu0 %v754, 112
  %v764 = vpop.permute.xlu0 %763
  %765 = vrot.lane.b32.xlu0 %v751, 112
  %v766 = vpop.permute.xlu0 %765
  %767 = vrot.lane.b32.xlu0 %v755, 112
  %v768 = vpop.permute.xlu0 %767
  %769 = vrot.lane.b32.xlu0 %v752, 112
  %v770 = vpop.permute.xlu0 %769
  %771 = vrot.lane.b32.xlu0 %v756, 112
  %v772 = vpop.permute.xlu0 %771
  %v773 = vsel %vm502, %v766, %v770
  %v774 = vsel %vm502, %v768, %v772
  %v775 = vsel %vm502, %v762, %v766
  %v776 = vsel %vm502, %v764, %v768
  %v777 = vsel %vm502, %v758, %v762
  %v778 = vsel %vm502, %v760, %v764
  %v779 = vsel %vm502, %v770, %v758
  %v780 = vsel %vm502, %v772, %v760
  %v781 = vmax.f32 %v749, %v777
  %v782 = vmax.f32 %v750, %v775
  %v783 = vmax.f32 %v751, %v773
  %v784 = vmax.f32 %v752, %v779
  %v785 = vmax.f32 %v753, %v778
  %v786 = vmax.f32 %v754, %v776
  %v787 = vmax.f32 %v755, %v774
  %v788 = vmax.f32 %v756, %v780
  %v789 = vpack.c.bf16 %v785, %v781
  %v790 = vpack.c.bf16 %v786, %v782
  %v791 = vpack.c.bf16 %v787, %v783
  %v792 = vpack.c.bf16 %v788, %v784
  %v793 = vld [vmem:[%s13] sm:$0xf]
  %v794 = vld [vmem:[%s13 + $0x4] sm:$0xf]
  %v795 = vld [vmem:[%s13 + $0x8] sm:$0xf]
  %v796 = vld [vmem:[%s13 + $0xc] sm:$0xf]
  %v797 = vld [vmem:[%s13 + $0x10] sm:$0xf]
  %v798 = vld [vmem:[%s13 + $0x14] sm:$0xf]
  %v799 = vld [vmem:[%s13 + $0x18] sm:$0xf]
  %v800 = vld [vmem:[%s13 + $0x1c] sm:$0xf]
  %v801 = vld [vmem:[%s13 + $0x20] sm:$0xf]
  %v802 = vld [vmem:[%s13 + $0x24] sm:$0xf]
  %v803 = vld [vmem:[%s13 + $0x28] sm:$0xf]
  %v804 = vld [vmem:[%s13 + $0x2c] sm:$0xf]
  %v805 = vld [vmem:[%s13 + $0x30] sm:$0xf]
  %v806 = vld [vmem:[%s13 + $0x34] sm:$0xf]
  %v807 = vld [vmem:[%s13 + $0x38] sm:$0xf]
  %v808 = vld [vmem:[%s13 + $0x3c] sm:$0xf]
  %v809 = vld [vmem:[%s13 + $0x40] sm:$0xf]
  %v810 = vld [vmem:[%s13 + $0x44] sm:$0xf]
  %v811 = vld [vmem:[%s13 + $0x48] sm:$0xf]
  %v812 = vld [vmem:[%s13 + $0x4c] sm:$0xf]
  %v813 = vld [vmem:[%s13 + $0x50] sm:$0xf]
  %v814 = vld [vmem:[%s13 + $0x54] sm:$0xf]
  %v815 = vld [vmem:[%s13 + $0x58] sm:$0xf]
  %v816 = vld [vmem:[%s13 + $0x5c] sm:$0xf]
  %v817 = vld [vmem:[%s13 + $0x60] sm:$0xf]
  %v818 = vld [vmem:[%s13 + $0x64] sm:$0xf]
  %v819 = vld [vmem:[%s13 + $0x68] sm:$0xf]
  %v820 = vld [vmem:[%s13 + $0x6c] sm:$0xf]
  %v821 = vld [vmem:[%s13 + $0x70] sm:$0xf]
  %v822 = vld [vmem:[%s13 + $0x74] sm:$0xf]
  %v823 = vld [vmem:[%s13 + $0x78] sm:$0xf]
  %v824 = vld [vmem:[%s13 + $0x7c] sm:$0xf]
  %v825 = vld [vmem:[%s13 + $0x80] sm:$0xf]
  %v826 = vld [vmem:[%s13 + $0x84] sm:$0xf]
  %v827 = vld [vmem:[%s13 + $0x88] sm:$0xf]
  %v828 = vld [vmem:[%s13 + $0x8c] sm:$0xf]
  %v829 = vld [vmem:[%s13 + $0x90] sm:$0xf]
  %v830 = vld [vmem:[%s13 + $0x94] sm:$0xf]
  %v831 = vld [vmem:[%s13 + $0x98] sm:$0xf]
  %v832 = vld [vmem:[%s13 + $0x9c] sm:$0xf]
  %v833 = vld [vmem:[%s13 + $0xa0] sm:$0xf]
  %v834 = vld [vmem:[%s13 + $0xa4] sm:$0xf]
  %v835 = vld [vmem:[%s13 + $0xa8] sm:$0xf]
  %v836 = vld [vmem:[%s13 + $0xac] sm:$0xf]
  %v837 = vld [vmem:[%s13 + $0xb0] sm:$0xf]
  %v838 = vld [vmem:[%s13 + $0xb4] sm:$0xf]
  %v839 = vld [vmem:[%s13 + $0xb8] sm:$0xf]
  %v840 = vld [vmem:[%s13 + $0xbc] sm:$0xf]
  %v841 = vld [vmem:[%s13 + $0xc0] sm:$0xf]
  %v842 = vld [vmem:[%s13 + $0xc4] sm:$0xf]
  %v843 = vld [vmem:[%s13 + $0xc8] sm:$0xf]
  %v844 = vld [vmem:[%s13 + $0xcc] sm:$0xf]
  %v845 = vld [vmem:[%s13 + $0xd0] sm:$0xf]
  %v846 = vld [vmem:[%s13 + $0xd4] sm:$0xf]
  %v847 = vld [vmem:[%s13 + $0xd8] sm:$0xf]
  %v848 = vld [vmem:[%s13 + $0xdc] sm:$0xf]
  %v849 = vld [vmem:[%s13 + $0xe0] sm:$0xf]
  %v850 = vld [vmem:[%s13 + $0xe4] sm:$0xf]
  %v851 = vld [vmem:[%s13 + $0xe8] sm:$0xf]
  %v852 = vld [vmem:[%s13 + $0xec] sm:$0xf]
  %v853 = vld [vmem:[%s13 + $0xf0] sm:$0xf]
  %v854 = vld [vmem:[%s13 + $0xf4] sm:$0xf]
  %v855 = vld [vmem:[%s13 + $0xf8] sm:$0xf]
  %v856 = vld [vmem:[%s13 + $0xfc] sm:$0xf]
  %v921 = vunpack.c.l.b16 %v793
  %v922 = vunpack.c.l.b16 %v794
  %v923 = vunpack.c.l.b16 %v795
  %v924 = vunpack.c.l.b16 %v796
  %v925 = vunpack.c.l.b16 %v797
  %v926 = vunpack.c.l.b16 %v798
  %v927 = vunpack.c.l.b16 %v799
  %v928 = vunpack.c.l.b16 %v800
  %v929 = vunpack.c.l.b16 %v801
  %v930 = vunpack.c.l.b16 %v802
  %v931 = vunpack.c.l.b16 %v803
  %v932 = vunpack.c.l.b16 %v804
  %v933 = vunpack.c.l.b16 %v805
  %v934 = vunpack.c.l.b16 %v806
  %v935 = vunpack.c.l.b16 %v807
  %v936 = vunpack.c.l.b16 %v808
  %v937 = vunpack.c.l.b16 %v809
  %v938 = vunpack.c.l.b16 %v810
  %v939 = vunpack.c.l.b16 %v811
  %v940 = vunpack.c.l.b16 %v812
  %v941 = vunpack.c.l.b16 %v813
  %v942 = vunpack.c.l.b16 %v814
  %v943 = vunpack.c.l.b16 %v815
  %v944 = vunpack.c.l.b16 %v816
  %v945 = vunpack.c.l.b16 %v817
  %v946 = vunpack.c.l.b16 %v818
  %v947 = vunpack.c.l.b16 %v819
  %v948 = vunpack.c.l.b16 %v820
  %v949 = vunpack.c.l.b16 %v821
  %v950 = vunpack.c.l.b16 %v822
  %v951 = vunpack.c.l.b16 %v823
  %v952 = vunpack.c.l.b16 %v824
  %v953 = vunpack.c.l.b16 %v825
  %v954 = vunpack.c.l.b16 %v826
  %v955 = vunpack.c.l.b16 %v827
  %v956 = vunpack.c.l.b16 %v828
  %v957 = vunpack.c.l.b16 %v829
  %v958 = vunpack.c.l.b16 %v830
  %v959 = vunpack.c.l.b16 %v831
  %v960 = vunpack.c.l.b16 %v832
  %v961 = vunpack.c.l.b16 %v833
  %v962 = vunpack.c.l.b16 %v834
  %v963 = vunpack.c.l.b16 %v835
  %v964 = vunpack.c.l.b16 %v836
  %v965 = vunpack.c.l.b16 %v837
  %v966 = vunpack.c.l.b16 %v838
  %v967 = vunpack.c.l.b16 %v839
  %v968 = vunpack.c.l.b16 %v840
  %v969 = vunpack.c.l.b16 %v841
  %v970 = vunpack.c.l.b16 %v842
  %v971 = vunpack.c.l.b16 %v843
  %v972 = vunpack.c.l.b16 %v844
  %v973 = vunpack.c.l.b16 %v845
  %v974 = vunpack.c.l.b16 %v846
  %v975 = vunpack.c.l.b16 %v847
  %v976 = vunpack.c.l.b16 %v848
  %v977 = vunpack.c.l.b16 %v849
  %v978 = vunpack.c.l.b16 %v850
  %v979 = vunpack.c.l.b16 %v851
  %v980 = vunpack.c.l.b16 %v852
  %v981 = vunpack.c.l.b16 %v853
  %v982 = vunpack.c.l.b16 %v854
  %v983 = vunpack.c.l.b16 %v855
  %v984 = vunpack.c.l.b16 %v856
  %v985 = vpack.c.b16 %v922, %v921
  %v986 = vpack.c.b16 %v924, %v923
  %v987 = vpack.c.b16 %v926, %v925
  %v988 = vpack.c.b16 %v928, %v927
  %v989 = vpack.c.b16 %v930, %v929
  %v990 = vpack.c.b16 %v932, %v931
  %v991 = vpack.c.b16 %v934, %v933
  %v992 = vpack.c.b16 %v936, %v935
  %v993 = vpack.c.b16 %v938, %v937
  %v994 = vpack.c.b16 %v940, %v939
  %v995 = vpack.c.b16 %v942, %v941
  %v996 = vpack.c.b16 %v944, %v943
  %v997 = vpack.c.b16 %v946, %v945
  %v998 = vpack.c.b16 %v948, %v947
  %v999 = vpack.c.b16 %v950, %v949
  %v1000 = vpack.c.b16 %v952, %v951
  %v1001 = vpack.c.b16 %v954, %v953
  %v1002 = vpack.c.b16 %v956, %v955
  %v1003 = vpack.c.b16 %v958, %v957
  %v1004 = vpack.c.b16 %v960, %v959
  %v1005 = vpack.c.b16 %v962, %v961
  %v1006 = vpack.c.b16 %v964, %v963
  %v1007 = vpack.c.b16 %v966, %v965
  %v1008 = vpack.c.b16 %v968, %v967
  %v1009 = vpack.c.b16 %v970, %v969
  %v1010 = vpack.c.b16 %v972, %v971
  %v1011 = vpack.c.b16 %v974, %v973
  %v1012 = vpack.c.b16 %v976, %v975
  %v1013 = vpack.c.b16 %v978, %v977
  %v1014 = vpack.c.b16 %v980, %v979
  %v1015 = vpack.c.b16 %v982, %v981
  %v1016 = vpack.c.b16 %v984, %v983
  %1049 = vmatprep.subr.bf16.mxu0 0
  %1050 = vmatpush1.bf16.msra.mxu0 %v985
  %1051 = vmatprep.subr.bf16.mxu0 0
  %1052 = vmatpush1.bf16.msra.mxu0 %v986
  %1053 = vmatprep.subr.bf16.mxu0 0
  %1054 = vmatpush1.bf16.msra.mxu0 %v987
  %1055 = vmatprep.subr.bf16.mxu0 0
  %1056 = vmatpush1.bf16.msra.mxu0 %v988
  %1057 = vmatprep.subr.bf16.mxu0 0
  %1058 = vmatpush1.bf16.msra.mxu0 %v989
  %1059 = vmatprep.subr.bf16.mxu0 0
  %1060 = vmatpush1.bf16.msra.mxu0 %v990
  %1061 = vmatprep.subr.bf16.mxu0 0
  %1062 = vmatpush1.bf16.msra.mxu0 %v991
  %1063 = vmatprep.subr.bf16.mxu0 0
  %1064 = vmatpush1.bf16.msra.mxu0 %v992
  %1065 = vmatprep.subr.bf16.mxu0 0
  %1066 = vmatpush1.bf16.msra.mxu0 %v993
  %1067 = vmatprep.subr.bf16.mxu0 0
  %1068 = vmatpush1.bf16.msra.mxu0 %v994
  %1069 = vmatprep.subr.bf16.mxu0 0
  %1070 = vmatpush1.bf16.msra.mxu0 %v995
  %1071 = vmatprep.subr.bf16.mxu0 0
  %1072 = vmatpush1.bf16.msra.mxu0 %v996
  %1073 = vmatprep.subr.bf16.mxu0 0
  %1074 = vmatpush1.bf16.msra.mxu0 %v997
  %1075 = vmatprep.subr.bf16.mxu0 0
  %1076 = vmatpush1.bf16.msra.mxu0 %v998
  %1077 = vmatprep.subr.bf16.mxu0 0
  %1078 = vmatpush1.bf16.msra.mxu0 %v999
  %1079 = vmatprep.subr.bf16.mxu0 0
  %1080 = vmatpush1.bf16.msra.mxu0 %v1000
  %1081 = vmatprep.mubr.bf16.mxu0 %v790
  %1082 = vmatmul.mubr.bf16.gmra.mrb[0].mxu0 %v789
  %v1083 = vpop.f32.mrb[0].mxu0
  %v1084 = vadd.f32 0.0, %v1083
  %v1085 = vpop.f32.mrb[0].mxu0
  %v1086 = vpop.f32.mrb[0].mxu0
  %v1087 = vadd.f32 0.0, %v1086
  %v1088 = vpop.f32.mrb[0].mxu0
  %1089 = vdwg.mxu0
  %1090 = vmatprep.subr.bf16.mxu0 0
  %1091 = vmatpush1.bf16.msra.mxu0 %v1001
  %1092 = vmatprep.subr.bf16.mxu0 0
  %1093 = vmatpush1.bf16.msra.mxu0 %v1002
  %1094 = vmatprep.subr.bf16.mxu0 0
  %1095 = vmatpush1.bf16.msra.mxu0 %v1003
  %1096 = vmatprep.subr.bf16.mxu0 0
  %1097 = vmatpush1.bf16.msra.mxu0 %v1004
  %1098 = vmatprep.subr.bf16.mxu0 0
  %1099 = vmatpush1.bf16.msra.mxu0 %v1005
  %1100 = vmatprep.subr.bf16.mxu0 0
  %1101 = vmatpush1.bf16.msra.mxu0 %v1006
  %1102 = vmatprep.subr.bf16.mxu0 0
  %1103 = vmatpush1.bf16.msra.mxu0 %v1007
  %1104 = vmatprep.subr.bf16.mxu0 0
  %1105 = vmatpush1.bf16.msra.mxu0 %v1008
  %1106 = vmatprep.subr.bf16.mxu0 0
  %1107 = vmatpush1.bf16.msra.mxu0 %v1009
  %1108 = vmatprep.subr.bf16.mxu0 0
  %1109 = vmatpush1.bf16.msra.mxu0 %v1010
  %1110 = vmatprep.subr.bf16.mxu0 0
  %1111 = vmatpush1.bf16.msra.mxu0 %v1011
  %1112 = vmatprep.subr.bf16.mxu0 0
  %1113 = vmatpush1.bf16.msra.mxu0 %v1012
  %1114 = vmatprep.subr.bf16.mxu0 0
  %1115 = vmatpush1.bf16.msra.mxu0 %v1013
  %1116 = vmatprep.subr.bf16.mxu0 0
  %1117 = vmatpush1.bf16.msra.mxu0 %v1014
  %1118 = vmatprep.subr.bf16.mxu0 0
  %1119 = vmatpush1.bf16.msra.mxu0 %v1015
  %1120 = vmatprep.subr.bf16.mxu0 0
  %1121 = vmatpush1.bf16.msra.mxu0 %v1016
  %1122 = vmatprep.mubr.bf16.mxu0 %v792
  %1123 = vmatmul.mubr.bf16.gmra.mrb[0].mxu0 %v791
  %v1124 = vpop.f32.mrb[0].mxu0
  %v1125 = vadd.f32 %v1084, %v1124
  %v1126 = vpop.f32.mrb[0].mxu0
  %v1127 = vpop.f32.mrb[0].mxu0
  %v1128 = vadd.f32 %v1087, %v1127
  %v1129 = vpop.f32.mrb[0].mxu0
  %1130 = vdwg.mxu0
  %1131 = vrot.lane.b32.xlu0 %v1125, 9
  %v1132 = vpop.permute.xlu0 %1131
  %1133 = vrot.lane.b32.xlu0 %v1128, 9
  %v1134 = vpop.permute.xlu0 %1133
  %v1135 = vmul.f32 %v1132, %v179
  %v1136 = vmul.f32 %v1134, %v179
  %v1137 = vpack.c.bf16 %v1136, %v1135
  %1138 = vst [vmem:[#allocation2] sm:$0xff] %v1137
  %1139 = vrot.lane.b32.xlu0 %v1125, 8
  %v1140 = vpop.permute.xlu0 %1139
  %1141 = vrot.lane.b32.xlu0 %v1128, 8
  %v1142 = vpop.permute.xlu0 %1141
  %v1143 = vmul.f32 %v1140, %v181
  %v1144 = vmul.f32 %v1142, %v181
  %v1145 = vpack.c.bf16 %v1144, %v1143
  %1146 = vst [vmem:[#allocation2 + $0x20] sm:$0xff] %v1145
  %1147 = vrot.lane.b32.xlu0 %v1125, 7
  %v1148 = vpop.permute.xlu0 %1147
  %1149 = vrot.lane.b32.xlu0 %v1128, 7
  %v1150 = vpop.permute.xlu0 %1149
  %v1151 = vmul.f32 %v1148, %v184
  %v1152 = vmul.f32 %v1150, %v184
  %v1153 = vpack.c.bf16 %v1152, %v1151
  %1154 = vst [vmem:[#allocation2 + $0x40] sm:$0xff] %v1153
  %1155 = vrot.lane.b32.xlu0 %v1125, 1
  %v1156 = vpop.permute.xlu0 %1155
  %1157 = vrot.lane.b32.xlu0 %v1128, 1
  %v1158 = vpop.permute.xlu0 %1157
  %v1159 = vmul.f32 %v1156, %v186
  %v1160 = vmul.f32 %v1158, %v186
  %v1161 = vpack.c.bf16 %v1160, %v1159
  %1162 = vst [vmem:[#allocation2 + $0x60] sm:$0xff] %v1161
  %v1163 = vpack.c.bf16 %v1128, %v1125
  %1164 = vst [vmem:[#allocation2 + $0x80] sm:$0xff] %v1163
  %1165 = vrot.lane.b32.xlu0 %v1125, 127
  %v1166 = vpop.permute.xlu0 %1165
  %1167 = vrot.lane.b32.xlu0 %v1128, 127
  %v1168 = vpop.permute.xlu0 %1167
  %v1169 = vmul.f32 %v1166, %v188
  %v1170 = vmul.f32 %v1168, %v188
  %v1171 = vpack.c.bf16 %v1170, %v1169
  %1172 = vst [vmem:[#allocation2 + $0xa0] sm:$0xff] %v1171
  %1173 = vrot.lane.b32.xlu0 %v1125, 121
  %v1174 = vpop.permute.xlu0 %1173
  %1175 = vrot.lane.b32.xlu0 %v1128, 121
  %v1176 = vpop.permute.xlu0 %1175
  %v1177 = vmul.f32 %v1174, %v191
  %v1178 = vmul.f32 %v1176, %v191
  %v1179 = vpack.c.bf16 %v1178, %v1177
  %1180 = vst [vmem:[#allocation2 + $0xc0] sm:$0xff] %v1179
  %1181 = vrot.lane.b32.xlu0 %v1125, 120
  %v1182 = vpop.permute.xlu0 %1181
  %1183 = vrot.lane.b32.xlu0 %v1128, 120
  %v1184 = vpop.permute.xlu0 %1183
  %v1185 = vmul.f32 %v1182, %v193
  %v1186 = vmul.f32 %v1184, %v193
  %v1187 = vpack.c.bf16 %v1186, %v1185
  %1188 = vst [vmem:[#allocation2 + $0xe0] sm:$0xff] %v1187
  %1189 = vrot.lane.b32.xlu0 %v1125, 119
  %v1190 = vpop.permute.xlu0 %1189
  %1191 = vrot.lane.b32.xlu0 %v1128, 119
  %v1192 = vpop.permute.xlu0 %1191
  %v1193 = vmul.f32 %v1190, %v196
  %v1194 = vmul.f32 %v1192, %v196
  %v1195 = vpack.c.bf16 %v1194, %v1193
  %1196 = vst [vmem:[#allocation2 + $0x100] sm:$0xff] %v1195
  %v1197 = vld [vmem:[%s3] sm:$0xff]
  %v1198 = vld [vmem:[%s3 + $0x8] sm:$0xff]
  %v1199 = vld [vmem:[%s3 + $0x10] sm:$0xff]
  %v1200 = vld [vmem:[%s3 + $0x18] sm:$0xff]
  %v1201 = vld [vmem:[#allocation2] sm:$0xff]
  %v1202 = vld [vmem:[#allocation2 + $0x20] sm:$0xff]
  %v1203 = vld [vmem:[#allocation2 + $0x40] sm:$0xff]
  %v1204 = vld [vmem:[#allocation2 + $0x60] sm:$0xff]
  %v1205 = vld [vmem:[#allocation2 + $0x80] sm:$0xff]
  %v1206 = vld [vmem:[#allocation2 + $0xa0] sm:$0xff]
  %v1207 = vld [vmem:[#allocation2 + $0xc0] sm:$0xff]
  %v1208 = vld [vmem:[#allocation2 + $0xe0] sm:$0xff]
  %v1209 = vld [vmem:[#allocation2 + $0x100] sm:$0xff]
  %v1210 = vld [vmem:[%s4] sm:$0xff]
  %v1211 = vld [vmem:[%s4 + $0x8] sm:$0xff]
  %v1212 = vld [vmem:[%s4 + $0x10] sm:$0xff]
  %v1213 = vld [vmem:[%s4 + $0x18] sm:$0xff]
  %1215 = vset.pattern.permute.xlu0 0
  %1216 = vperm.xlu0 %1215, %v1210
  %v1217 = vpop.permute.xlu0 %1216
  %1220 = vset.pattern.permute.xlu0 0
  %1221 = vperm.xlu0 %1220, %v1211
  %v1222 = vpop.permute.xlu0 %1221
  %1225 = vset.pattern.permute.xlu0 0
  %1226 = vperm.xlu0 %1225, %v1212
  %v1227 = vpop.permute.xlu0 %1226
  %1230 = vset.pattern.permute.xlu0 0
  %1231 = vperm.xlu0 %1230, %v1213
  %v1232 = vpop.permute.xlu0 %1231
  %v1238 = vunpack.c.l.b16 %v1197
  %v1239 = vunpack.c.h.b16 %v1197
  %v1240 = vunpack.c.l.b16 %v1198
  %v1241 = vunpack.c.h.b16 %v1198
  %v1242 = vunpack.c.l.b16 %v1199
  %v1243 = vunpack.c.h.b16 %v1199
  %v1244 = vunpack.c.l.b16 %v1200
  %v1245 = vunpack.c.h.b16 %v1200
  %v1246 = vpack.c.b16 %v1240, %v1238
  %v1247 = vpack.c.b16 %v1241, %v1239
  %v1248 = vpack.c.b16 %v1244, %v1242
  %v1249 = vpack.c.b16 %v1245, %v1243
  %v1253 = vsel %vm627, %v1247, 0
  %v1256 = vsel %vm627, %v1249, 0
  %1258 = vmatprep.subr.bf16.mxu0 0
  %1259 = vmatpush1.bf16.msra.mxu0 %v1201
  %1260 = vmatprep.subr.bf16.mxu0 0
  %1261 = vmatpush1.bf16.msra.mxu0 %v1202
  %1262 = vmatprep.subr.bf16.mxu0 0
  %1263 = vmatpush1.bf16.msra.mxu0 %v1203
  %1264 = vmatprep.subr.bf16.mxu0 0
  %1265 = vmatpush1.bf16.msra.mxu0 %v1204
  %1266 = vmatprep.subr.bf16.mxu0 0
  %1267 = vmatpush1.bf16.msra.mxu0 %v1205
  %1268 = vmatprep.subr.bf16.mxu0 0
  %1269 = vmatpush1.bf16.msra.mxu0 %v1206
  %1270 = vmatprep.subr.bf16.mxu0 0
  %1271 = vmatpush1.bf16.msra.mxu0 %v1207
  %1272 = vmatprep.subr.bf16.mxu0 0
  %1273 = vmatpush1.bf16.msra.mxu0 %v1208
  %1274 = vmatprep.subr.bf16.mxu0 0
  %1275 = vmatpush1.bf16.msra.mxu0 %v1209
  %1276 = vmatprep.subr.bf16.mxu0 0
  %1277 = vmatpush1.bf16.msra.mxu0 0
  %1278 = vmatprep.subr.bf16.mxu0 0
  %1279 = vmatpush1.bf16.msra.mxu0 0
  %1280 = vmatprep.subr.bf16.mxu0 0
  %1281 = vmatpush1.bf16.msra.mxu0 0
  %1282 = vmatprep.subr.bf16.mxu0 0
  %1283 = vmatpush1.bf16.msra.mxu0 0
  %1284 = vmatprep.subr.bf16.mxu0 0
  %1285 = vmatpush1.bf16.msra.mxu0 0
  %1286 = vmatprep.subr.bf16.mxu0 0
  %1287 = vmatpush1.bf16.msra.mxu0 0
  %1288 = vmatprep.subr.bf16.mxu0 0
  %1289 = vmatpush1.bf16.msra.mxu0 0
  %1290 = vmatprep.mubr.bf16.mxu0 %v1253
  %1291 = vmatmul.mubr.bf16.gmra.mrb[0].mxu0 %v1246
  %v1292 = vpop.f32.mrb[0].mxu0
  %v1293 = vadd.f32 %v1217, %v1292
  %v1294 = vpop.f32.mrb[0].mxu0
  %v1295 = vpop.f32.mrb[0].mxu0
  %v1296 = vadd.f32 %v1222, %v1295
  %v1297 = vpop.f32.mrb[0].mxu0
  %1298 = vmatprep.mubr.bf16.mxu0 %v1256
  %1299 = vmatmul.mubr.bf16.gmra.mrb[0].mxu0 %v1248
  %v1300 = vpop.f32.mrb[0].mxu0
  %v1301 = vadd.f32 %v1227, %v1300
  %v1302 = vpop.f32.mrb[0].mxu0
  %v1303 = vpop.f32.mrb[0].mxu0
  %v1304 = vadd.f32 %v1232, %v1303
  %v1305 = vpop.f32.mrb[0].mxu0
  %1306 = vdwg.mxu0
  %v1307 = vmax.f32 %v1293, 0.0
  %v1308 = vmax.f32 %v1296, 0.0
  %v1309 = vmax.f32 %v1301, 0.0
  %v1310 = vmax.f32 %v1304, 0.0
  %1311 = vrot.lane.b32.xlu0 %v1307, 127
  %v1312 = vpop.permute.xlu0 %1311
  %1313 = vrot.lane.b32.xlu0 %v1308, 127
  %v1314 = vpop.permute.xlu0 %1313
  %1315 = vrot.lane.b32.xlu0 %v1309, 127
  %v1316 = vpop.permute.xlu0 %1315
  %1317 = vrot.lane.b32.xlu0 %v1310, 127
  %v1318 = vpop.permute.xlu0 %1317
  %v1319 = vmax.f32 %v1307, %v1312
  %v1320 = vmax.f32 %v1308, %v1314
  %v1321 = vmax.f32 %v1309, %v1316
  %v1322 = vmax.f32 %v1310, %v1318
  %1323 = vrot.lane.b32.xlu0 %v1319, 120
  %v1324 = vpop.permute.xlu0 %1323
  %1325 = vrot.lane.b32.xlu0 %v1320, 120
  %v1326 = vpop.permute.xlu0 %1325
  %1327 = vrot.lane.b32.xlu0 %v1321, 120
  %v1328 = vpop.permute.xlu0 %1327
  %1329 = vrot.lane.b32.xlu0 %v1322, 120
  %v1330 = vpop.permute.xlu0 %1329
  %v1331 = vmax.f32 %v1319, %v1324
  %v1332 = vmax.f32 %v1320, %v1326
  %v1333 = vmax.f32 %v1321, %v1328
  %v1334 = vmax.f32 %v1322, %v1330
  %v1335 = vpack.c.bf16 %v1332, %v1331
  %v1336 = vpack.c.bf16 %v1334, %v1333
  %v1337 = vld [vmem:[%s14] sm:$0xf]
  %v1338 = vld [vmem:[%s14 + $0x4] sm:$0xf]
  %v1339 = vld [vmem:[%s14 + $0x8] sm:$0xf]
  %v1340 = vld [vmem:[%s14 + $0xc] sm:$0xf]
  %v1341 = vld [vmem:[%s14 + $0x10] sm:$0xf]
  %v1342 = vld [vmem:[%s14 + $0x14] sm:$0xf]
  %v1343 = vld [vmem:[%s14 + $0x18] sm:$0xf]
  %v1344 = vld [vmem:[%s14 + $0x1c] sm:$0xf]
  %v1345 = vld [vmem:[%s14 + $0x20] sm:$0xf]
  %v1346 = vld [vmem:[%s14 + $0x24] sm:$0xf]
  %v1347 = vld [vmem:[%s14 + $0x28] sm:$0xf]
  %v1348 = vld [vmem:[%s14 + $0x2c] sm:$0xf]
  %v1349 = vld [vmem:[%s14 + $0x30] sm:$0xf]
  %v1350 = vld [vmem:[%s14 + $0x34] sm:$0xf]
  %v1351 = vld [vmem:[%s14 + $0x38] sm:$0xf]
  %v1352 = vld [vmem:[%s14 + $0x3c] sm:$0xf]
  %v1369 = vunpack.c.l.b16 %v1337
  %v1370 = vunpack.c.l.b16 %v1338
  %v1371 = vunpack.c.l.b16 %v1339
  %v1372 = vunpack.c.l.b16 %v1340
  %v1373 = vunpack.c.l.b16 %v1341
  %v1374 = vunpack.c.l.b16 %v1342
  %v1375 = vunpack.c.l.b16 %v1343
  %v1376 = vunpack.c.l.b16 %v1344
  %v1377 = vunpack.c.l.b16 %v1345
  %v1378 = vunpack.c.l.b16 %v1346
  %v1379 = vunpack.c.l.b16 %v1347
  %v1380 = vunpack.c.l.b16 %v1348
  %v1381 = vunpack.c.l.b16 %v1349
  %v1382 = vunpack.c.l.b16 %v1350
  %v1383 = vunpack.c.l.b16 %v1351
  %v1384 = vunpack.c.l.b16 %v1352
  %v1385 = vpack.c.b16 %v1370, %v1369
  %v1386 = vpack.c.b16 %v1372, %v1371
  %v1387 = vpack.c.b16 %v1374, %v1373
  %v1388 = vpack.c.b16 %v1376, %v1375
  %v1389 = vpack.c.b16 %v1378, %v1377
  %v1390 = vpack.c.b16 %v1380, %v1379
  %v1391 = vpack.c.b16 %v1382, %v1381
  %v1392 = vpack.c.b16 %v1384, %v1383
  %1401 = vmatprep.subr.bf16.mxu0 0
  %1402 = vmatpush1.bf16.msra.mxu0 %v1385
  %1403 = vmatprep.subr.bf16.mxu0 0
  %1404 = vmatpush1.bf16.msra.mxu0 %v1386
  %1405 = vmatprep.subr.bf16.mxu0 0
  %1406 = vmatpush1.bf16.msra.mxu0 %v1387
  %1407 = vmatprep.subr.bf16.mxu0 0
  %1408 = vmatpush1.bf16.msra.mxu0 %v1388
  %1409 = vmatprep.subr.bf16.mxu0 0
  %1410 = vmatpush1.bf16.msra.mxu0 %v1389
  %1411 = vmatprep.subr.bf16.mxu0 0
  %1412 = vmatpush1.bf16.msra.mxu0 %v1390
  %1413 = vmatprep.subr.bf16.mxu0 0
  %1414 = vmatpush1.bf16.msra.mxu0 %v1391
  %1415 = vmatprep.subr.bf16.mxu0 0
  %1416 = vmatpush1.bf16.msra.mxu0 %v1392
  %1417 = vmatprep.subr.bf16.mxu0 0
  %1418 = vmatpush1.bf16.msra.mxu0 0
  %1419 = vmatprep.subr.bf16.mxu0 0
  %1420 = vmatpush1.bf16.msra.mxu0 0
  %1421 = vmatprep.subr.bf16.mxu0 0
  %1422 = vmatpush1.bf16.msra.mxu0 0
  %1423 = vmatprep.subr.bf16.mxu0 0
  %1424 = vmatpush1.bf16.msra.mxu0 0
  %1425 = vmatprep.subr.bf16.mxu0 0
  %1426 = vmatpush1.bf16.msra.mxu0 0
  %1427 = vmatprep.subr.bf16.mxu0 0
  %1428 = vmatpush1.bf16.msra.mxu0 0
  %1429 = vmatprep.subr.bf16.mxu0 0
  %1430 = vmatpush1.bf16.msra.mxu0 0
  %1431 = vmatprep.subr.bf16.mxu0 0
  %1432 = vmatpush1.bf16.msra.mxu0 0
  %1433 = vmatprep.mubr.bf16.mxu0 0
  %1434 = vmatmul.mubr.bf16.gmra.mrb[0].mxu0 %v1335
  %v1435 = vpop.f32.mrb[0].mxu0
  %v1436 = vadd.f32 0.0, %v1435
  %v1437 = vpop.f32.mrb[0].mxu0
  %v1438 = vpop.f32.mrb[0].mxu0
  %v1439 = vadd.f32 0.0, %v1438
  %v1440 = vpop.f32.mrb[0].mxu0
  %1441 = vmatprep.mubr.bf16.mxu0 0
  %1442 = vmatmul.mubr.bf16.gmra.mrb[0].mxu0 %v1336
  %v1443 = vpop.f32.mrb[0].mxu0
  %v1444 = vadd.f32 0.0, %v1443
  %v1445 = vpop.f32.mrb[0].mxu0
  %v1446 = vpop.f32.mrb[0].mxu0
  %v1447 = vadd.f32 0.0, %v1446
  %v1448 = vpop.f32.mrb[0].mxu0
  %1449 = vdwg.mxu0
  %1454 = vrot.lane.b32.xlu0 %v1436, 101
  %v1455 = vpop.permute.xlu0 %1454
  %1456 = vrot.lane.b32.xlu0 %v1439, 101
  %v1457 = vpop.permute.xlu0 %1456
  %1458 = vrot.lane.b32.xlu0 %v1444, 101
  %v1459 = vpop.permute.xlu0 %1458
  %1460 = vrot.lane.b32.xlu0 %v1447, 101
  %v1461 = vpop.permute.xlu0 %1460
  %1466 = vrot.lane.b32.xlu0 %v1436, 5
  %v1467 = vpop.permute.xlu0 %1466
  %1468 = vrot.lane.b32.xlu0 %v1439, 5
  %v1469 = vpop.permute.xlu0 %1468
  %1470 = vrot.lane.b32.xlu0 %v1444, 5
  %v1471 = vpop.permute.xlu0 %1470
  %1472 = vrot.lane.b32.xlu0 %v1447, 5
  %v1473 = vpop.permute.xlu0 %1472
  %vm1478 = vcmask 39936
  %v1479 = vsel %vm1478, %v1455, %v1467
  %v1480 = vsel %vm1478, %v1457, %v1469
  %v1481 = vsel %vm1478, %v1459, %v1471
  %v1482 = vsel %vm1478, %v1461, %v1473
  %v1483 = vmul.f32 %v1479, %v206
  %v1484 = vmul.f32 %v1480, %v206
  %v1485 = vmul.f32 %v1481, %v206
  %v1486 = vmul.f32 %v1482, %v206
  %v1487 = vpack.c.bf16 %v1484, %v1483
  %v1488 = vpack.c.bf16 %v1486, %v1485
  %vm1489 = vcmask 261120
  %1490 = vst.msk [vmem:[#allocation2] sm:$0xff] %vm1489, %v1487
  %1491 = vst.msk [vmem:[#allocation2 + $0x20] sm:$0xff] %vm1489, %v1488
  %1492 = vrot.lane.b32.xlu0 %v1436, 100
  %v1493 = vpop.permute.xlu0 %1492
  %1494 = vrot.lane.b32.xlu0 %v1439, 100
  %v1495 = vpop.permute.xlu0 %1494
  %1496 = vrot.lane.b32.xlu0 %v1444, 100
  %v1497 = vpop.permute.xlu0 %1496
  %1498 = vrot.lane.b32.xlu0 %v1447, 100
  %v1499 = vpop.permute.xlu0 %1498
  %1504 = vrot.lane.b32.xlu0 %v1436, 4
  %v1505 = vpop.permute.xlu0 %1504
  %1506 = vrot.lane.b32.xlu0 %v1439, 4
  %v1507 = vpop.permute.xlu0 %1506
  %1508 = vrot.lane.b32.xlu0 %v1444, 4
  %v1509 = vpop.permute.xlu0 %1508
  %1510 = vrot.lane.b32.xlu0 %v1447, 4
  %v1511 = vpop.permute.xlu0 %1510
  %vm1516 = vcmask 31744
  %v1517 = vsel %vm1516, %v1493, %v1505
  %v1518 = vsel %vm1516, %v1495, %v1507
  %v1519 = vsel %vm1516, %v1497, %v1509
  %v1520 = vsel %vm1516, %v1499, %v1511
  %v1521 = vmul.f32 %v1517, %v208
  %v1522 = vmul.f32 %v1518, %v208
  %v1523 = vmul.f32 %v1519, %v208
  %v1524 = vmul.f32 %v1520, %v208
  %v1525 = vpack.c.bf16 %v1522, %v1521
  %v1526 = vpack.c.bf16 %v1524, %v1523
  %1527 = vst.msk [vmem:[#allocation2 + $0x40] sm:$0xff] %vm1489, %v1525
  %1528 = vst.msk [vmem:[#allocation2 + $0x60] sm:$0xff] %vm1489, %v1526
  %1529 = vrot.lane.b32.xlu0 %v1436, 99
  %v1530 = vpop.permute.xlu0 %1529
  %1531 = vrot.lane.b32.xlu0 %v1439, 99
  %v1532 = vpop.permute.xlu0 %1531
  %1533 = vrot.lane.b32.xlu0 %v1444, 99
  %v1534 = vpop.permute.xlu0 %1533
  %1535 = vrot.lane.b32.xlu0 %v1447, 99
  %v1536 = vpop.permute.xlu0 %1535
  %1541 = vrot.lane.b32.xlu0 %v1436, 3
  %v1542 = vpop.permute.xlu0 %1541
  %1543 = vrot.lane.b32.xlu0 %v1439, 3
  %v1544 = vpop.permute.xlu0 %1543
  %1545 = vrot.lane.b32.xlu0 %v1444, 3
  %v1546 = vpop.permute.xlu0 %1545
  %1547 = vrot.lane.b32.xlu0 %v1447, 3
  %v1548 = vpop.permute.xlu0 %1547
  %vm1553 = vcmask 23552
  %v1554 = vsel %vm1553, %v1530, %v1542
  %v1555 = vsel %vm1553, %v1532, %v1544
  %v1556 = vsel %vm1553, %v1534, %v1546
  %v1557 = vsel %vm1553, %v1536, %v1548
  %v1558 = vmul.f32 %v1554, %v211
  %v1559 = vmul.f32 %v1555, %v211
  %v1560 = vmul.f32 %v1556, %v211
  %v1561 = vmul.f32 %v1557, %v211
  %v1562 = vpack.c.bf16 %v1559, %v1558
  %v1563 = vpack.c.bf16 %v1561, %v1560
  %1564 = vst.msk [vmem:[#allocation2 + $0x80] sm:$0xff] %vm1489, %v1562
  %1565 = vst.msk [vmem:[#allocation2 + $0xa0] sm:$0xff] %vm1489, %v1563
  %1566 = vrot.lane.b32.xlu0 %v1436, 97
  %v1567 = vpop.permute.xlu0 %1566
  %1568 = vrot.lane.b32.xlu0 %v1439, 97
  %v1569 = vpop.permute.xlu0 %1568
  %1570 = vrot.lane.b32.xlu0 %v1444, 97
  %v1571 = vpop.permute.xlu0 %1570
  %1572 = vrot.lane.b32.xlu0 %v1447, 97
  %v1573 = vpop.permute.xlu0 %1572
  %1578 = vrot.lane.b32.xlu0 %v1436, 1
  %v1579 = vpop.permute.xlu0 %1578
  %1580 = vrot.lane.b32.xlu0 %v1439, 1
  %v1581 = vpop.permute.xlu0 %1580
  %1582 = vrot.lane.b32.xlu0 %v1444, 1
  %v1583 = vpop.permute.xlu0 %1582
  %1584 = vrot.lane.b32.xlu0 %v1447, 1
  %v1585 = vpop.permute.xlu0 %1584
  %vm1590 = vcmask 7168
  %v1591 = vsel %vm1590, %v1567, %v1579
  %v1592 = vsel %vm1590, %v1569, %v1581
  %v1593 = vsel %vm1590, %v1571, %v1583
  %v1594 = vsel %vm1590, %v1573, %v1585
  %v1595 = vmul.f32 %v1591, %v213
  %v1596 = vmul.f32 %v1592, %v213
  %v1597 = vmul.f32 %v1593, %v213
  %v1598 = vmul.f32 %v1594, %v213
  %v1599 = vpack.c.bf16 %v1596, %v1595
  %v1600 = vpack.c.bf16 %v1598, %v1597
  %1601 = vst.msk [vmem:[#allocation2 + $0xc0] sm:$0xff] %vm1489, %v1599
  %1602 = vst.msk [vmem:[#allocation2 + $0xe0] sm:$0xff] %vm1489, %v1600
  %v1603 = vpack.c.bf16 %v1439, %v1436
  %v1604 = vpack.c.bf16 %v1447, %v1444
  %1605 = vst.msk [vmem:[#allocation2 + $0x100] sm:$0xff] %vm1489, %v1603
  %1606 = vst.msk [vmem:[#allocation2 + $0x120] sm:$0xff] %vm1489, %v1604
  %1607 = vrot.lane.b32.xlu0 %v1436, 127
  %v1608 = vpop.permute.xlu0 %1607
  %1609 = vrot.lane.b32.xlu0 %v1439, 127
  %v1610 = vpop.permute.xlu0 %1609
  %1611 = vrot.lane.b32.xlu0 %v1444, 127
  %v1612 = vpop.permute.xlu0 %1611
  %1613 = vrot.lane.b32.xlu0 %v1447, 127
  %v1614 = vpop.permute.xlu0 %1613
  %1619 = vrot.lane.b32.xlu0 %v1436, 31
  %v1620 = vpop.permute.xlu0 %1619
  %1621 = vrot.lane.b32.xlu0 %v1439, 31
  %v1622 = vpop.permute.xlu0 %1621
  %1623 = vrot.lane.b32.xlu0 %v1444, 31
  %v1624 = vpop.permute.xlu0 %1623
  %1625 = vrot.lane.b32.xlu0 %v1447, 31
  %v1626 = vpop.permute.xlu0 %1625
  %vm1631 = vcmask 252928
  %v1632 = vsel %vm1631, %v1608, %v1620
  %v1633 = vsel %vm1631, %v1610, %v1622
  %v1634 = vsel %vm1631, %v1612, %v1624
  %v1635 = vsel %vm1631, %v1614, %v1626
  %v1636 = vmul.f32 %v1632, %v215
  %v1637 = vmul.f32 %v1633, %v215
  %v1638 = vmul.f32 %v1634, %v215
  %v1639 = vmul.f32 %v1635, %v215
  %v1640 = vpack.c.bf16 %v1637, %v1636
  %v1641 = vpack.c.bf16 %v1639, %v1638
  %1642 = vst.msk [vmem:[#allocation2 + $0x140] sm:$0xff] %vm1489, %v1640
  %1643 = vst.msk [vmem:[#allocation2 + $0x160] sm:$0xff] %vm1489, %v1641
  %1644 = vrot.lane.b32.xlu0 %v1436, 125
  %v1645 = vpop.permute.xlu0 %1644
  %1646 = vrot.lane.b32.xlu0 %v1439, 125
  %v1647 = vpop.permute.xlu0 %1646
  %1648 = vrot.lane.b32.xlu0 %v1444, 125
  %v1649 = vpop.permute.xlu0 %1648
  %1650 = vrot.lane.b32.xlu0 %v1447, 125
  %v1651 = vpop.permute.xlu0 %1650
  %1656 = vrot.lane.b32.xlu0 %v1436, 29
  %v1657 = vpop.permute.xlu0 %1656
  %1658 = vrot.lane.b32.xlu0 %v1439, 29
  %v1659 = vpop.permute.xlu0 %1658
  %1660 = vrot.lane.b32.xlu0 %v1444, 29
  %v1661 = vpop.permute.xlu0 %1660
  %1662 = vrot.lane.b32.xlu0 %v1447, 29
  %v1663 = vpop.permute.xlu0 %1662
  %vm1668 = vcmask 236544
  %v1669 = vsel %vm1668, %v1645, %v1657
  %v1670 = vsel %vm1668, %v1647, %v1659
  %v1671 = vsel %vm1668, %v1649, %v1661
  %v1672 = vsel %vm1668, %v1651, %v1663
  %v1673 = vmul.f32 %v1669, %v218
  %v1674 = vmul.f32 %v1670, %v218
  %v1675 = vmul.f32 %v1671, %v218
  %v1676 = vmul.f32 %v1672, %v218
  %v1677 = vpack.c.bf16 %v1674, %v1673
  %v1678 = vpack.c.bf16 %v1676, %v1675
  %1679 = vst.msk [vmem:[#allocation2 + $0x180] sm:$0xff] %vm1489, %v1677
  %1680 = vst.msk [vmem:[#allocation2 + $0x1a0] sm:$0xff] %vm1489, %v1678
  %1681 = vrot.lane.b32.xlu0 %v1436, 124
  %v1682 = vpop.permute.xlu0 %1681
  %1683 = vrot.lane.b32.xlu0 %v1439, 124
  %v1684 = vpop.permute.xlu0 %1683
  %1685 = vrot.lane.b32.xlu0 %v1444, 124
  %v1686 = vpop.permute.xlu0 %1685
  %1687 = vrot.lane.b32.xlu0 %v1447, 124
  %v1688 = vpop.permute.xlu0 %1687
  %1693 = vrot.lane.b32.xlu0 %v1436, 28
  %v1694 = vpop.permute.xlu0 %1693
  %1695 = vrot.lane.b32.xlu0 %v1439, 28
  %v1696 = vpop.permute.xlu0 %1695
  %1697 = vrot.lane.b32.xlu0 %v1444, 28
  %v1698 = vpop.permute.xlu0 %1697
  %1699 = vrot.lane.b32.xlu0 %v1447, 28
  %v1700 = vpop.permute.xlu0 %1699
  %vm1705 = vcmask 228352
  %v1706 = vsel %vm1705, %v1682, %v1694
  %v1707 = vsel %vm1705, %v1684, %v1696
  %v1708 = vsel %vm1705, %v1686, %v1698
  %v1709 = vsel %vm1705, %v1688, %v1700
  %v1710 = vmul.f32 %v1706, %v220
  %v1711 = vmul.f32 %v1707, %v220
  %v1712 = vmul.f32 %v1708, %v220
  %v1713 = vmul.f32 %v1709, %v220
  %v1714 = vpack.c.bf16 %v1711, %v1710
  %v1715 = vpack.c.bf16 %v1713, %v1712
  %1716 = vst.msk [vmem:[#allocation2 + $0x1c0] sm:$0xff] %vm1489, %v1714
  %1717 = vst.msk [vmem:[#allocation2 + $0x1e0] sm:$0xff] %vm1489, %v1715
  %1718 = vrot.lane.b32.xlu0 %v1436, 123
  %v1719 = vpop.permute.xlu0 %1718
  %1720 = vrot.lane.b32.xlu0 %v1439, 123
  %v1721 = vpop.permute.xlu0 %1720
  %1722 = vrot.lane.b32.xlu0 %v1444, 123
  %v1723 = vpop.permute.xlu0 %1722
  %1724 = vrot.lane.b32.xlu0 %v1447, 123
  %v1725 = vpop.permute.xlu0 %1724
  %1730 = vrot.lane.b32.xlu0 %v1436, 27
  %v1731 = vpop.permute.xlu0 %1730
  %1732 = vrot.lane.b32.xlu0 %v1439, 27
  %v1733 = vpop.permute.xlu0 %1732
  %1734 = vrot.lane.b32.xlu0 %v1444, 27
  %v1735 = vpop.permute.xlu0 %1734
  %1736 = vrot.lane.b32.xlu0 %v1447, 27
  %v1737 = vpop.permute.xlu0 %1736
  %vm1742 = vcmask 220160
  %v1743 = vsel %vm1742, %v1719, %v1731
  %v1744 = vsel %vm1742, %v1721, %v1733
  %v1745 = vsel %vm1742, %v1723, %v1735
  %v1746 = vsel %vm1742, %v1725, %v1737
  %v1747 = vmul.f32 %v1743, %v223
  %v1748 = vmul.f32 %v1744, %v223
  %v1749 = vmul.f32 %v1745, %v223
  %v1750 = vmul.f32 %v1746, %v223
  %v1751 = vpack.c.bf16 %v1748, %v1747
  %v1752 = vpack.c.bf16 %v1750, %v1749
  %1753 = vst.msk [vmem:[#allocation2 + $0x200] sm:$0xff] %vm1489, %v1751
  %1754 = vst.msk [vmem:[#allocation2 + $0x220] sm:$0xff] %vm1489, %v1752
  %v1755 = vld [vmem:[%s5] sm:$0xff]
  %v1756 = vld [vmem:[%s5 + $0x8] sm:$0xf]
  %v1757 = vld [vmem:[%s5 + $0xc] sm:$0xff]
  %v1758 = vld [vmem:[%s5 + $0x14] sm:$0xf]
  %v1759 = vld [vmem:[%s5 + $0x18] sm:$0xff]
  %v1760 = vld [vmem:[%s5 + $0x20] sm:$0xf]
  %v1761 = vld [vmem:[%s5 + $0x24] sm:$0xff]
  %v1762 = vld [vmem:[%s5 + $0x2c] sm:$0xf]
  %v1763 = vld [vmem:[%s5 + $0x30] sm:$0xff]
  %v1764 = vld [vmem:[%s5 + $0x38] sm:$0xf]
  %v1765 = vld [vmem:[%s5 + $0x3c] sm:$0xff]
  %v1766 = vld [vmem:[%s5 + $0x44] sm:$0xf]
  %v1767 = vld [vmem:[%s5 + $0x48] sm:$0xff]
  %v1768 = vld [vmem:[%s5 + $0x50] sm:$0xf]
  %v1769 = vld [vmem:[%s5 + $0x54] sm:$0xff]
  %v1770 = vld [vmem:[%s5 + $0x5c] sm:$0xf]
  %v1771 = vld [vmem:[#allocation2] sm:$0xff]
  %v1772 = vld [vmem:[#allocation2 + $0x20] sm:$0xff]
  %v1773 = vld [vmem:[#allocation2 + $0x40] sm:$0xff]
  %v1774 = vld [vmem:[#allocation2 + $0x60] sm:$0xff]
  %v1775 = vld [vmem:[#allocation2 + $0x80] sm:$0xff]
  %v1776 = vld [vmem:[#allocation2 + $0xa0] sm:$0xff]
  %v1777 = vld [vmem:[#allocation2 + $0xc0] sm:$0xff]
  %v1778 = vld [vmem:[#allocation2 + $0xe0] sm:$0xff]
  %v1779 = vld [vmem:[#allocation2 + $0x100] sm:$0xff]
  %v1780 = vld [vmem:[#allocation2 + $0x120] sm:$0xff]
  %v1781 = vld [vmem:[#allocation2 + $0x140] sm:$0xff]
  %v1782 = vld [vmem:[#allocation2 + $0x160] sm:$0xff]
  %v1783 = vld [vmem:[#allocation2 + $0x180] sm:$0xff]
  %v1784 = vld [vmem:[#allocation2 + $0x1a0] sm:$0xff]
  %v1785 = vld [vmem:[#allocation2 + $0x1c0] sm:$0xff]
  %v1786 = vld [vmem:[#allocation2 + $0x1e0] sm:$0xff]
  %v1787 = vld [vmem:[#allocation2 + $0x200] sm:$0xff]
  %v1788 = vld [vmem:[#allocation2 + $0x220] sm:$0xff]
  %v1789 = vld [vmem:[%s6] sm:$0xff]
  %v1790 = vld [vmem:[%s6 + $0x8] sm:$0xff]
  %v1791 = vld [vmem:[%s6 + $0x10] sm:$0xff]
  %v1792 = vld [vmem:[%s6 + $0x18] sm:$0xff]
  %v1793 = vld [vmem:[%s6 + $0x20] sm:$0xff]
  %v1794 = vld [vmem:[%s6 + $0x28] sm:$0xff]
  %v1795 = vld [vmem:[%s6 + $0x30] sm:$0xff]
  %v1796 = vld [vmem:[%s6 + $0x38] sm:$0xff]
  %1798 = vset.pattern.permute.xlu0 0
  %1799 = vperm.xlu0 %1798, %v1789
  %v1800 = vpop.permute.xlu0 %1799
  %1803 = vset.pattern.permute.xlu0 0
  %1804 = vperm.xlu0 %1803, %v1790
  %v1805 = vpop.permute.xlu0 %1804
  %1808 = vset.pattern.permute.xlu0 0
  %1809 = vperm.xlu0 %1808, %v1791
  %v1810 = vpop.permute.xlu0 %1809
  %1813 = vset.pattern.permute.xlu0 0
  %1814 = vperm.xlu0 %1813, %v1792
  %v1815 = vpop.permute.xlu0 %1814
  %1818 = vset.pattern.permute.xlu0 0
  %1819 = vperm.xlu0 %1818, %v1793
  %v1820 = vpop.permute.xlu0 %1819
  %1823 = vset.pattern.permute.xlu0 0
  %1824 = vperm.xlu0 %1823, %v1794
  %v1825 = vpop.permute.xlu0 %1824
  %1828 = vset.pattern.permute.xlu0 0
  %1829 = vperm.xlu0 %1828, %v1795
  %v1830 = vpop.permute.xlu0 %1829
  %1833 = vset.pattern.permute.xlu0 0
  %1834 = vperm.xlu0 %1833, %v1796
  %v1835 = vpop.permute.xlu0 %1834
  %v1853 = vunpack.c.l.b16 %v1755
  %v1854 = vunpack.c.h.b16 %v1755
  %v1855 = vunpack.c.l.b16 %v1756
  %v1856 = vunpack.c.l.b16 %v1757
  %v1857 = vunpack.c.h.b16 %v1757
  %v1858 = vunpack.c.l.b16 %v1758
  %v1859 = vunpack.c.l.b16 %v1759
  %v1860 = vunpack.c.h.b16 %v1759
  %v1861 = vunpack.c.l.b16 %v1760
  %v1862 = vunpack.c.l.b16 %v1761
  %v1863 = vunpack.c.h.b16 %v1761
  %v1864 = vunpack.c.l.b16 %v1762
  %v1865 = vunpack.c.l.b16 %v1763
  %v1866 = vunpack.c.h.b16 %v1763
  %v1867 = vunpack.c.l.b16 %v1764
  %v1868 = vunpack.c.l.b16 %v1765
  %v1869 = vunpack.c.h.b16 %v1765
  %v1870 = vunpack.c.l.b16 %v1766
  %v1871 = vunpack.c.l.b16 %v1767
  %v1872 = vunpack.c.h.b16 %v1767
  %v1873 = vunpack.c.l.b16 %v1768
  %v1874 = vunpack.c.l.b16 %v1769
  %v1875 = vunpack.c.h.b16 %v1769
  %v1876 = vunpack.c.l.b16 %v1770
  %v1877 = vpack.c.b16 %v1856, %v1853
  %v1878 = vpack.c.b16 %v1857, %v1854
  %v1879 = vpack.c.b16 %v1858, %v1855
  %v1880 = vpack.c.b16 %v1862, %v1859
  %v1881 = vpack.c.b16 %v1863, %v1860
  %v1882 = vpack.c.b16 %v1864, %v1861
  %v1883 = vpack.c.b16 %v1868, %v1865
  %v1884 = vpack.c.b16 %v1869, %v1866
  %v1885 = vpack.c.b16 %v1870, %v1867
  %v1886 = vpack.c.b16 %v1874, %v1871
  %v1887 = vpack.c.b16 %v1875, %v1872
  %v1888 = vpack.c.b16 %v1876, %v1873
  %v1898 = vsel %vm1489, %v1879, 0
  %v1901 = vsel %vm1489, %v1882, 0
  %v1904 = vsel %vm1489, %v1885, 0
  %v1907 = vsel %vm1489, %v1888, 0
  %1909 = vmatprep.subr.bf16.mxu0 0
  %1910 = vmatpush1.bf16.msra.mxu0 %v1771
  %1911 = vmatprep.subr.bf16.mxu0 0
  %1912 = vmatpush1.bf16.msra.mxu0 %v1772
  %1913 = vmatprep.subr.bf16.mxu0 0
  %1914 = vmatpush1.bf16.msra.mxu0 %v1773
  %1915 = vmatprep.subr.bf16.mxu0 0
  %1916 = vmatpush1.bf16.msra.mxu0 %v1774
  %1917 = vmatprep.subr.bf16.mxu0 0
  %1918 = vmatpush1.bf16.msra.mxu0 %v1775
  %1919 = vmatprep.subr.bf16.mxu0 0
  %1920 = vmatpush1.bf16.msra.mxu0 %v1776
  %1921 = vmatprep.subr.bf16.mxu0 0
  %1922 = vmatpush1.bf16.msra.mxu0 %v1777
  %1923 = vmatprep.subr.bf16.mxu0 0
  %1924 = vmatpush1.bf16.msra.mxu0 %v1778
  %1925 = vmatprep.subr.bf16.mxu0 0
  %1926 = vmatpush1.bf16.msra.mxu0 %v1779
  %1927 = vmatprep.subr.bf16.mxu0 0
  %1928 = vmatpush1.bf16.msra.mxu0 %v1780
  %1929 = vmatprep.subr.bf16.mxu0 0
  %1930 = vmatpush1.bf16.msra.mxu0 %v1781
  %1931 = vmatprep.subr.bf16.mxu0 0
  %1932 = vmatpush1.bf16.msra.mxu0 %v1782
  %1933 = vmatprep.subr.bf16.mxu0 0
  %1934 = vmatpush1.bf16.msra.mxu0 %v1783
  %1935 = vmatprep.subr.bf16.mxu0 0
  %1936 = vmatpush1.bf16.msra.mxu0 %v1784
  %1937 = vmatprep.subr.bf16.mxu0 0
  %1938 = vmatpush1.bf16.msra.mxu0 %v1785
  %1939 = vmatprep.subr.bf16.mxu0 0
  %1940 = vmatpush1.bf16.msra.mxu0 %v1786
  %1941 = vmatprep.mubr.bf16.mxu0 %v1878
  %1942 = vmatmul.mubr.bf16.gmra.mrb[0].mxu0 %v1877
  %v1943 = vpop.f32.mrb[0].mxu0
  %v1944 = vadd.f32 %v1800, %v1943
  %v1945 = vpop.f32.mrb[0].mxu0
  %v1946 = vpop.f32.mrb[0].mxu0
  %v1947 = vadd.f32 %v1805, %v1946
  %v1948 = vpop.f32.mrb[0].mxu0
  %1949 = vmatprep.mubr.bf16.mxu0 %v1881
  %1950 = vmatmul.mubr.bf16.gmra.mrb[0].mxu0 %v1880
  %v1951 = vpop.f32.mrb[0].mxu0
  %v1952 = vadd.f32 %v1810, %v1951
  %v1953 = vpop.f32.mrb[0].mxu0
  %v1954 = vpop.f32.mrb[0].mxu0
  %v1955 = vadd.f32 %v1815, %v1954
  %v1956 = vpop.f32.mrb[0].mxu0
  %1957 = vmatprep.mubr.bf16.mxu0 %v1884
  %1958 = vmatmul.mubr.bf16.gmra.mrb[0].mxu0 %v1883
  %v1959 = vpop.f32.mrb[0].mxu0
  %v1960 = vadd.f32 %v1820, %v1959
  %v1961 = vpop.f32.mrb[0].mxu0
  %v1962 = vpop.f32.mrb[0].mxu0
  %v1963 = vadd.f32 %v1825, %v1962
  %v1964 = vpop.f32.mrb[0].mxu0
  %1965 = vmatprep.mubr.bf16.mxu0 %v1887
  %1966 = vmatmul.mubr.bf16.gmra.mrb[0].mxu0 %v1886
  %v1967 = vpop.f32.mrb[0].mxu0
  %v1968 = vadd.f32 %v1830, %v1967
  %v1969 = vpop.f32.mrb[0].mxu0
  %v1970 = vpop.f32.mrb[0].mxu0
  %v1971 = vadd.f32 %v1835, %v1970
  %v1972 = vpop.f32.mrb[0].mxu0
  %1973 = vdwg.mxu0
  %1974 = vmatprep.subr.bf16.mxu0 0
  %1975 = vmatpush1.bf16.msra.mxu0 %v1787
  %1976 = vmatprep.subr.bf16.mxu0 0
  %1977 = vmatpush1.bf16.msra.mxu0 %v1788
  %1978 = vmatprep.subr.bf16.mxu0 0
  %1979 = vmatpush1.bf16.msra.mxu0 0
  %1980 = vmatprep.subr.bf16.mxu0 0
  %1981 = vmatpush1.bf16.msra.mxu0 0
  %1982 = vmatprep.subr.bf16.mxu0 0
  %1983 = vmatpush1.bf16.msra.mxu0 0
  %1984 = vmatprep.subr.bf16.mxu0 0
  %1985 = vmatpush1.bf16.msra.mxu0 0
  %1986 = vmatprep.subr.bf16.mxu0 0
  %1987 = vmatpush1.bf16.msra.mxu0 0
  %1988 = vmatprep.subr.bf16.mxu0 0
  %1989 = vmatpush1.bf16.msra.mxu0 0
  %1990 = vmatprep.subr.bf16.mxu0 0
  %1991 = vmatpush1.bf16.msra.mxu0 0
  %1992 = vmatprep.subr.bf16.mxu0 0
  %1993 = vmatpush1.bf16.msra.mxu0 0
  %1994 = vmatprep.subr.bf16.mxu0 0
  %1995 = vmatpush1.bf16.msra.mxu0 0
  %1996 = vmatprep.subr.bf16.mxu0 0
  %1997 = vmatpush1.bf16.msra.mxu0 0
  %1998 = vmatprep.subr.bf16.mxu0 0
  %1999 = vmatpush1.bf16.msra.mxu0 0
  %2000 = vmatprep.subr.bf16.mxu0 0
  %2001 = vmatpush1.bf16.msra.mxu0 0
  %2002 = vmatprep.subr.bf16.mxu0 0
  %2003 = vmatpush1.bf16.msra.mxu0 0
  %2004 = vmatprep.subr.bf16.mxu0 0
  %2005 = vmatpush1.bf16.msra.mxu0 0
  %2006 = vmatprep.mubr.bf16.mxu0 0
  %2007 = vmatmul.mubr.bf16.gmra.mrb[0].mxu0 %v1898
  %v2008 = vpop.f32.mrb[0].mxu0
  %v2009 = vadd.f32 %v1944, %v2008
  %v2010 = vpop.f32.mrb[0].mxu0
  %v2011 = vpop.f32.mrb[0].mxu0
  %v2012 = vadd.f32 %v1947, %v2011
  %v2013 = vpop.f32.mrb[0].mxu0
  %2014 = vmatprep.mubr.bf16.mxu0 0
  %2015 = vmatmul.mubr.bf16.gmra.mrb[0].mxu0 %v1901
  %v2016 = vpop.f32.mrb[0].mxu0
  %v2017 = vadd.f32 %v1952, %v2016
  %v2018 = vpop.f32.mrb[0].mxu0
  %v2019 = vpop.f32.mrb[0].mxu0
  %v2020 = vadd.f32 %v1955, %v2019
  %v2021 = vpop.f32.mrb[0].mxu0
  %2022 = vmatprep.mubr.bf16.mxu0 0
  %2023 = vmatmul.mubr.bf16.gmra.mrb[0].mxu0 %v1904
  %v2024 = vpop.f32.mrb[0].mxu0
  %v2025 = vadd.f32 %v1960, %v2024
  %v2026 = vpop.f32.mrb[0].mxu0
  %v2027 = vpop.f32.mrb[0].mxu0
  %v2028 = vadd.f32 %v1963, %v2027
  %v2029 = vpop.f32.mrb[0].mxu0
  %2030 = vmatprep.mubr.bf16.mxu0 0
  %2031 = vmatmul.mubr.bf16.gmra.mrb[0].mxu0 %v1907
  %v2032 = vpop.f32.mrb[0].mxu0
  %v2033 = vadd.f32 %v1968, %v2032
  %v2034 = vpop.f32.mrb[0].mxu0
  %v2035 = vpop.f32.mrb[0].mxu0
  %v2036 = vadd.f32 %v1971, %v2035
  %v2037 = vpop.f32.mrb[0].mxu0
  %2038 = vdwg.mxu0
  %v2039 = vmax.f32 %v2009, 0.0
  %v2040 = vmax.f32 %v2012, 0.0
  %v2041 = vmax.f32 %v2017, 0.0
  %v2042 = vmax.f32 %v2020, 0.0
  %v2043 = vmax.f32 %v2025, 0.0
  %v2044 = vmax.f32 %v2028, 0.0
  %v2045 = vmax.f32 %v2033, 0.0
  %v2046 = vmax.f32 %v2036, 0.0
  %v2047 = vpack.c.bf16 %v2040, %v2039
  %v2048 = vpack.c.bf16 %v2042, %v2041
  %v2049 = vpack.c.bf16 %v2044, %v2043
  %v2050 = vpack.c.bf16 %v2046, %v2045
  %v2051 = vld [vmem:[%s15] sm:$0xf]
  %v2052 = vld [vmem:[%s15 + $0x4] sm:$0xf]
  %v2053 = vld [vmem:[%s15 + $0x8] sm:$0xf]
  %v2054 = vld [vmem:[%s15 + $0xc] sm:$0xf]
  %v2059 = vunpack.c.l.b16 %v2051
  %v2060 = vunpack.c.l.b16 %v2052
  %v2061 = vunpack.c.l.b16 %v2053
  %v2062 = vunpack.c.l.b16 %v2054
  %v2063 = vpack.c.b16 %v2060, %v2059
  %v2064 = vpack.c.b16 %v2062, %v2061
  %v2068 = vsel %vm1489, %v2047, 0
  %v2071 = vsel %vm1489, %v2048, 0
  %v2074 = vsel %vm1489, %v2049, 0
  %v2077 = vsel %vm1489, %v2050, 0
  %2079 = vmatprep.subr.bf16.mxu0 0
  %2080 = vmatpush1.bf16.msra.mxu0 %v2063
  %2081 = vmatprep.subr.bf16.mxu0 0
  %2082 = vmatpush1.bf16.msra.mxu0 %v2064
  %2083 = vmatprep.subr.bf16.mxu0 0
  %2084 = vmatpush1.bf16.msra.mxu0 0
  %2085 = vmatprep.subr.bf16.mxu0 0
  %2086 = vmatpush1.bf16.msra.mxu0 0
  %2087 = vmatprep.subr.bf16.mxu0 0
  %2088 = vmatpush1.bf16.msra.mxu0 0
  %2089 = vmatprep.subr.bf16.mxu0 0
  %2090 = vmatpush1.bf16.msra.mxu0 0
  %2091 = vmatprep.subr.bf16.mxu0 0
  %2092 = vmatpush1.bf16.msra.mxu0 0
  %2093 = vmatprep.subr.bf16.mxu0 0
  %2094 = vmatpush1.bf16.msra.mxu0 0
  %2095 = vmatprep.subr.bf16.mxu0 0
  %2096 = vmatpush1.bf16.msra.mxu0 0
  %2097 = vmatprep.subr.bf16.mxu0 0
  %2098 = vmatpush1.bf16.msra.mxu0 0
  %2099 = vmatprep.subr.bf16.mxu0 0
  %2100 = vmatpush1.bf16.msra.mxu0 0
  %2101 = vmatprep.subr.bf16.mxu0 0
  %2102 = vmatpush1.bf16.msra.mxu0 0
  %2103 = vmatprep.subr.bf16.mxu0 0
  %2104 = vmatpush1.bf16.msra.mxu0 0
  %2105 = vmatprep.subr.bf16.mxu0 0
  %2106 = vmatpush1.bf16.msra.mxu0 0
  %2107 = vmatprep.subr.bf16.mxu0 0
  %2108 = vmatpush1.bf16.msra.mxu0 0
  %2109 = vmatprep.subr.bf16.mxu0 0
  %2110 = vmatpush1.bf16.msra.mxu0 0
  %2111 = vmatprep.mubr.bf16.mxu0 0
  %2112 = vmatmul.mubr.bf16.gmra.mrb[0].mxu0 %v2068
  %v2113 = vpop.f32.mrb[0].mxu0
  %v2114 = vadd.f32 0.0, %v2113
  %v2115 = vpop.f32.mrb[0].mxu0
  %v2116 = vpop.f32.mrb[0].mxu0
  %v2117 = vadd.f32 0.0, %v2116
  %v2118 = vpop.f32.mrb[0].mxu0
  %2119 = vmatprep.mubr.bf16.mxu0 0
  %2120 = vmatmul.mubr.bf16.gmra.mrb[0].mxu0 %v2071
  %v2121 = vpop.f32.mrb[0].mxu0
  %v2122 = vadd.f32 0.0, %v2121
  %v2123 = vpop.f32.mrb[0].mxu0
  %v2124 = vpop.f32.mrb[0].mxu0
  %v2125 = vadd.f32 0.0, %v2124
  %v2126 = vpop.f32.mrb[0].mxu0
  %2127 = vmatprep.mubr.bf16.mxu0 0
  %2128 = vmatmul.mubr.bf16.gmra.mrb[0].mxu0 %v2074
  %v2129 = vpop.f32.mrb[0].mxu0
  %v2130 = vadd.f32 0.0, %v2129
  %v2131 = vpop.f32.mrb[0].mxu0
  %v2132 = vpop.f32.mrb[0].mxu0
  %v2133 = vadd.f32 0.0, %v2132
  %v2134 = vpop.f32.mrb[0].mxu0
  %2135 = vmatprep.mubr.bf16.mxu0 0
  %2136 = vmatmul.mubr.bf16.gmra.mrb[0].mxu0 %v2077
  %v2137 = vpop.f32.mrb[0].mxu0
  %v2138 = vadd.f32 0.0, %v2137
  %v2139 = vpop.f32.mrb[0].mxu0
  %v2140 = vpop.f32.mrb[0].mxu0
  %v2141 = vadd.f32 0.0, %v2140
  %v2142 = vpop.f32.mrb[0].mxu0
  %2143 = vdwg.mxu0
  %2144 = vrot.lane.b32.xlu0 %v2114, 9
  %v2145 = vpop.permute.xlu0 %2144
  %2146 = vrot.lane.b32.xlu0 %v2117, 9
  %v2147 = vpop.permute.xlu0 %2146
  %2148 = vrot.lane.b32.xlu0 %v2122, 9
  %v2149 = vpop.permute.xlu0 %2148
  %2150 = vrot.lane.b32.xlu0 %v2125, 9
  %v2151 = vpop.permute.xlu0 %2150
  %2152 = vrot.lane.b32.xlu0 %v2130, 9
  %v2153 = vpop.permute.xlu0 %2152
  %2154 = vrot.lane.b32.xlu0 %v2133, 9
  %v2155 = vpop.permute.xlu0 %2154
  %2156 = vrot.lane.b32.xlu0 %v2138, 9
  %v2157 = vpop.permute.xlu0 %2156
  %2158 = vrot.lane.b32.xlu0 %v2141, 9
  %v2159 = vpop.permute.xlu0 %2158
  %2160 = vrot.lane.b32.xlu0 %v1307, 9
  %v2161 = vpop.permute.xlu0 %2160
  %2162 = vrot.lane.b32.xlu0 %v1308, 9
  %v2163 = vpop.permute.xlu0 %2162
  %2164 = vrot.lane.b32.xlu0 %v1309, 9
  %v2165 = vpop.permute.xlu0 %2164
  %2166 = vrot.lane.b32.xlu0 %v1310, 9
  %v2167 = vpop.permute.xlu0 %2166
  %v2168 = vmul.f32 %v2145, %v179
  %v2169 = vmul.f32 %v2147, %v179
  %v2170 = vmul.f32 %v2149, %v179
  %v2171 = vmul.f32 %v2151, %v179
  %v2172 = vmul.f32 %v2153, %v179
  %v2173 = vmul.f32 %v2155, %v179
  %v2174 = vmul.f32 %v2157, %v179
  %v2175 = vmul.f32 %v2159, %v179
  %v2176 = vmul.f32 %v2161, %v179
  %v2177 = vmul.f32 %v2163, %v179
  %v2178 = vmul.f32 %v2165, %v179
  %v2179 = vmul.f32 %v2167, %v179
  %v2180 = vpack.c.bf16 %v2169, %v2168
  %v2181 = vpack.c.bf16 %v2171, %v2170
  %v2182 = vpack.c.bf16 %v2173, %v2172
  %v2183 = vpack.c.bf16 %v2175, %v2174
  %v2184 = vpack.c.bf16 %v2177, %v2176
  %v2185 = vpack.c.bf16 %v2179, %v2178
  %2186 = vst [vmem:[#allocation2] sm:$0xff] %v2180
  %2187 = vst [vmem:[#allocation2 + $0x20] sm:$0xff] %v2181
  %2188 = vst [vmem:[#allocation2 + $0x40] sm:$0xff] %v2182
  %2189 = vst [vmem:[#allocation2 + $0x60] sm:$0xff] %v2183
  %2190 = vst [vmem:[#allocation2 + $0x80] sm:$0xff] %v2184
  %2191 = vst [vmem:[#allocation2 + $0xa0] sm:$0xff] %v2185
  %2192 = vrot.lane.b32.xlu0 %v2114, 8
  %v2193 = vpop.permute.xlu0 %2192
  %2194 = vrot.lane.b32.xlu0 %v2117, 8
  %v2195 = vpop.permute.xlu0 %2194
  %2196 = vrot.lane.b32.xlu0 %v2122, 8
  %v2197 = vpop.permute.xlu0 %2196
  %2198 = vrot.lane.b32.xlu0 %v2125, 8
  %v2199 = vpop.permute.xlu0 %2198
  %2200 = vrot.lane.b32.xlu0 %v2130, 8
  %v2201 = vpop.permute.xlu0 %2200
  %2202 = vrot.lane.b32.xlu0 %v2133, 8
  %v2203 = vpop.permute.xlu0 %2202
  %2204 = vrot.lane.b32.xlu0 %v2138, 8
  %v2205 = vpop.permute.xlu0 %2204
  %2206 = vrot.lane.b32.xlu0 %v2141, 8
  %v2207 = vpop.permute.xlu0 %2206
  %2208 = vrot.lane.b32.xlu0 %v1307, 8
  %v2209 = vpop.permute.xlu0 %2208
  %2210 = vrot.lane.b32.xlu0 %v1308, 8
  %v2211 = vpop.permute.xlu0 %2210
  %2212 = vrot.lane.b32.xlu0 %v1309, 8
  %v2213 = vpop.permute.xlu0 %2212
  %2214 = vrot.lane.b32.xlu0 %v1310, 8
  %v2215 = vpop.permute.xlu0 %2214
  %v2216 = vmul.f32 %v2193, %v181
  %v2217 = vmul.f32 %v2195, %v181
  %v2218 = vmul.f32 %v2197, %v181
  %v2219 = vmul.f32 %v2199, %v181
  %v2220 = vmul.f32 %v2201, %v181
  %v2221 = vmul.f32 %v2203, %v181
  %v2222 = vmul.f32 %v2205, %v181
  %v2223 = vmul.f32 %v2207, %v181
  %v2224 = vmul.f32 %v2209, %v181
  %v2225 = vmul.f32 %v2211, %v181
  %v2226 = vmul.f32 %v2213, %v181
  %v2227 = vmul.f32 %v2215, %v181
  %v2228 = vpack.c.bf16 %v2217, %v2216
  %v2229 = vpack.c.bf16 %v2219, %v2218
  %v2230 = vpack.c.bf16 %v2221, %v2220
  %v2231 = vpack.c.bf16 %v2223, %v2222
  %v2232 = vpack.c.bf16 %v2225, %v2224
  %v2233 = vpack.c.bf16 %v2227, %v2226
  %2234 = vst [vmem:[#allocation2 + $0xc0] sm:$0xff] %v2228
  %2235 = vst [vmem:[#allocation2 + $0xe0] sm:$0xff] %v2229
  %2236 = vst [vmem:[#allocation2 + $0x100] sm:$0xff] %v2230
  %2237 = vst [vmem:[#allocation2 + $0x120] sm:$0xff] %v2231
  %2238 = vst [vmem:[#allocation2 + $0x140] sm:$0xff] %v2232
  %2239 = vst [vmem:[#allocation2 + $0x160] sm:$0xff] %v2233
  %2240 = vrot.lane.b32.xlu0 %v2114, 7
  %v2241 = vpop.permute.xlu0 %2240
  %2242 = vrot.lane.b32.xlu0 %v2117, 7
  %v2243 = vpop.permute.xlu0 %2242
  %2244 = vrot.lane.b32.xlu0 %v2122, 7
  %v2245 = vpop.permute.xlu0 %2244
  %2246 = vrot.lane.b32.xlu0 %v2125, 7
  %v2247 = vpop.permute.xlu0 %2246
  %2248 = vrot.lane.b32.xlu0 %v2130, 7
  %v2249 = vpop.permute.xlu0 %2248
  %2250 = vrot.lane.b32.xlu0 %v2133, 7
  %v2251 = vpop.permute.xlu0 %2250
  %2252 = vrot.lane.b32.xlu0 %v2138, 7
  %v2253 = vpop.permute.xlu0 %2252
  %2254 = vrot.lane.b32.xlu0 %v2141, 7
  %v2255 = vpop.permute.xlu0 %2254
  %2256 = vrot.lane.b32.xlu0 %v1307, 7
  %v2257 = vpop.permute.xlu0 %2256
  %2258 = vrot.lane.b32.xlu0 %v1308, 7
  %v2259 = vpop.permute.xlu0 %2258
  %2260 = vrot.lane.b32.xlu0 %v1309, 7
  %v2261 = vpop.permute.xlu0 %2260
  %2262 = vrot.lane.b32.xlu0 %v1310, 7
  %v2263 = vpop.permute.xlu0 %2262
  %v2264 = vmul.f32 %v2241, %v184
  %v2265 = vmul.f32 %v2243, %v184
  %v2266 = vmul.f32 %v2245, %v184
  %v2267 = vmul.f32 %v2247, %v184
  %v2268 = vmul.f32 %v2249, %v184
  %v2269 = vmul.f32 %v2251, %v184
  %v2270 = vmul.f32 %v2253, %v184
  %v2271 = vmul.f32 %v2255, %v184
  %v2272 = vmul.f32 %v2257, %v184
  %v2273 = vmul.f32 %v2259, %v184
  %v2274 = vmul.f32 %v2261, %v184
  %v2275 = vmul.f32 %v2263, %v184
  %v2276 = vpack.c.bf16 %v2265, %v2264
  %v2277 = vpack.c.bf16 %v2267, %v2266
  %v2278 = vpack.c.bf16 %v2269, %v2268
  %v2279 = vpack.c.bf16 %v2271, %v2270
  %v2280 = vpack.c.bf16 %v2273, %v2272
  %v2281 = vpack.c.bf16 %v2275, %v2274
  %2282 = vst [vmem:[#allocation2 + $0x180] sm:$0xff] %v2276
  %2283 = vst [vmem:[#allocation2 + $0x1a0] sm:$0xff] %v2277
  %2284 = vst [vmem:[#allocation2 + $0x1c0] sm:$0xff] %v2278
  %2285 = vst [vmem:[#allocation2 + $0x1e0] sm:$0xff] %v2279
  %2286 = vst [vmem:[#allocation2 + $0x200] sm:$0xff] %v2280
  %2287 = vst [vmem:[#allocation2 + $0x220] sm:$0xff] %v2281
  %2288 = vrot.lane.b32.xlu0 %v2114, 1
  %v2289 = vpop.permute.xlu0 %2288
  %2290 = vrot.lane.b32.xlu0 %v2117, 1
  %v2291 = vpop.permute.xlu0 %2290
  %2292 = vrot.lane.b32.xlu0 %v2122, 1
  %v2293 = vpop.permute.xlu0 %2292
  %2294 = vrot.lane.b32.xlu0 %v2125, 1
  %v2295 = vpop.permute.xlu0 %2294
  %2296 = vrot.lane.b32.xlu0 %v2130, 1
  %v2297 = vpop.permute.xlu0 %2296
  %2298 = vrot.lane.b32.xlu0 %v2133, 1
  %v2299 = vpop.permute.xlu0 %2298
  %2300 = vrot.lane.b32.xlu0 %v2138, 1
  %v2301 = vpop.permute.xlu0 %2300
  %2302 = vrot.lane.b32.xlu0 %v2141, 1
  %v2303 = vpop.permute.xlu0 %2302
  %2304 = vrot.lane.b32.xlu0 %v1307, 1
  %v2305 = vpop.permute.xlu0 %2304
  %2306 = vrot.lane.b32.xlu0 %v1308, 1
  %v2307 = vpop.permute.xlu0 %2306
  %2308 = vrot.lane.b32.xlu0 %v1309, 1
  %v2309 = vpop.permute.xlu0 %2308
  %2310 = vrot.lane.b32.xlu0 %v1310, 1
  %v2311 = vpop.permute.xlu0 %2310
  %v2312 = vmul.f32 %v2289, %v186
  %v2313 = vmul.f32 %v2291, %v186
  %v2314 = vmul.f32 %v2293, %v186
  %v2315 = vmul.f32 %v2295, %v186
  %v2316 = vmul.f32 %v2297, %v186
  %v2317 = vmul.f32 %v2299, %v186
  %v2318 = vmul.f32 %v2301, %v186
  %v2319 = vmul.f32 %v2303, %v186
  %v2320 = vmul.f32 %v2305, %v186
  %v2321 = vmul.f32 %v2307, %v186
  %v2322 = vmul.f32 %v2309, %v186
  %v2323 = vmul.f32 %v2311, %v186
  %v2324 = vpack.c.bf16 %v2313, %v2312
  %v2325 = vpack.c.bf16 %v2315, %v2314
  %v2326 = vpack.c.bf16 %v2317, %v2316
  %v2327 = vpack.c.bf16 %v2319, %v2318
  %v2328 = vpack.c.bf16 %v2321, %v2320
  %v2329 = vpack.c.bf16 %v2323, %v2322
  %2330 = vst [vmem:[#allocation2 + $0x240] sm:$0xff] %v2324
  %2331 = vst [vmem:[#allocation2 + $0x260] sm:$0xff] %v2325
  %2332 = vst [vmem:[#allocation2 + $0x280] sm:$0xff] %v2326
  %2333 = vst [vmem:[#allocation2 + $0x2a0] sm:$0xff] %v2327
  %2334 = vst [vmem:[#allocation2 + $0x2c0] sm:$0xff] %v2328
  %2335 = vst [vmem:[#allocation2 + $0x2e0] sm:$0xff] %v2329
  %v2336 = vpack.c.bf16 %v2117, %v2114
  %v2337 = vpack.c.bf16 %v2125, %v2122
  %v2338 = vpack.c.bf16 %v2133, %v2130
  %v2339 = vpack.c.bf16 %v2141, %v2138
  %v2340 = vpack.c.bf16 %v1308, %v1307
  %v2341 = vpack.c.bf16 %v1310, %v1309
  %2342 = vst [vmem:[#allocation2 + $0x300] sm:$0xff] %v2336
  %2343 = vst [vmem:[#allocation2 + $0x320] sm:$0xff] %v2337
  %2344 = vst [vmem:[#allocation2 + $0x340] sm:$0xff] %v2338
  %2345 = vst [vmem:[#allocation2 + $0x360] sm:$0xff] %v2339
  %2346 = vst [vmem:[#allocation2 + $0x380] sm:$0xff] %v2340
  %2347 = vst [vmem:[#allocation2 + $0x3a0] sm:$0xff] %v2341
  %2348 = vrot.lane.b32.xlu0 %v2114, 127
  %v2349 = vpop.permute.xlu0 %2348
  %2350 = vrot.lane.b32.xlu0 %v2117, 127
  %v2351 = vpop.permute.xlu0 %2350
  %2352 = vrot.lane.b32.xlu0 %v2122, 127
  %v2353 = vpop.permute.xlu0 %2352
  %2354 = vrot.lane.b32.xlu0 %v2125, 127
  %v2355 = vpop.permute.xlu0 %2354
  %2356 = vrot.lane.b32.xlu0 %v2130, 127
  %v2357 = vpop.permute.xlu0 %2356
  %2358 = vrot.lane.b32.xlu0 %v2133, 127
  %v2359 = vpop.permute.xlu0 %2358
  %2360 = vrot.lane.b32.xlu0 %v2138, 127
  %v2361 = vpop.permute.xlu0 %2360
  %2362 = vrot.lane.b32.xlu0 %v2141, 127
  %v2363 = vpop.permute.xlu0 %2362
  %v2364 = vmul.f32 %v2349, %v188
  %v2365 = vmul.f32 %v2351, %v188
  %v2366 = vmul.f32 %v2353, %v188
  %v2367 = vmul.f32 %v2355, %v188
  %v2368 = vmul.f32 %v2357, %v188
  %v2369 = vmul.f32 %v2359, %v188
  %v2370 = vmul.f32 %v2361, %v188
  %v2371 = vmul.f32 %v2363, %v188
  %v2372 = vmul.f32 %v1312, %v188
  %v2373 = vmul.f32 %v1314, %v188
  %v2374 = vmul.f32 %v1316, %v188
  %v2375 = vmul.f32 %v1318, %v188
  %v2376 = vpack.c.bf16 %v2365, %v2364
  %v2377 = vpack.c.bf16 %v2367, %v2366
  %v2378 = vpack.c.bf16 %v2369, %v2368
  %v2379 = vpack.c.bf16 %v2371, %v2370
  %v2380 = vpack.c.bf16 %v2373, %v2372
  %v2381 = vpack.c.bf16 %v2375, %v2374
  %2382 = vst [vmem:[#allocation2 + $0x3c0] sm:$0xff] %v2376
  %2383 = vst [vmem:[#allocation2 + $0x3e0] sm:$0xff] %v2377
  %2384 = vst [vmem:[#allocation2 + $0x400] sm:$0xff] %v2378
  %2385 = vst [vmem:[#allocation2 + $0x420] sm:$0xff] %v2379
  %2386 = vst [vmem:[#allocation2 + $0x440] sm:$0xff] %v2380
  %2387 = vst [vmem:[#allocation2 + $0x460] sm:$0xff] %v2381
  %2388 = vrot.lane.b32.xlu0 %v2114, 121
  %v2389 = vpop.permute.xlu0 %2388
  %2390 = vrot.lane.b32.xlu0 %v2117, 121
  %v2391 = vpop.permute.xlu0 %2390
  %2392 = vrot.lane.b32.xlu0 %v2122, 121
  %v2393 = vpop.permute.xlu0 %2392
  %2394 = vrot.lane.b32.xlu0 %v2125, 121
  %v2395 = vpop.permute.xlu0 %2394
  %2396 = vrot.lane.b32.xlu0 %v2130, 121
  %v2397 = vpop.permute.xlu0 %2396
  %2398 = vrot.lane.b32.xlu0 %v2133, 121
  %v2399 = vpop.permute.xlu0 %2398
  %2400 = vrot.lane.b32.xlu0 %v2138, 121
  %v2401 = vpop.permute.xlu0 %2400
  %2402 = vrot.lane.b32.xlu0 %v2141, 121
  %v2403 = vpop.permute.xlu0 %2402
  %2404 = vrot.lane.b32.xlu0 %v1307, 121
  %v2405 = vpop.permute.xlu0 %2404
  %2406 = vrot.lane.b32.xlu0 %v1308, 121
  %v2407 = vpop.permute.xlu0 %2406
  %2408 = vrot.lane.b32.xlu0 %v1309, 121
  %v2409 = vpop.permute.xlu0 %2408
  %2410 = vrot.lane.b32.xlu0 %v1310, 121
  %v2411 = vpop.permute.xlu0 %2410
  %v2412 = vmul.f32 %v2389, %v191
  %v2413 = vmul.f32 %v2391, %v191
  %v2414 = vmul.f32 %v2393, %v191
  %v2415 = vmul.f32 %v2395, %v191
  %v2416 = vmul.f32 %v2397, %v191
  %v2417 = vmul.f32 %v2399, %v191
  %v2418 = vmul.f32 %v2401, %v191
  %v2419 = vmul.f32 %v2403, %v191
  %v2420 = vmul.f32 %v2405, %v191
  %v2421 = vmul.f32 %v2407, %v191
  %v2422 = vmul.f32 %v2409, %v191
  %v2423 = vmul.f32 %v2411, %v191
  %v2424 = vpack.c.bf16 %v2413, %v2412
  %v2425 = vpack.c.bf16 %v2415, %v2414
  %v2426 = vpack.c.bf16 %v2417, %v2416
  %v2427 = vpack.c.bf16 %v2419, %v2418
  %v2428 = vpack.c.bf16 %v2421, %v2420
  %v2429 = vpack.c.bf16 %v2423, %v2422
  %2430 = vst [vmem:[#allocation2 + $0x480] sm:$0xff] %v2424
  %2431 = vst [vmem:[#allocation2 + $0x4a0] sm:$0xff] %v2425
  %2432 = vst [vmem:[#allocation2 + $0x4c0] sm:$0xff] %v2426
  %2433 = vst [vmem:[#allocation2 + $0x4e0] sm:$0xff] %v2427
  %2434 = vst [vmem:[#allocation2 + $0x500] sm:$0xff] %v2428
  %2435 = vst [vmem:[#allocation2 + $0x520] sm:$0xff] %v2429
  %2436 = vrot.lane.b32.xlu0 %v2114, 120
  %v2437 = vpop.permute.xlu0 %2436
  %2438 = vrot.lane.b32.xlu0 %v2117, 120
  %v2439 = vpop.permute.xlu0 %2438
  %2440 = vrot.lane.b32.xlu0 %v2122, 120
  %v2441 = vpop.permute.xlu0 %2440
  %2442 = vrot.lane.b32.xlu0 %v2125, 120
  %v2443 = vpop.permute.xlu0 %2442
  %2444 = vrot.lane.b32.xlu0 %v2130, 120
  %v2445 = vpop.permute.xlu0 %2444
  %2446 = vrot.lane.b32.xlu0 %v2133, 120
  %v2447 = vpop.permute.xlu0 %2446
  %2448 = vrot.lane.b32.xlu0 %v2138, 120
  %v2449 = vpop.permute.xlu0 %2448
  %2450 = vrot.lane.b32.xlu0 %v2141, 120
  %v2451 = vpop.permute.xlu0 %2450
  %2452 = vrot.lane.b32.xlu0 %v1307, 120
  %v2453 = vpop.permute.xlu0 %2452
  %2454 = vrot.lane.b32.xlu0 %v1308, 120
  %v2455 = vpop.permute.xlu0 %2454
  %2456 = vrot.lane.b32.xlu0 %v1309, 120
  %v2457 = vpop.permute.xlu0 %2456
  %2458 = vrot.lane.b32.xlu0 %v1310, 120
  %v2459 = vpop.permute.xlu0 %2458
  %v2460 = vmul.f32 %v2437, %v193
  %v2461 = vmul.f32 %v2439, %v193
  %v2462 = vmul.f32 %v2441, %v193
  %v2463 = vmul.f32 %v2443, %v193
  %v2464 = vmul.f32 %v2445, %v193
  %v2465 = vmul.f32 %v2447, %v193
  %v2466 = vmul.f32 %v2449, %v193
  %v2467 = vmul.f32 %v2451, %v193
  %v2468 = vmul.f32 %v2453, %v193
  %v2469 = vmul.f32 %v2455, %v193
  %v2470 = vmul.f32 %v2457, %v193
  %v2471 = vmul.f32 %v2459, %v193
  %v2472 = vpack.c.bf16 %v2461, %v2460
  %v2473 = vpack.c.bf16 %v2463, %v2462
  %v2474 = vpack.c.bf16 %v2465, %v2464
  %v2475 = vpack.c.bf16 %v2467, %v2466
  %v2476 = vpack.c.bf16 %v2469, %v2468
  %v2477 = vpack.c.bf16 %v2471, %v2470
  %2478 = vst [vmem:[#allocation2 + $0x540] sm:$0xff] %v2472
  %2479 = vst [vmem:[#allocation2 + $0x560] sm:$0xff] %v2473
  %2480 = vst [vmem:[#allocation2 + $0x580] sm:$0xff] %v2474
  %2481 = vst [vmem:[#allocation2 + $0x5a0] sm:$0xff] %v2475
  %2482 = vst [vmem:[#allocation2 + $0x5c0] sm:$0xff] %v2476
  %2483 = vst [vmem:[#allocation2 + $0x5e0] sm:$0xff] %v2477
  %2484 = vrot.lane.b32.xlu0 %v2114, 119
  %v2485 = vpop.permute.xlu0 %2484
  %2486 = vrot.lane.b32.xlu0 %v2117, 119
  %v2487 = vpop.permute.xlu0 %2486
  %2488 = vrot.lane.b32.xlu0 %v2122, 119
  %v2489 = vpop.permute.xlu0 %2488
  %2490 = vrot.lane.b32.xlu0 %v2125, 119
  %v2491 = vpop.permute.xlu0 %2490
  %2492 = vrot.lane.b32.xlu0 %v2130, 119
  %v2493 = vpop.permute.xlu0 %2492
  %2494 = vrot.lane.b32.xlu0 %v2133, 119
  %v2495 = vpop.permute.xlu0 %2494
  %2496 = vrot.lane.b32.xlu0 %v2138, 119
  %v2497 = vpop.permute.xlu0 %2496
  %2498 = vrot.lane.b32.xlu0 %v2141, 119
  %v2499 = vpop.permute.xlu0 %2498
  %2500 = vrot.lane.b32.xlu0 %v1307, 119
  %v2501 = vpop.permute.xlu0 %2500
  %2502 = vrot.lane.b32.xlu0 %v1308, 119
  %v2503 = vpop.permute.xlu0 %2502
  %2504 = vrot.lane.b32.xlu0 %v1309, 119
  %v2505 = vpop.permute.xlu0 %2504
  %2506 = vrot.lane.b32.xlu0 %v1310, 119
  %v2507 = vpop.permute.xlu0 %2506
  %v2508 = vmul.f32 %v2485, %v196
  %v2509 = vmul.f32 %v2487, %v196
  %v2510 = vmul.f32 %v2489, %v196
  %v2511 = vmul.f32 %v2491, %v196
  %v2512 = vmul.f32 %v2493, %v196
  %v2513 = vmul.f32 %v2495, %v196
  %v2514 = vmul.f32 %v2497, %v196
  %v2515 = vmul.f32 %v2499, %v196
  %v2516 = vmul.f32 %v2501, %v196
  %v2517 = vmul.f32 %v2503, %v196
  %v2518 = vmul.f32 %v2505, %v196
  %v2519 = vmul.f32 %v2507, %v196
  %v2520 = vpack.c.bf16 %v2509, %v2508
  %v2521 = vpack.c.bf16 %v2511, %v2510
  %v2522 = vpack.c.bf16 %v2513, %v2512
  %v2523 = vpack.c.bf16 %v2515, %v2514
  %v2524 = vpack.c.bf16 %v2517, %v2516
  %v2525 = vpack.c.bf16 %v2519, %v2518
  %2526 = vst [vmem:[#allocation2 + $0x600] sm:$0xff] %v2520
  %2527 = vst [vmem:[#allocation2 + $0x620] sm:$0xff] %v2521
  %2528 = vst [vmem:[#allocation2 + $0x640] sm:$0xff] %v2522
  %2529 = vst [vmem:[#allocation2 + $0x660] sm:$0xff] %v2523
  %2530 = vst [vmem:[#allocation2 + $0x680] sm:$0xff] %v2524
  %2531 = vst [vmem:[#allocation2 + $0x6a0] sm:$0xff] %v2525
  %v2532 = vld [vmem:[%s7] sm:$0xff]
  %v2533 = vld [vmem:[%s7 + $0x8] sm:$0xff]
  %v2534 = vld [vmem:[%s7 + $0x10] sm:$0xff]
  %v2535 = vld [vmem:[%s7 + $0x18] sm:$0xf]
  %v2536 = vld [vmem:[%s7 + $0x1c] sm:$0xff]
  %v2537 = vld [vmem:[%s7 + $0x24] sm:$0xff]
  %v2538 = vld [vmem:[%s7 + $0x2c] sm:$0xff]
  %v2539 = vld [vmem:[%s7 + $0x34] sm:$0xf]
  %v2540 = vld [vmem:[%s7 + $0x38] sm:$0xff]
  %v2541 = vld [vmem:[%s7 + $0x40] sm:$0xff]
  %v2542 = vld [vmem:[%s7 + $0x48] sm:$0xff]
  %v2543 = vld [vmem:[%s7 + $0x50] sm:$0xf]
  %v2544 = vld [vmem:[%s7 + $0x54] sm:$0xff]
  %v2545 = vld [vmem:[%s7 + $0x5c] sm:$0xff]
  %v2546 = vld [vmem:[%s7 + $0x64] sm:$0xff]
  %v2547 = vld [vmem:[%s7 + $0x6c] sm:$0xf]
  %v2548 = vld [vmem:[#allocation2] sm:$0xff]
  %v2549 = vld [vmem:[#allocation2 + $0x20] sm:$0xff]
  %v2550 = vld [vmem:[#allocation2 + $0x40] sm:$0xff]
  %v2551 = vld [vmem:[#allocation2 + $0x60] sm:$0xff]
  %v2552 = vld [vmem:[#allocation2 + $0x80] sm:$0xff]
  %v2553 = vld [vmem:[#allocation2 + $0xa0] sm:$0xff]
  %v2554 = vld [vmem:[#allocation2 + $0xc0] sm:$0xff]
  %v2555 = vld [vmem:[#allocation2 + $0xe0] sm:$0xff]
  %v2556 = vld [vmem:[#allocation2 + $0x100] sm:$0xff]
  %v2557 = vld [vmem:[#allocation2 + $0x120] sm:$0xff]
  %v2558 = vld [vmem:[#allocation2 + $0x140] sm:$0xff]
  %v2559 = vld [vmem:[#allocation2 + $0x160] sm:$0xff]
  %v2560 = vld [vmem:[#allocation2 + $0x180] sm:$0xff]
  %v2561 = vld [vmem:[#allocation2 + $0x1a0] sm:$0xff]
  %v2562 = vld [vmem:[#allocation2 + $0x1c0] sm:$0xff]
  %v2563 = vld [vmem:[#allocation2 + $0x1e0] sm:$0xff]
  %v2564 = vld [vmem:[#allocation2 + $0x200] sm:$0xff]
  %v2565 = vld [vmem:[#allocation2 + $0x220] sm:$0xff]
  %v2566 = vld [vmem:[#allocation2 + $0x240] sm:$0xff]
  %v2567 = vld [vmem:[#allocation2 + $0x260] sm:$0xff]
  %v2568 = vld [vmem:[#allocation2 + $0x280] sm:$0xff]
  %v2569 = vld [vmem:[#allocation2 + $0x2a0] sm:$0xff]
  %v2570 = vld [vmem:[#allocation2 + $0x2c0] sm:$0xff]
  %v2571 = vld [vmem:[#allocation2 + $0x2e0] sm:$0xff]
  %v2572 = vld [vmem:[#allocation2 + $0x300] sm:$0xff]
  %v2573 = vld [vmem:[#allocation2 + $0x320] sm:$0xff]
  %v2574 = vld [vmem:[#allocation2 + $0x340] sm:$0xff]
  %v2575 = vld [vmem:[#allocation2 + $0x360] sm:$0xff]
  %v2576 = vld [vmem:[#allocation2 + $0x380] sm:$0xff]
  %v2577 = vld [vmem:[#allocation2 + $0x3a0] sm:$0xff]
  %v2578 = vld [vmem:[#allocation2 + $0x3c0] sm:$0xff]
  %v2579 = vld [vmem:[#allocation2 + $0x3e0] sm:$0xff]
  %v2580 = vld [vmem:[#allocation2 + $0x400] sm:$0xff]
  %v2581 = vld [vmem:[#allocation2 + $0x420] sm:$0xff]
  %v2582 = vld [vmem:[#allocation2 + $0x440] sm:$0xff]
  %v2583 = vld [vmem:[#allocation2 + $0x460] sm:$0xff]
  %v2584 = vld [vmem:[#allocation2 + $0x480] sm:$0xff]
  %v2585 = vld [vmem:[#allocation2 + $0x4a0] sm:$0xff]
  %v2586 = vld [vmem:[#allocation2 + $0x4c0] sm:$0xff]
  %v2587 = vld [vmem:[#allocation2 + $0x4e0] sm:$0xff]
  %v2588 = vld [vmem:[#allocation2 + $0x500] sm:$0xff]
  %v2589 = vld [vmem:[#allocation2 + $0x520] sm:$0xff]
  %v2590 = vld [vmem:[#allocation2 + $0x540] sm:$0xff]
  %v2591 = vld [vmem:[#allocation2 + $0x560] sm:$0xff]
  %v2592 = vld [vmem:[#allocation2 + $0x580] sm:$0xff]
  %v2593 = vld [vmem:[#allocation2 + $0x5a0] sm:$0xff]
  %v2594 = vld [vmem:[#allocation2 + $0x5c0] sm:$0xff]
  %v2595 = vld [vmem:[#allocation2 + $0x5e0] sm:$0xff]
  %v2596 = vld [vmem:[#allocation2 + $0x600] sm:$0xff]
  %v2597 = vld [vmem:[#allocation2 + $0x620] sm:$0xff]
  %v2598 = vld [vmem:[#allocation2 + $0x640] sm:$0xff]
  %v2599 = vld [vmem:[#allocation2 + $0x660] sm:$0xff]
  %v2600 = vld [vmem:[#allocation2 + $0x680] sm:$0xff]
  %v2601 = vld [vmem:[#allocation2 + $0x6a0] sm:$0xff]
  %v2602 = vld [vmem:[%s8] sm:$0xff]
  %v2603 = vld [vmem:[%s8 + $0x8] sm:$0xff]
  %v2604 = vld [vmem:[%s8 + $0x10] sm:$0xff]
  %v2605 = vld [vmem:[%s8 + $0x18] sm:$0xff]
  %2607 = vset.pattern.permute.xlu0 0
  %2608 = vperm.xlu0 %2607, %v2602
  %v2609 = vpop.permute.xlu0 %2608
  %2612 = vset.pattern.permute.xlu0 0
  %2613 = vperm.xlu0 %2612, %v2603
  %v2614 = vpop.permute.xlu0 %2613
  %2617 = vset.pattern.permute.xlu0 0
  %2618 = vperm.xlu0 %2617, %v2604
  %v2619 = vpop.permute.xlu0 %2618
  %2622 = vset.pattern.permute.xlu0 0
  %2623 = vperm.xlu0 %2622, %v2605
  %v2624 = vpop.permute.xlu0 %2623
  %v2642 = vunpack.c.l.b16 %v2532
  %v2643 = vunpack.c.h.b16 %v2532
  %v2644 = vunpack.c.l.b16 %v2533
  %v2645 = vunpack.c.h.b16 %v2533
  %v2646 = vunpack.c.l.b16 %v2534
  %v2647 = vunpack.c.h.b16 %v2534
  %v2648 = vunpack.c.l.b16 %v2535
  %v2649 = vunpack.c.l.b16 %v2536
  %v2650 = vunpack.c.h.b16 %v2536
  %v2651 = vunpack.c.l.b16 %v2537
  %v2652 = vunpack.c.h.b16 %v2537
  %v2653 = vunpack.c.l.b16 %v2538
  %v2654 = vunpack.c.h.b16 %v2538
  %v2655 = vunpack.c.l.b16 %v2539
  %v2656 = vunpack.c.l.b16 %v2540
  %v2657 = vunpack.c.h.b16 %v2540
  %v2658 = vunpack.c.l.b16 %v2541
  %v2659 = vunpack.c.h.b16 %v2541
  %v2660 = vunpack.c.l.b16 %v2542
  %v2661 = vunpack.c.h.b16 %v2542
  %v2662 = vunpack.c.l.b16 %v2543
  %v2663 = vunpack.c.l.b16 %v2544
  %v2664 = vunpack.c.h.b16 %v2544
  %v2665 = vunpack.c.l.b16 %v2545
  %v2666 = vunpack.c.h.b16 %v2545
  %v2667 = vunpack.c.l.b16 %v2546
  %v2668 = vunpack.c.h.b16 %v2546
  %v2669 = vunpack.c.l.b16 %v2547
  %v2670 = vpack.c.b16 %v2649, %v2642
  %v2671 = vpack.c.b16 %v2650, %v2643
  %v2672 = vpack.c.b16 %v2651, %v2644
  %v2673 = vpack.c.b16 %v2652, %v2645
  %v2674 = vpack.c.b16 %v2653, %v2646
  %v2675 = vpack.c.b16 %v2654, %v2647
  %v2676 = vpack.c.b16 %v2655, %v2648
  %v2677 = vpack.c.b16 %v2663, %v2656
  %v2678 = vpack.c.b16 %v2664, %v2657
  %v2679 = vpack.c.b16 %v2665, %v2658
  %v2680 = vpack.c.b16 %v2666, %v2659
  %v2681 = vpack.c.b16 %v2667, %v2660
  %v2682 = vpack.c.b16 %v2668, %v2661
  %v2683 = vpack.c.b16 %v2669, %v2662
  %vm2696 = vcmask 785408
  %v2698 = vsel %vm2696, %v2676, 0
  %v2701 = vsel %vm2696, %v2683, 0
  %2703 = vmatprep.subr.bf16.mxu0 0
  %2704 = vmatpush1.bf16.msra.mxu0 %v2548
  %2705 = vmatprep.subr.bf16.mxu0 0
  %2706 = vmatpush1.bf16.msra.mxu0 %v2549
  %2707 = vmatprep.subr.bf16.mxu0 0
  %2708 = vmatpush1.bf16.msra.mxu0 %v2550
  %2709 = vmatprep.subr.bf16.mxu0 0
  %2710 = vmatpush1.bf16.msra.mxu0 %v2551
  %2711 = vmatprep.subr.bf16.mxu0 0
  %2712 = vmatpush1.bf16.msra.mxu0 %v2552
  %2713 = vmatprep.subr.bf16.mxu0 0
  %2714 = vmatpush1.bf16.msra.mxu0 %v2553
  %2715 = vmatprep.subr.bf16.mxu0 0
  %2716 = vmatpush1.bf16.msra.mxu0 %v2554
  %2717 = vmatprep.subr.bf16.mxu0 0
  %2718 = vmatpush1.bf16.msra.mxu0 %v2555
  %2719 = vmatprep.subr.bf16.mxu0 0
  %2720 = vmatpush1.bf16.msra.mxu0 %v2556
  %2721 = vmatprep.subr.bf16.mxu0 0
  %2722 = vmatpush1.bf16.msra.mxu0 %v2557
  %2723 = vmatprep.subr.bf16.mxu0 0
  %2724 = vmatpush1.bf16.msra.mxu0 %v2558
  %2725 = vmatprep.subr.bf16.mxu0 0
  %2726 = vmatpush1.bf16.msra.mxu0 %v2559
  %2727 = vmatprep.subr.bf16.mxu0 0
  %2728 = vmatpush1.bf16.msra.mxu0 %v2560
  %2729 = vmatprep.subr.bf16.mxu0 0
  %2730 = vmatpush1.bf16.msra.mxu0 %v2561
  %2731 = vmatprep.subr.bf16.mxu0 0
  %2732 = vmatpush1.bf16.msra.mxu0 %v2562
  %2733 = vmatprep.subr.bf16.mxu0 0
  %2734 = vmatpush1.bf16.msra.mxu0 %v2563
  %2735 = vmatprep.mubr.bf16.mxu0 %v2671
  %2736 = vmatmul.mubr.bf16.gmra.mrb[0].mxu0 %v2670
  %v2737 = vpop.f32.mrb[0].mxu0
  %v2738 = vadd.f32 %v2609, %v2737
  %v2739 = vpop.f32.mrb[0].mxu0
  %v2740 = vpop.f32.mrb[0].mxu0
  %v2741 = vadd.f32 %v2614, %v2740
  %v2742 = vpop.f32.mrb[0].mxu0
  %2743 = vmatprep.mubr.bf16.mxu0 %v2678
  %2744 = vmatmul.mubr.bf16.gmra.mrb[0].mxu0 %v2677
  %v2745 = vpop.f32.mrb[0].mxu0
  %v2746 = vadd.f32 %v2619, %v2745
  %v2747 = vpop.f32.mrb[0].mxu0
  %v2748 = vpop.f32.mrb[0].mxu0
  %v2749 = vadd.f32 %v2624, %v2748
  %v2750 = vpop.f32.mrb[0].mxu0
  %2751 = vdwg.mxu0
  %2752 = vmatprep.subr.bf16.mxu0 0
  %2753 = vmatpush1.bf16.msra.mxu0 %v2564
  %2754 = vmatprep.subr.bf16.mxu0 0
  %2755 = vmatpush1.bf16.msra.mxu0 %v2565
  %2756 = vmatprep.subr.bf16.mxu0 0
  %2757 = vmatpush1.bf16.msra.mxu0 %v2566
  %2758 = vmatprep.subr.bf16.mxu0 0
  %2759 = vmatpush1.bf16.msra.mxu0 %v2567
  %2760 = vmatprep.subr.bf16.mxu0 0
  %2761 = vmatpush1.bf16.msra.mxu0 %v2568
  %2762 = vmatprep.subr.bf16.mxu0 0
  %2763 = vmatpush1.bf16.msra.mxu0 %v2569
  %2764 = vmatprep.subr.bf16.mxu0 0
  %2765 = vmatpush1.bf16.msra.mxu0 %v2570
  %2766 = vmatprep.subr.bf16.mxu0 0
  %2767 = vmatpush1.bf16.msra.mxu0 %v2571
  %2768 = vmatprep.subr.bf16.mxu0 0
  %2769 = vmatpush1.bf16.msra.mxu0 %v2572
  %2770 = vmatprep.subr.bf16.mxu0 0
  %2771 = vmatpush1.bf16.msra.mxu0 %v2573
  %2772 = vmatprep.subr.bf16.mxu0 0
  %2773 = vmatpush1.bf16.msra.mxu0 %v2574
  %2774 = vmatprep.subr.bf16.mxu0 0
  %2775 = vmatpush1.bf16.msra.mxu0 %v2575
  %2776 = vmatprep.subr.bf16.mxu0 0
  %2777 = vmatpush1.bf16.msra.mxu0 %v2576
  %2778 = vmatprep.subr.bf16.mxu0 0
  %2779 = vmatpush1.bf16.msra.mxu0 %v2577
  %2780 = vmatprep.subr.bf16.mxu0 0
  %2781 = vmatpush1.bf16.msra.mxu0 %v2578
  %2782 = vmatprep.subr.bf16.mxu0 0
  %2783 = vmatpush1.bf16.msra.mxu0 %v2579
  %2784 = vmatprep.mubr.bf16.mxu0 %v2673
  %2785 = vmatmul.mubr.bf16.gmra.mrb[0].mxu0 %v2672
  %v2786 = vpop.f32.mrb[0].mxu0
  %v2787 = vadd.f32 %v2738, %v2786
  %v2788 = vpop.f32.mrb[0].mxu0
  %v2789 = vpop.f32.mrb[0].mxu0
  %v2790 = vadd.f32 %v2741, %v2789
  %v2791 = vpop.f32.mrb[0].mxu0
  %2792 = vmatprep.mubr.bf16.mxu0 %v2680
  %2793 = vmatmul.mubr.bf16.gmra.mrb[0].mxu0 %v2679
  %v2794 = vpop.f32.mrb[0].mxu0
  %v2795 = vadd.f32 %v2746, %v2794
  %v2796 = vpop.f32.mrb[0].mxu0
  %v2797 = vpop.f32.mrb[0].mxu0
  %v2798 = vadd.f32 %v2749, %v2797
  %v2799 = vpop.f32.mrb[0].mxu0
  %2800 = vdwg.mxu0
  %2801 = vmatprep.subr.bf16.mxu0 0
  %2802 = vmatpush1.bf16.msra.mxu0 %v2580
  %2803 = vmatprep.subr.bf16.mxu0 0
  %2804 = vmatpush1.bf16.msra.mxu0 %v2581
  %2805 = vmatprep.subr.bf16.mxu0 0
  %2806 = vmatpush1.bf16.msra.mxu0 %v2582
  %2807 = vmatprep.subr.bf16.mxu0 0
  %2808 = vmatpush1.bf16.msra.mxu0 %v2583
  %2809 = vmatprep.subr.bf16.mxu0 0
  %2810 = vmatpush1.bf16.msra.mxu0 %v2584
  %2811 = vmatprep.subr.bf16.mxu0 0
  %2812 = vmatpush1.bf16.msra.mxu0 %v2585
  %2813 = vmatprep.subr.bf16.mxu0 0
  %2814 = vmatpush1.bf16.msra.mxu0 %v2586
  %2815 = vmatprep.subr.bf16.mxu0 0
  %2816 = vmatpush1.bf16.msra.mxu0 %v2587
  %2817 = vmatprep.subr.bf16.mxu0 0
  %2818 = vmatpush1.bf16.msra.mxu0 %v2588
  %2819 = vmatprep.subr.bf16.mxu0 0
  %2820 = vmatpush1.bf16.msra.mxu0 %v2589
  %2821 = vmatprep.subr.bf16.mxu0 0
  %2822 = vmatpush1.bf16.msra.mxu0 %v2590
  %2823 = vmatprep.subr.bf16.mxu0 0
  %2824 = vmatpush1.bf16.msra.mxu0 %v2591
  %2825 = vmatprep.subr.bf16.mxu0 0
  %2826 = vmatpush1.bf16.msra.mxu0 %v2592
  %2827 = vmatprep.subr.bf16.mxu0 0
  %2828 = vmatpush1.bf16.msra.mxu0 %v2593
  %2829 = vmatprep.subr.bf16.mxu0 0
  %2830 = vmatpush1.bf16.msra.mxu0 %v2594
  %2831 = vmatprep.subr.bf16.mxu0 0
  %2832 = vmatpush1.bf16.msra.mxu0 %v2595
  %2833 = vmatprep.mubr.bf16.mxu0 %v2675
  %2834 = vmatmul.mubr.bf16.gmra.mrb[0].mxu0 %v2674
  %v2835 = vpop.f32.mrb[0].mxu0
  %v2836 = vadd.f32 %v2787, %v2835
  %v2837 = vpop.f32.mrb[0].mxu0
  %v2838 = vpop.f32.mrb[0].mxu0
  %v2839 = vadd.f32 %v2790, %v2838
  %v2840 = vpop.f32.mrb[0].mxu0
  %2841 = vmatprep.mubr.bf16.mxu0 %v2682
  %2842 = vmatmul.mubr.bf16.gmra.mrb[0].mxu0 %v2681
  %v2843 = vpop.f32.mrb[0].mxu0
  %v2844 = vadd.f32 %v2795, %v2843
  %v2845 = vpop.f32.mrb[0].mxu0
  %v2846 = vpop.f32.mrb[0].mxu0
  %v2847 = vadd.f32 %v2798, %v2846
  %v2848 = vpop.f32.mrb[0].mxu0
  %2849 = vdwg.mxu0
  %2850 = vmatprep.subr.bf16.mxu0 0
  %2851 = vmatpush1.bf16.msra.mxu0 %v2596
  %2852 = vmatprep.subr.bf16.mxu0 0
  %2853 = vmatpush1.bf16.msra.mxu0 %v2597
  %2854 = vmatprep.subr.bf16.mxu0 0
  %2855 = vmatpush1.bf16.msra.mxu0 %v2598
  %2856 = vmatprep.subr.bf16.mxu0 0
  %2857 = vmatpush1.bf16.msra.mxu0 %v2599
  %2858 = vmatprep.subr.bf16.mxu0 0
  %2859 = vmatpush1.bf16.msra.mxu0 %v2600
  %2860 = vmatprep.subr.bf16.mxu0 0
  %2861 = vmatpush1.bf16.msra.mxu0 %v2601
  %2862 = vmatprep.subr.bf16.mxu0 0
  %2863 = vmatpush1.bf16.msra.mxu0 0
  %2864 = vmatprep.subr.bf16.mxu0 0
  %2865 = vmatpush1.bf16.msra.mxu0 0
  %2866 = vmatprep.subr.bf16.mxu0 0
  %2867 = vmatpush1.bf16.msra.mxu0 0
  %2868 = vmatprep.subr.bf16.mxu0 0
  %2869 = vmatpush1.bf16.msra.mxu0 0
  %2870 = vmatprep.subr.bf16.mxu0 0
  %2871 = vmatpush1.bf16.msra.mxu0 0
  %2872 = vmatprep.subr.bf16.mxu0 0
  %2873 = vmatpush1.bf16.msra.mxu0 0
  %2874 = vmatprep.subr.bf16.mxu0 0
  %2875 = vmatpush1.bf16.msra.mxu0 0
  %2876 = vmatprep.subr.bf16.mxu0 0
  %2877 = vmatpush1.bf16.msra.mxu0 0
  %2878 = vmatprep.subr.bf16.mxu0 0
  %2879 = vmatpush1.bf16.msra.mxu0 0
  %2880 = vmatprep.subr.bf16.mxu0 0
  %2881 = vmatpush1.bf16.msra.mxu0 0
  %2882 = vmatprep.mubr.bf16.mxu0 0
  %2883 = vmatmul.mubr.bf16.gmra.mrb[0].mxu0 %v2698
  %v2884 = vpop.f32.mrb[0].mxu0
  %v2885 = vadd.f32 %v2836, %v2884
  %v2886 = vpop.f32.mrb[0].mxu0
  %v2887 = vpop.f32.mrb[0].mxu0
  %v2888 = vadd.f32 %v2839, %v2887
  %v2889 = vpop.f32.mrb[0].mxu0
  %2890 = vmatprep.mubr.bf16.mxu0 0
  %2891 = vmatmul.mubr.bf16.gmra.mrb[0].mxu0 %v2701
  %v2892 = vpop.f32.mrb[0].mxu0
  %v2893 = vadd.f32 %v2844, %v2892
  %v2894 = vpop.f32.mrb[0].mxu0
  %v2895 = vpop.f32.mrb[0].mxu0
  %v2896 = vadd.f32 %v2847, %v2895
  %v2897 = vpop.f32.mrb[0].mxu0
  %2898 = vdwg.mxu0
  %v2899 = vmax.f32 %v2885, 0.0
  %v2900 = vmax.f32 %v2888, 0.0
  %v2901 = vmax.f32 %v2893, 0.0
  %v2902 = vmax.f32 %v2896, 0.0
  %v2903 = vpack.c.bf16 %v2900, %v2899
  %v2904 = vpack.c.bf16 %v2902, %v2901
  %v2905 = vld [vmem:[%s16] sm:$0xff]
  %v2906 = vld [vmem:[%s16 + $0x8] sm:$0xff]
  %v2907 = vld [vmem:[%s16 + $0x10] sm:$0xff]
  %v2908 = vld [vmem:[%s16 + $0x18] sm:$0xff]
  %v2909 = vld [vmem:[%s16 + $0x20] sm:$0xff]
  %v2910 = vld [vmem:[%s16 + $0x28] sm:$0xff]
  %v2911 = vld [vmem:[%s16 + $0x30] sm:$0xff]
  %v2912 = vld [vmem:[%s16 + $0x38] sm:$0xff]
  %v2913 = vld [vmem:[%s16 + $0x40] sm:$0xff]
  %v2914 = vld [vmem:[%s16 + $0x48] sm:$0xff]
  %v2915 = vld [vmem:[%s16 + $0x50] sm:$0xff]
  %v2916 = vld [vmem:[%s16 + $0x58] sm:$0xff]
  %v2917 = vld [vmem:[%s16 + $0x60] sm:$0xff]
  %v2918 = vld [vmem:[%s16 + $0x68] sm:$0xff]
  %v2919 = vld [vmem:[%s16 + $0x70] sm:$0xff]
  %v2920 = vld [vmem:[%s16 + $0x78] sm:$0xff]
  %v2921 = vld [vmem:[%s16 + $0x80] sm:$0xff]
  %v2922 = vld [vmem:[%s16 + $0x88] sm:$0xff]
  %v2923 = vld [vmem:[%s16 + $0x90] sm:$0xff]
  %v2924 = vld [vmem:[%s16 + $0x98] sm:$0xff]
  %v2925 = vld [vmem:[%s16 + $0xa0] sm:$0xff]
  %v2926 = vld [vmem:[%s16 + $0xa8] sm:$0xff]
  %v2927 = vld [vmem:[%s16 + $0xb0] sm:$0xff]
  %v2928 = vld [vmem:[%s16 + $0xb8] sm:$0xff]
  %v2929 = vld [vmem:[%s16 + $0xc0] sm:$0xff]
  %v2930 = vld [vmem:[%s16 + $0xc8] sm:$0xff]
  %v2931 = vld [vmem:[%s16 + $0xd0] sm:$0xff]
  %v2932 = vld [vmem:[%s16 + $0xd8] sm:$0xff]
  %v2933 = vld [vmem:[%s16 + $0xe0] sm:$0xff]
  %v2934 = vld [vmem:[%s16 + $0xe8] sm:$0xff]
  %v2935 = vld [vmem:[%s16 + $0xf0] sm:$0xff]
  %v2936 = vld [vmem:[%s16 + $0xf8] sm:$0xff]
  %v2969 = vunpack.c.l.b16 %v2905
  %v2970 = vunpack.c.h.b16 %v2905
  %v2971 = vunpack.c.l.b16 %v2906
  %v2972 = vunpack.c.h.b16 %v2906
  %v2973 = vunpack.c.l.b16 %v2907
  %v2974 = vunpack.c.h.b16 %v2907
  %v2975 = vunpack.c.l.b16 %v2908
  %v2976 = vunpack.c.h.b16 %v2908
  %v2977 = vunpack.c.l.b16 %v2909
  %v2978 = vunpack.c.h.b16 %v2909
  %v2979 = vunpack.c.l.b16 %v2910
  %v2980 = vunpack.c.h.b16 %v2910
  %v2981 = vunpack.c.l.b16 %v2911
  %v2982 = vunpack.c.h.b16 %v2911
  %v2983 = vunpack.c.l.b16 %v2912
  %v2984 = vunpack.c.h.b16 %v2912
  %v2985 = vunpack.c.l.b16 %v2913
  %v2986 = vunpack.c.h.b16 %v2913
  %v2987 = vunpack.c.l.b16 %v2914
  %v2988 = vunpack.c.h.b16 %v2914
  %v2989 = vunpack.c.l.b16 %v2915
  %v2990 = vunpack.c.h.b16 %v2915
  %v2991 = vunpack.c.l.b16 %v2916
  %v2992 = vunpack.c.h.b16 %v2916
  %v2993 = vunpack.c.l.b16 %v2917
  %v2994 = vunpack.c.h.b16 %v2917
  %v2995 = vunpack.c.l.b16 %v2918
  %v2996 = vunpack.c.h.b16 %v2918
  %v2997 = vunpack.c.l.b16 %v2919
  %v2998 = vunpack.c.h.b16 %v2919
  %v2999 = vunpack.c.l.b16 %v2920
  %v3000 = vunpack.c.h.b16 %v2920
  %v3001 = vunpack.c.l.b16 %v2921
  %v3002 = vunpack.c.h.b16 %v2921
  %v3003 = vunpack.c.l.b16 %v2922
  %v3004 = vunpack.c.h.b16 %v2922
  %v3005 = vunpack.c.l.b16 %v2923
  %v3006 = vunpack.c.h.b16 %v2923
  %v3007 = vunpack.c.l.b16 %v2924
  %v3008 = vunpack.c.h.b16 %v2924
  %v3009 = vunpack.c.l.b16 %v2925
  %v3010 = vunpack.c.h.b16 %v2925
  %v3011 = vunpack.c.l.b16 %v2926
  %v3012 = vunpack.c.h.b16 %v2926
  %v3013 = vunpack.c.l.b16 %v2927
  %v3014 = vunpack.c.h.b16 %v2927
  %v3015 = vunpack.c.l.b16 %v2928
  %v3016 = vunpack.c.h.b16 %v2928
  %v3017 = vunpack.c.l.b16 %v2929
  %v3018 = vunpack.c.h.b16 %v2929
  %v3019 = vunpack.c.l.b16 %v2930
  %v3020 = vunpack.c.h.b16 %v2930
  %v3021 = vunpack.c.l.b16 %v2931
  %v3022 = vunpack.c.h.b16 %v2931
  %v3023 = vunpack.c.l.b16 %v2932
  %v3024 = vunpack.c.h.b16 %v2932
  %v3025 = vunpack.c.l.b16 %v2933
  %v3026 = vunpack.c.h.b16 %v2933
  %v3027 = vunpack.c.l.b16 %v2934
  %v3028 = vunpack.c.h.b16 %v2934
  %v3029 = vunpack.c.l.b16 %v2935
  %v3030 = vunpack.c.h.b16 %v2935
  %v3031 = vunpack.c.l.b16 %v2936
  %v3032 = vunpack.c.h.b16 %v2936
  %v3033 = vpack.c.b16 %v2973, %v2969
  %v3034 = vpack.c.b16 %v2974, %v2970
  %v3035 = vpack.c.b16 %v2975, %v2971
  %v3036 = vpack.c.b16 %v2976, %v2972
  %v3037 = vpack.c.b16 %v2981, %v2977
  %v3038 = vpack.c.b16 %v2982, %v2978
  %v3039 = vpack.c.b16 %v2983, %v2979
  %v3040 = vpack.c.b16 %v2984, %v2980
  %v3041 = vpack.c.b16 %v2989, %v2985
  %v3042 = vpack.c.b16 %v2990, %v2986
  %v3043 = vpack.c.b16 %v2991, %v2987
  %v3044 = vpack.c.b16 %v2992, %v2988
  %v3045 = vpack.c.b16 %v2997, %v2993
  %v3046 = vpack.c.b16 %v2998, %v2994
  %v3047 = vpack.c.b16 %v2999, %v2995
  %v3048 = vpack.c.b16 %v3000, %v2996
  %v3049 = vpack.c.b16 %v3005, %v3001
  %v3050 = vpack.c.b16 %v3006, %v3002
  %v3051 = vpack.c.b16 %v3007, %v3003
  %v3052 = vpack.c.b16 %v3008, %v3004
  %v3053 = vpack.c.b16 %v3013, %v3009
  %v3054 = vpack.c.b16 %v3014, %v3010
  %v3055 = vpack.c.b16 %v3015, %v3011
  %v3056 = vpack.c.b16 %v3016, %v3012
  %v3057 = vpack.c.b16 %v3021, %v3017
  %v3058 = vpack.c.b16 %v3022, %v3018
  %v3059 = vpack.c.b16 %v3023, %v3019
  %v3060 = vpack.c.b16 %v3024, %v3020
  %v3061 = vpack.c.b16 %v3029, %v3025
  %v3062 = vpack.c.b16 %v3030, %v3026
  %v3063 = vpack.c.b16 %v3031, %v3027
  %v3064 = vpack.c.b16 %v3032, %v3028
  %3097 = vmatprep.subr.bf16.mxu0 %v3034
  %3098 = vmatpush1.bf16.msra.mxu0 %v3033
  %3099 = vmatprep.subr.bf16.mxu0 %v3038
  %3100 = vmatpush1.bf16.msra.mxu0 %v3037
  %3101 = vmatprep.subr.bf16.mxu0 %v3042
  %3102 = vmatpush1.bf16.msra.mxu0 %v3041
  %3103 = vmatprep.subr.bf16.mxu0 %v3046
  %3104 = vmatpush1.bf16.msra.mxu0 %v3045
  %3105 = vmatprep.subr.bf16.mxu0 %v3050
  %3106 = vmatpush1.bf16.msra.mxu0 %v3049
  %3107 = vmatprep.subr.bf16.mxu0 %v3054
  %3108 = vmatpush1.bf16.msra.mxu0 %v3053
  %3109 = vmatprep.subr.bf16.mxu0 %v3058
  %3110 = vmatpush1.bf16.msra.mxu0 %v3057
  %3111 = vmatprep.subr.bf16.mxu0 %v3062
  %3112 = vmatpush1.bf16.msra.mxu0 %v3061
  %3113 = vmatprep.subr.bf16.mxu0 0
  %3114 = vmatpush1.bf16.msra.mxu0 0
  %3115 = vmatprep.subr.bf16.mxu0 0
  %3116 = vmatpush1.bf16.msra.mxu0 0
  %3117 = vmatprep.subr.bf16.mxu0 0
  %3118 = vmatpush1.bf16.msra.mxu0 0
  %3119 = vmatprep.subr.bf16.mxu0 0
  %3120 = vmatpush1.bf16.msra.mxu0 0
  %3121 = vmatprep.subr.bf16.mxu0 0
  %3122 = vmatpush1.bf16.msra.mxu0 0
  %3123 = vmatprep.subr.bf16.mxu0 0
  %3124 = vmatpush1.bf16.msra.mxu0 0
  %3125 = vmatprep.subr.bf16.mxu0 0
  %3126 = vmatpush1.bf16.msra.mxu0 0
  %3127 = vmatprep.subr.bf16.mxu0 0
  %3128 = vmatpush1.bf16.msra.mxu0 0
  %3129 = vmatprep.mubr.bf16.mxu0 0
  %3130 = vmatmul.mubr.bf16.gmra.mrb[0].mxu0 %v2903
  %v3131 = vpop.f32.mrb[0].mxu0
  %v3132 = vadd.f32 0.0, %v3131
  %v3133 = vpop.f32.mrb[0].mxu0
  %v3134 = vadd.f32 0.0, %v3133
  %v3135 = vpop.f32.mrb[0].mxu0
  %v3136 = vadd.f32 0.0, %v3135
  %v3137 = vpop.f32.mrb[0].mxu0
  %v3138 = vadd.f32 0.0, %v3137
  %3139 = vmatprep.mubr.bf16.mxu0 0
  %3140 = vmatmul.mubr.bf16.gmra.mrb[0].mxu0 %v2904
  %v3141 = vpop.f32.mrb[0].mxu0
  %v3142 = vadd.f32 0.0, %v3141
  %v3143 = vpop.f32.mrb[0].mxu0
  %v3144 = vadd.f32 0.0, %v3143
  %v3145 = vpop.f32.mrb[0].mxu0
  %v3146 = vadd.f32 0.0, %v3145
  %v3147 = vpop.f32.mrb[0].mxu0
  %v3148 = vadd.f32 0.0, %v3147
  %3149 = vdwg.mxu0
  %3150 = vmatprep.subr.bf16.mxu0 %v3036
  %3151 = vmatpush1.bf16.msra.mxu0 %v3035
  %3152 = vmatprep.subr.bf16.mxu0 %v3040
  %3153 = vmatpush1.bf16.msra.mxu0 %v3039
  %3154 = vmatprep.subr.bf16.mxu0 %v3044
  %3155 = vmatpush1.bf16.msra.mxu0 %v3043
  %3156 = vmatprep.subr.bf16.mxu0 %v3048
  %3157 = vmatpush1.bf16.msra.mxu0 %v3047
  %3158 = vmatprep.subr.bf16.mxu0 %v3052
  %3159 = vmatpush1.bf16.msra.mxu0 %v3051
  %3160 = vmatprep.subr.bf16.mxu0 %v3056
  %3161 = vmatpush1.bf16.msra.mxu0 %v3055
  %3162 = vmatprep.subr.bf16.mxu0 %v3060
  %3163 = vmatpush1.bf16.msra.mxu0 %v3059
  %3164 = vmatprep.subr.bf16.mxu0 %v3064
  %3165 = vmatpush1.bf16.msra.mxu0 %v3063
  %3166 = vmatprep.subr.bf16.mxu0 0
  %3167 = vmatpush1.bf16.msra.mxu0 0
  %3168 = vmatprep.subr.bf16.mxu0 0
  %3169 = vmatpush1.bf16.msra.mxu0 0
  %3170 = vmatprep.subr.bf16.mxu0 0
  %3171 = vmatpush1.bf16.msra.mxu0 0
  %3172 = vmatprep.subr.bf16.mxu0 0
  %3173 = vmatpush1.bf16.msra.mxu0 0
  %3174 = vmatprep.subr.bf16.mxu0 0
  %3175 = vmatpush1.bf16.msra.mxu0 0
  %3176 = vmatprep.subr.bf16.mxu0 0
  %3177 = vmatpush1.bf16.msra.mxu0 0
  %3178 = vmatprep.subr.bf16.mxu0 0
  %3179 = vmatpush1.bf16.msra.mxu0 0
  %3180 = vmatprep.subr.bf16.mxu0 0
  %3181 = vmatpush1.bf16.msra.mxu0 0
  %3182 = vmatprep.mubr.bf16.mxu0 0
  %3183 = vmatmul.mubr.bf16.gmra.mrb[0].mxu0 %v2903
  %v3184 = vpop.f32.mrb[0].mxu0
  %v3185 = vadd.f32 0.0, %v3184
  %v3186 = vpop.f32.mrb[0].mxu0
  %v3187 = vadd.f32 0.0, %v3186
  %v3188 = vpop.f32.mrb[0].mxu0
  %v3189 = vadd.f32 0.0, %v3188
  %v3190 = vpop.f32.mrb[0].mxu0
  %v3191 = vadd.f32 0.0, %v3190
  %3192 = vmatprep.mubr.bf16.mxu0 0
  %3193 = vmatmul.mubr.bf16.gmra.mrb[0].mxu0 %v2904
  %v3194 = vpop.f32.mrb[0].mxu0
  %v3195 = vadd.f32 0.0, %v3194
  %v3196 = vpop.f32.mrb[0].mxu0
  %v3197 = vadd.f32 0.0, %v3196
  %v3198 = vpop.f32.mrb[0].mxu0
  %v3199 = vadd.f32 0.0, %v3198
  %v3200 = vpop.f32.mrb[0].mxu0
  %v3201 = vadd.f32 0.0, %v3200
  %3202 = vdwg.mxu0
  %3203 = vrot.lane.b32.xlu0 %v3132, 17
  %v3204 = vpop.permute.xlu0 %3203
  %3205 = vrot.lane.b32.xlu0 %v3136, 17
  %v3206 = vpop.permute.xlu0 %3205
  %3207 = vrot.lane.b32.xlu0 %v3142, 17
  %v3208 = vpop.permute.xlu0 %3207
  %3209 = vrot.lane.b32.xlu0 %v3146, 17
  %v3210 = vpop.permute.xlu0 %3209
  %3211 = vrot.lane.b32.xlu0 %v717, 17
  %v3212 = vpop.permute.xlu0 %3211
  %3213 = vrot.lane.b32.xlu0 %v721, 17
  %v3214 = vpop.permute.xlu0 %3213
  %3215 = vrot.lane.b32.xlu0 %v3134, 17
  %v3216 = vpop.permute.xlu0 %3215
  %3217 = vrot.lane.b32.xlu0 %v3138, 17
  %v3218 = vpop.permute.xlu0 %3217
  %3219 = vrot.lane.b32.xlu0 %v3144, 17
  %v3220 = vpop.permute.xlu0 %3219
  %3221 = vrot.lane.b32.xlu0 %v3148, 17
  %v3222 = vpop.permute.xlu0 %3221
  %3223 = vrot.lane.b32.xlu0 %v718, 17
  %v3224 = vpop.permute.xlu0 %3223
  %3225 = vrot.lane.b32.xlu0 %v722, 17
  %v3226 = vpop.permute.xlu0 %3225
  %3227 = vrot.lane.b32.xlu0 %v3185, 17
  %v3228 = vpop.permute.xlu0 %3227
  %3229 = vrot.lane.b32.xlu0 %v3189, 17
  %v3230 = vpop.permute.xlu0 %3229
  %3231 = vrot.lane.b32.xlu0 %v3195, 17
  %v3232 = vpop.permute.xlu0 %3231
  %3233 = vrot.lane.b32.xlu0 %v3199, 17
  %v3234 = vpop.permute.xlu0 %3233
  %3235 = vrot.lane.b32.xlu0 %v719, 17
  %v3236 = vpop.permute.xlu0 %3235
  %3237 = vrot.lane.b32.xlu0 %v723, 17
  %v3238 = vpop.permute.xlu0 %3237
  %3239 = vrot.lane.b32.xlu0 %v3187, 17
  %v3240 = vpop.permute.xlu0 %3239
  %3241 = vrot.lane.b32.xlu0 %v3191, 17
  %v3242 = vpop.permute.xlu0 %3241
  %3243 = vrot.lane.b32.xlu0 %v3197, 17
  %v3244 = vpop.permute.xlu0 %3243
  %3245 = vrot.lane.b32.xlu0 %v3201, 17
  %v3246 = vpop.permute.xlu0 %3245
  %3247 = vrot.lane.b32.xlu0 %v720, 17
  %v3248 = vpop.permute.xlu0 %3247
  %3249 = vrot.lane.b32.xlu0 %v724, 17
  %v3250 = vpop.permute.xlu0 %3249
  %v3251 = vsel %vm248, %v3228, %v3240
  %v3252 = vsel %vm248, %v3230, %v3242
  %v3253 = vsel %vm248, %v3232, %v3244
  %v3254 = vsel %vm248, %v3234, %v3246
  %v3255 = vsel %vm248, %v3236, %v3248
  %v3256 = vsel %vm248, %v3238, %v3250
  %v3257 = vsel %vm248, %v3216, %v3228
  %v3258 = vsel %vm248, %v3218, %v3230
  %v3259 = vsel %vm248, %v3220, %v3232
  %v3260 = vsel %vm248, %v3222, %v3234
  %v3261 = vsel %vm248, %v3224, %v3236
  %v3262 = vsel %vm248, %v3226, %v3238
  %v3263 = vsel %vm248, %v3204, %v3216
  %v3264 = vsel %vm248, %v3206, %v3218
  %v3265 = vsel %vm248, %v3208, %v3220
  %v3266 = vsel %vm248, %v3210, %v3222
  %v3267 = vsel %vm248, %v3212, %v3224
  %v3268 = vsel %vm248, %v3214, %v3226
  %v3269 = vsel %vm248, %v3240, %v3204
  %v3270 = vsel %vm248, %v3242, %v3206
  %v3271 = vsel %vm248, %v3244, %v3208
  %v3272 = vsel %vm248, %v3246, %v3210
  %v3273 = vsel %vm248, %v3248, %v3212
  %v3274 = vsel %vm248, %v3250, %v3214
  %v3275 = vmul.f32 %v3269, %v98
  %v3276 = vmul.f32 %v3263, %v99
  %v3277 = vmul.f32 %v3257, %v100
  %v3278 = vmul.f32 %v3251, %v101
  %v3279 = vmul.f32 %v3270, %v98
  %v3280 = vmul.f32 %v3264, %v99
  %v3281 = vmul.f32 %v3258, %v100
  %v3282 = vmul.f32 %v3252, %v101
  %v3283 = vmul.f32 %v3271, %v98
  %v3284 = vmul.f32 %v3265, %v99
  %v3285 = vmul.f32 %v3259, %v100
  %v3286 = vmul.f32 %v3253, %v101
  %v3287 = vmul.f32 %v3272, %v98
  %v3288 = vmul.f32 %v3266, %v99
  %v3289 = vmul.f32 %v3260, %v100
  %v3290 = vmul.f32 %v3254, %v101
  %v3291 = vmul.f32 %v3273, %v98
  %v3292 = vmul.f32 %v3267, %v99
  %v3293 = vmul.f32 %v3261, %v100
  %v3294 = vmul.f32 %v3255, %v101
  %v3295 = vmul.f32 %v3274, %v98
  %v3296 = vmul.f32 %v3268, %v99
  %v3297 = vmul.f32 %v3262, %v100
  %v3298 = vmul.f32 %v3256, %v101
  %v3299 = vpack.c.bf16 %v3279, %v3275
  %v3300 = vpack.c.bf16 %v3280, %v3276
  %v3301 = vpack.c.bf16 %v3281, %v3277
  %v3302 = vpack.c.bf16 %v3282, %v3278
  %v3303 = vpack.c.bf16 %v3287, %v3283
  %v3304 = vpack.c.bf16 %v3288, %v3284
  %v3305 = vpack.c.bf16 %v3289, %v3285
  %v3306 = vpack.c.bf16 %v3290, %v3286
  %v3307 = vpack.c.bf16 %v3295, %v3291
  %v3308 = vpack.c.bf16 %v3296, %v3292
  %v3309 = vpack.c.bf16 %v3297, %v3293
  %v3310 = vpack.c.bf16 %v3298, %v3294
  %3311 = vst [vmem:[#allocation2] sm:$0xff] %v3299
  %3312 = vst [vmem:[#allocation2 + $0x8] sm:$0xff] %v3300
  %3313 = vst [vmem:[#allocation2 + $0x10] sm:$0xff] %v3301
  %3314 = vst [vmem:[#allocation2 + $0x18] sm:$0xff] %v3302
  %3315 = vst [vmem:[#allocation2 + $0x20] sm:$0xff] %v3303
  %3316 = vst [vmem:[#allocation2 + $0x28] sm:$0xff] %v3304
  %3317 = vst [vmem:[#allocation2 + $0x30] sm:$0xff] %v3305
  %3318 = vst [vmem:[#allocation2 + $0x38] sm:$0xff] %v3306
  %3319 = vst [vmem:[#allocation2 + $0x40] sm:$0xff] %v3307
  %3320 = vst [vmem:[#allocation2 + $0x48] sm:$0xff] %v3308
  %3321 = vst [vmem:[#allocation2 + $0x50] sm:$0xff] %v3309
  %3322 = vst [vmem:[#allocation2 + $0x58] sm:$0xff] %v3310
  %3323 = vrot.lane.b32.xlu0 %v3132, 16
  %v3324 = vpop.permute.xlu0 %3323
  %3325 = vrot.lane.b32.xlu0 %v3136, 16
  %v3326 = vpop.permute.xlu0 %3325
  %3327 = vrot.lane.b32.xlu0 %v3142, 16
  %v3328 = vpop.permute.xlu0 %3327
  %3329 = vrot.lane.b32.xlu0 %v3146, 16
  %v3330 = vpop.permute.xlu0 %3329
  %3331 = vrot.lane.b32.xlu0 %v717, 16
  %v3332 = vpop.permute.xlu0 %3331
  %3333 = vrot.lane.b32.xlu0 %v721, 16
  %v3334 = vpop.permute.xlu0 %3333
  %3335 = vrot.lane.b32.xlu0 %v3134, 16
  %v3336 = vpop.permute.xlu0 %3335
  %3337 = vrot.lane.b32.xlu0 %v3138, 16
  %v3338 = vpop.permute.xlu0 %3337
  %3339 = vrot.lane.b32.xlu0 %v3144, 16
  %v3340 = vpop.permute.xlu0 %3339
  %3341 = vrot.lane.b32.xlu0 %v3148, 16
  %v3342 = vpop.permute.xlu0 %3341
  %3343 = vrot.lane.b32.xlu0 %v718, 16
  %v3344 = vpop.permute.xlu0 %3343
  %3345 = vrot.lane.b32.xlu0 %v722, 16
  %v3346 = vpop.permute.xlu0 %3345
  %3347 = vrot.lane.b32.xlu0 %v3185, 16
  %v3348 = vpop.permute.xlu0 %3347
  %3349 = vrot.lane.b32.xlu0 %v3189, 16
  %v3350 = vpop.permute.xlu0 %3349
  %3351 = vrot.lane.b32.xlu0 %v3195, 16
  %v3352 = vpop.permute.xlu0 %3351
  %3353 = vrot.lane.b32.xlu0 %v3199, 16
  %v3354 = vpop.permute.xlu0 %3353
  %3355 = vrot.lane.b32.xlu0 %v719, 16
  %v3356 = vpop.permute.xlu0 %3355
  %3357 = vrot.lane.b32.xlu0 %v723, 16
  %v3358 = vpop.permute.xlu0 %3357
  %3359 = vrot.lane.b32.xlu0 %v3187, 16
  %v3360 = vpop.permute.xlu0 %3359
  %3361 = vrot.lane.b32.xlu0 %v3191, 16
  %v3362 = vpop.permute.xlu0 %3361
  %3363 = vrot.lane.b32.xlu0 %v3197, 16
  %v3364 = vpop.permute.xlu0 %3363
  %3365 = vrot.lane.b32.xlu0 %v3201, 16
  %v3366 = vpop.permute.xlu0 %3365
  %3367 = vrot.lane.b32.xlu0 %v720, 16
  %v3368 = vpop.permute.xlu0 %3367
  %3369 = vrot.lane.b32.xlu0 %v724, 16
  %v3370 = vpop.permute.xlu0 %3369
  %v3371 = vsel %vm289, %v3348, %v3360
  %v3372 = vsel %vm289, %v3350, %v3362
  %v3373 = vsel %vm289, %v3352, %v3364
  %v3374 = vsel %vm289, %v3354, %v3366
  %v3375 = vsel %vm289, %v3356, %v3368
  %v3376 = vsel %vm289, %v3358, %v3370
  %v3377 = vsel %vm289, %v3336, %v3348
  %v3378 = vsel %vm289, %v3338, %v3350
  %v3379 = vsel %vm289, %v3340, %v3352
  %v3380 = vsel %vm289, %v3342, %v3354
  %v3381 = vsel %vm289, %v3344, %v3356
  %v3382 = vsel %vm289, %v3346, %v3358
  %v3383 = vsel %vm289, %v3324, %v3336
  %v3384 = vsel %vm289, %v3326, %v3338
  %v3385 = vsel %vm289, %v3328, %v3340
  %v3386 = vsel %vm289, %v3330, %v3342
  %v3387 = vsel %vm289, %v3332, %v3344
  %v3388 = vsel %vm289, %v3334, %v3346
  %v3389 = vsel %vm289, %v3360, %v3324
  %v3390 = vsel %vm289, %v3362, %v3326
  %v3391 = vsel %vm289, %v3364, %v3328
  %v3392 = vsel %vm289, %v3366, %v3330
  %v3393 = vsel %vm289, %v3368, %v3332
  %v3394 = vsel %vm289, %v3370, %v3334
  %v3395 = vmul.f32 %v3389, %v106
  %v3396 = vmul.f32 %v3383, %v107
  %v3397 = vmul.f32 %v3377, %v108
  %v3398 = vmul.f32 %v3371, %v109
  %v3399 = vmul.f32 %v3390, %v106
  %v3400 = vmul.f32 %v3384, %v107
  %v3401 = vmul.f32 %v3378, %v108
  %v3402 = vmul.f32 %v3372, %v109
  %v3403 = vmul.f32 %v3391, %v106
  %v3404 = vmul.f32 %v3385, %v107
  %v3405 = vmul.f32 %v3379, %v108
  %v3406 = vmul.f32 %v3373, %v109
  %v3407 = vmul.f32 %v3392, %v106
  %v3408 = vmul.f32 %v3386, %v107
  %v3409 = vmul.f32 %v3380, %v108
  %v3410 = vmul.f32 %v3374, %v109
  %v3411 = vmul.f32 %v3393, %v106
  %v3412 = vmul.f32 %v3387, %v107
  %v3413 = vmul.f32 %v3381, %v108
  %v3414 = vmul.f32 %v3375, %v109
  %v3415 = vmul.f32 %v3394, %v106
  %v3416 = vmul.f32 %v3388, %v107
  %v3417 = vmul.f32 %v3382, %v108
  %v3418 = vmul.f32 %v3376, %v109
  %v3419 = vpack.c.bf16 %v3399, %v3395
  %v3420 = vpack.c.bf16 %v3400, %v3396
  %v3421 = vpack.c.bf16 %v3401, %v3397
  %v3422 = vpack.c.bf16 %v3402, %v3398
  %v3423 = vpack.c.bf16 %v3407, %v3403
  %v3424 = vpack.c.bf16 %v3408, %v3404
  %v3425 = vpack.c.bf16 %v3409, %v3405
  %v3426 = vpack.c.bf16 %v3410, %v3406
  %v3427 = vpack.c.bf16 %v3415, %v3411
  %v3428 = vpack.c.bf16 %v3416, %v3412
  %v3429 = vpack.c.bf16 %v3417, %v3413
  %v3430 = vpack.c.bf16 %v3418, %v3414
  %3431 = vst [vmem:[#allocation2 + $0x60] sm:$0xff] %v3419
  %3432 = vst [vmem:[#allocation2 + $0x68] sm:$0xff] %v3420
  %3433 = vst [vmem:[#allocation2 + $0x70] sm:$0xff] %v3421
  %3434 = vst [vmem:[#allocation2 + $0x78] sm:$0xff] %v3422
  %3435 = vst [vmem:[#allocation2 + $0x80] sm:$0xff] %v3423
  %3436 = vst [vmem:[#allocation2 + $0x88] sm:$0xff] %v3424
  %3437 = vst [vmem:[#allocation2 + $0x90] sm:$0xff] %v3425
  %3438 = vst [vmem:[#allocation2 + $0x98] sm:$0xff] %v3426
  %3439 = vst [vmem:[#allocation2 + $0xa0] sm:$0xff] %v3427
  %3440 = vst [vmem:[#allocation2 + $0xa8] sm:$0xff] %v3428
  %3441 = vst [vmem:[#allocation2 + $0xb0] sm:$0xff] %v3429
  %3442 = vst [vmem:[#allocation2 + $0xb8] sm:$0xff] %v3430
  %3443 = vrot.lane.b32.xlu0 %v3132, 15
  %v3444 = vpop.permute.xlu0 %3443
  %3445 = vrot.lane.b32.xlu0 %v3136, 15
  %v3446 = vpop.permute.xlu0 %3445
  %3447 = vrot.lane.b32.xlu0 %v3142, 15
  %v3448 = vpop.permute.xlu0 %3447
  %3449 = vrot.lane.b32.xlu0 %v3146, 15
  %v3450 = vpop.permute.xlu0 %3449
  %3451 = vrot.lane.b32.xlu0 %v717, 15
  %v3452 = vpop.permute.xlu0 %3451
  %3453 = vrot.lane.b32.xlu0 %v721, 15
  %v3454 = vpop.permute.xlu0 %3453
  %3455 = vrot.lane.b32.xlu0 %v3134, 15
  %v3456 = vpop.permute.xlu0 %3455
  %3457 = vrot.lane.b32.xlu0 %v3138, 15
  %v3458 = vpop.permute.xlu0 %3457
  %3459 = vrot.lane.b32.xlu0 %v3144, 15
  %v3460 = vpop.permute.xlu0 %3459
  %3461 = vrot.lane.b32.xlu0 %v3148, 15
  %v3462 = vpop.permute.xlu0 %3461
  %3463 = vrot.lane.b32.xlu0 %v718, 15
  %v3464 = vpop.permute.xlu0 %3463
  %3465 = vrot.lane.b32.xlu0 %v722, 15
  %v3466 = vpop.permute.xlu0 %3465
  %3467 = vrot.lane.b32.xlu0 %v3185, 15
  %v3468 = vpop.permute.xlu0 %3467
  %3469 = vrot.lane.b32.xlu0 %v3189, 15
  %v3470 = vpop.permute.xlu0 %3469
  %3471 = vrot.lane.b32.xlu0 %v3195, 15
  %v3472 = vpop.permute.xlu0 %3471
  %3473 = vrot.lane.b32.xlu0 %v3199, 15
  %v3474 = vpop.permute.xlu0 %3473
  %3475 = vrot.lane.b32.xlu0 %v719, 15
  %v3476 = vpop.permute.xlu0 %3475
  %3477 = vrot.lane.b32.xlu0 %v723, 15
  %v3478 = vpop.permute.xlu0 %3477
  %3479 = vrot.lane.b32.xlu0 %v3187, 15
  %v3480 = vpop.permute.xlu0 %3479
  %3481 = vrot.lane.b32.xlu0 %v3191, 15
  %v3482 = vpop.permute.xlu0 %3481
  %3483 = vrot.lane.b32.xlu0 %v3197, 15
  %v3484 = vpop.permute.xlu0 %3483
  %3485 = vrot.lane.b32.xlu0 %v3201, 15
  %v3486 = vpop.permute.xlu0 %3485
  %3487 = vrot.lane.b32.xlu0 %v720, 15
  %v3488 = vpop.permute.xlu0 %3487
  %3489 = vrot.lane.b32.xlu0 %v724, 15
  %v3490 = vpop.permute.xlu0 %3489
  %v3491 = vsel %vm330, %v3468, %v3480
  %v3492 = vsel %vm330, %v3470, %v3482
  %v3493 = vsel %vm330, %v3472, %v3484
  %v3494 = vsel %vm330, %v3474, %v3486
  %v3495 = vsel %vm330, %v3476, %v3488
  %v3496 = vsel %vm330, %v3478, %v3490
  %v3497 = vsel %vm330, %v3456, %v3468
  %v3498 = vsel %vm330, %v3458, %v3470
  %v3499 = vsel %vm330, %v3460, %v3472
  %v3500 = vsel %vm330, %v3462, %v3474
  %v3501 = vsel %vm330, %v3464, %v3476
  %v3502 = vsel %vm330, %v3466, %v3478
  %v3503 = vsel %vm330, %v3444, %v3456
  %v3504 = vsel %vm330, %v3446, %v3458
  %v3505 = vsel %vm330, %v3448, %v3460
  %v3506 = vsel %vm330, %v3450, %v3462
  %v3507 = vsel %vm330, %v3452, %v3464
  %v3508 = vsel %vm330, %v3454, %v3466
  %v3509 = vsel %vm330, %v3480, %v3444
  %v3510 = vsel %vm330, %v3482, %v3446
  %v3511 = vsel %vm330, %v3484, %v3448
  %v3512 = vsel %vm330, %v3486, %v3450
  %v3513 = vsel %vm330, %v3488, %v3452
  %v3514 = vsel %vm330, %v3490, %v3454
  %v3515 = vmul.f32 %v3509, %v118
  %v3516 = vmul.f32 %v3503, %v119
  %v3517 = vmul.f32 %v3497, %v120
  %v3518 = vmul.f32 %v3491, %v121
  %v3519 = vmul.f32 %v3510, %v118
  %v3520 = vmul.f32 %v3504, %v119
  %v3521 = vmul.f32 %v3498, %v120
  %v3522 = vmul.f32 %v3492, %v121
  %v3523 = vmul.f32 %v3511, %v118
  %v3524 = vmul.f32 %v3505, %v119
  %v3525 = vmul.f32 %v3499, %v120
  %v3526 = vmul.f32 %v3493, %v121
  %v3527 = vmul.f32 %v3512, %v118
  %v3528 = vmul.f32 %v3506, %v119
  %v3529 = vmul.f32 %v3500, %v120
  %v3530 = vmul.f32 %v3494, %v121
  %v3531 = vmul.f32 %v3513, %v118
  %v3532 = vmul.f32 %v3507, %v119
  %v3533 = vmul.f32 %v3501, %v120
  %v3534 = vmul.f32 %v3495, %v121
  %v3535 = vmul.f32 %v3514, %v118
  %v3536 = vmul.f32 %v3508, %v119
  %v3537 = vmul.f32 %v3502, %v120
  %v3538 = vmul.f32 %v3496, %v121
  %v3539 = vpack.c.bf16 %v3519, %v3515
  %v3540 = vpack.c.bf16 %v3520, %v3516
  %v3541 = vpack.c.bf16 %v3521, %v3517
  %v3542 = vpack.c.bf16 %v3522, %v3518
  %v3543 = vpack.c.bf16 %v3527, %v3523
  %v3544 = vpack.c.bf16 %v3528, %v3524
  %v3545 = vpack.c.bf16 %v3529, %v3525
  %v3546 = vpack.c.bf16 %v3530, %v3526
  %v3547 = vpack.c.bf16 %v3535, %v3531
  %v3548 = vpack.c.bf16 %v3536, %v3532
  %v3549 = vpack.c.bf16 %v3537, %v3533
  %v3550 = vpack.c.bf16 %v3538, %v3534
  %3551 = vst [vmem:[#allocation2 + $0xc0] sm:$0xff] %v3539
  %3552 = vst [vmem:[#allocation2 + $0xc8] sm:$0xff] %v3540
  %3553 = vst [vmem:[#allocation2 + $0xd0] sm:$0xff] %v3541
  %3554 = vst [vmem:[#allocation2 + $0xd8] sm:$0xff] %v3542
  %3555 = vst [vmem:[#allocation2 + $0xe0] sm:$0xff] %v3543
  %3556 = vst [vmem:[#allocation2 + $0xe8] sm:$0xff] %v3544
  %3557 = vst [vmem:[#allocation2 + $0xf0] sm:$0xff] %v3545
  %3558 = vst [vmem:[#allocation2 + $0xf8] sm:$0xff] %v3546
  %3559 = vst [vmem:[#allocation2 + $0x100] sm:$0xff] %v3547
  %3560 = vst [vmem:[#allocation2 + $0x108] sm:$0xff] %v3548
  %3561 = vst [vmem:[#allocation2 + $0x110] sm:$0xff] %v3549
  %3562 = vst [vmem:[#allocation2 + $0x118] sm:$0xff] %v3550
  %3563 = vrot.lane.b32.xlu0 %v3132, 1
  %v3564 = vpop.permute.xlu0 %3563
  %3565 = vrot.lane.b32.xlu0 %v3136, 1
  %v3566 = vpop.permute.xlu0 %3565
  %3567 = vrot.lane.b32.xlu0 %v3142, 1
  %v3568 = vpop.permute.xlu0 %3567
  %3569 = vrot.lane.b32.xlu0 %v3146, 1
  %v3570 = vpop.permute.xlu0 %3569
  %3571 = vrot.lane.b32.xlu0 %v717, 1
  %v3572 = vpop.permute.xlu0 %3571
  %3573 = vrot.lane.b32.xlu0 %v721, 1
  %v3574 = vpop.permute.xlu0 %3573
  %3575 = vrot.lane.b32.xlu0 %v3134, 1
  %v3576 = vpop.permute.xlu0 %3575
  %3577 = vrot.lane.b32.xlu0 %v3138, 1
  %v3578 = vpop.permute.xlu0 %3577
  %3579 = vrot.lane.b32.xlu0 %v3144, 1
  %v3580 = vpop.permute.xlu0 %3579
  %3581 = vrot.lane.b32.xlu0 %v3148, 1
  %v3582 = vpop.permute.xlu0 %3581
  %3583 = vrot.lane.b32.xlu0 %v718, 1
  %v3584 = vpop.permute.xlu0 %3583
  %3585 = vrot.lane.b32.xlu0 %v722, 1
  %v3586 = vpop.permute.xlu0 %3585
  %3587 = vrot.lane.b32.xlu0 %v3185, 1
  %v3588 = vpop.permute.xlu0 %3587
  %3589 = vrot.lane.b32.xlu0 %v3189, 1
  %v3590 = vpop.permute.xlu0 %3589
  %3591 = vrot.lane.b32.xlu0 %v3195, 1
  %v3592 = vpop.permute.xlu0 %3591
  %3593 = vrot.lane.b32.xlu0 %v3199, 1
  %v3594 = vpop.permute.xlu0 %3593
  %3595 = vrot.lane.b32.xlu0 %v719, 1
  %v3596 = vpop.permute.xlu0 %3595
  %3597 = vrot.lane.b32.xlu0 %v723, 1
  %v3598 = vpop.permute.xlu0 %3597
  %3599 = vrot.lane.b32.xlu0 %v3187, 1
  %v3600 = vpop.permute.xlu0 %3599
  %3601 = vrot.lane.b32.xlu0 %v3191, 1
  %v3602 = vpop.permute.xlu0 %3601
  %3603 = vrot.lane.b32.xlu0 %v3197, 1
  %v3604 = vpop.permute.xlu0 %3603
  %3605 = vrot.lane.b32.xlu0 %v3201, 1
  %v3606 = vpop.permute.xlu0 %3605
  %3607 = vrot.lane.b32.xlu0 %v720, 1
  %v3608 = vpop.permute.xlu0 %3607
  %3609 = vrot.lane.b32.xlu0 %v724, 1
  %v3610 = vpop.permute.xlu0 %3609
  %v3611 = vsel %vm371, %v3588, %v3600
  %v3612 = vsel %vm371, %v3590, %v3602
  %v3613 = vsel %vm371, %v3592, %v3604
  %v3614 = vsel %vm371, %v3594, %v3606
  %v3615 = vsel %vm371, %v3596, %v3608
  %v3616 = vsel %vm371, %v3598, %v3610
  %v3617 = vsel %vm371, %v3576, %v3588
  %v3618 = vsel %vm371, %v3578, %v3590
  %v3619 = vsel %vm371, %v3580, %v3592
  %v3620 = vsel %vm371, %v3582, %v3594
  %v3621 = vsel %vm371, %v3584, %v3596
  %v3622 = vsel %vm371, %v3586, %v3598
  %v3623 = vsel %vm371, %v3564, %v3576
  %v3624 = vsel %vm371, %v3566, %v3578
  %v3625 = vsel %vm371, %v3568, %v3580
  %v3626 = vsel %vm371, %v3570, %v3582
  %v3627 = vsel %vm371, %v3572, %v3584
  %v3628 = vsel %vm371, %v3574, %v3586
  %v3629 = vsel %vm371, %v3600, %v3564
  %v3630 = vsel %vm371, %v3602, %v3566
  %v3631 = vsel %vm371, %v3604, %v3568
  %v3632 = vsel %vm371, %v3606, %v3570
  %v3633 = vsel %vm371, %v3608, %v3572
  %v3634 = vsel %vm371, %v3610, %v3574
  %v3635 = vmul.f32 %v3629, %v126
  %v3636 = vmul.f32 %v3623, %v127
  %v3637 = vmul.f32 %v3617, %v128
  %v3638 = vmul.f32 %v3611, %v129
  %v3639 = vmul.f32 %v3630, %v126
  %v3640 = vmul.f32 %v3624, %v127
  %v3641 = vmul.f32 %v3618, %v128
  %v3642 = vmul.f32 %v3612, %v129
  %v3643 = vmul.f32 %v3631, %v126
  %v3644 = vmul.f32 %v3625, %v127
  %v3645 = vmul.f32 %v3619, %v128
  %v3646 = vmul.f32 %v3613, %v129
  %v3647 = vmul.f32 %v3632, %v126
  %v3648 = vmul.f32 %v3626, %v127
  %v3649 = vmul.f32 %v3620, %v128
  %v3650 = vmul.f32 %v3614, %v129
  %v3651 = vmul.f32 %v3633, %v126
  %v3652 = vmul.f32 %v3627, %v127
  %v3653 = vmul.f32 %v3621, %v128
  %v3654 = vmul.f32 %v3615, %v129
  %v3655 = vmul.f32 %v3634, %v126
  %v3656 = vmul.f32 %v3628, %v127
  %v3657 = vmul.f32 %v3622, %v128
  %v3658 = vmul.f32 %v3616, %v129
  %v3659 = vpack.c.bf16 %v3639, %v3635
  %v3660 = vpack.c.bf16 %v3640, %v3636
  %v3661 = vpack.c.bf16 %v3641, %v3637
  %v3662 = vpack.c.bf16 %v3642, %v3638
  %v3663 = vpack.c.bf16 %v3647, %v3643
  %v3664 = vpack.c.bf16 %v3648, %v3644
  %v3665 = vpack.c.bf16 %v3649, %v3645
  %v3666 = vpack.c.bf16 %v3650, %v3646
  %v3667 = vpack.c.bf16 %v3655, %v3651
  %v3668 = vpack.c.bf16 %v3656, %v3652
  %v3669 = vpack.c.bf16 %v3657, %v3653
  %v3670 = vpack.c.bf16 %v3658, %v3654
  %3671 = vst [vmem:[#allocation2 + $0x120] sm:$0xff] %v3659
  %3672 = vst [vmem:[#allocation2 + $0x128] sm:$0xff] %v3660
  %3673 = vst [vmem:[#allocation2 + $0x130] sm:$0xff] %v3661
  %3674 = vst [vmem:[#allocation2 + $0x138] sm:$0xff] %v3662
  %3675 = vst [vmem:[#allocation2 + $0x140] sm:$0xff] %v3663
  %3676 = vst [vmem:[#allocation2 + $0x148] sm:$0xff] %v3664
  %3677 = vst [vmem:[#allocation2 + $0x150] sm:$0xff] %v3665
  %3678 = vst [vmem:[#allocation2 + $0x158] sm:$0xff] %v3666
  %3679 = vst [vmem:[#allocation2 + $0x160] sm:$0xff] %v3667
  %3680 = vst [vmem:[#allocation2 + $0x168] sm:$0xff] %v3668
  %3681 = vst [vmem:[#allocation2 + $0x170] sm:$0xff] %v3669
  %3682 = vst [vmem:[#allocation2 + $0x178] sm:$0xff] %v3670
  %v3683 = vpack.c.bf16 %v3136, %v3132
  %v3684 = vpack.c.bf16 %v3138, %v3134
  %v3685 = vpack.c.bf16 %v3189, %v3185
  %v3686 = vpack.c.bf16 %v3191, %v3187
  %v3687 = vpack.c.bf16 %v3146, %v3142
  %v3688 = vpack.c.bf16 %v3148, %v3144
  %v3689 = vpack.c.bf16 %v3199, %v3195
  %v3690 = vpack.c.bf16 %v3201, %v3197
  %v3691 = vpack.c.bf16 %v721, %v717
  %v3692 = vpack.c.bf16 %v722, %v718
  %v3693 = vpack.c.bf16 %v723, %v719
  %v3694 = vpack.c.bf16 %v724, %v720
  %3695 = vst [vmem:[#allocation2 + $0x180] sm:$0xff] %v3683
  %3696 = vst [vmem:[#allocation2 + $0x188] sm:$0xff] %v3684
  %3697 = vst [vmem:[#allocation2 + $0x190] sm:$0xff] %v3685
  %3698 = vst [vmem:[#allocation2 + $0x198] sm:$0xff] %v3686
  %3699 = vst [vmem:[#allocation2 + $0x1a0] sm:$0xff] %v3687
  %3700 = vst [vmem:[#allocation2 + $0x1a8] sm:$0xff] %v3688
  %3701 = vst [vmem:[#allocation2 + $0x1b0] sm:$0xff] %v3689
  %3702 = vst [vmem:[#allocation2 + $0x1b8] sm:$0xff] %v3690
  %3703 = vst [vmem:[#allocation2 + $0x1c0] sm:$0xff] %v3691
  %3704 = vst [vmem:[#allocation2 + $0x1c8] sm:$0xff] %v3692
  %3705 = vst [vmem:[#allocation2 + $0x1d0] sm:$0xff] %v3693
  %3706 = vst [vmem:[#allocation2 + $0x1d8] sm:$0xff] %v3694
  %3707 = vrot.lane.b32.xlu0 %v3132, 127
  %v3708 = vpop.permute.xlu0 %3707
  %3709 = vrot.lane.b32.xlu0 %v3136, 127
  %v3710 = vpop.permute.xlu0 %3709
  %3711 = vrot.lane.b32.xlu0 %v3142, 127
  %v3712 = vpop.permute.xlu0 %3711
  %3713 = vrot.lane.b32.xlu0 %v3146, 127
  %v3714 = vpop.permute.xlu0 %3713
  %3715 = vrot.lane.b32.xlu0 %v3134, 127
  %v3716 = vpop.permute.xlu0 %3715
  %3717 = vrot.lane.b32.xlu0 %v3138, 127
  %v3718 = vpop.permute.xlu0 %3717
  %3719 = vrot.lane.b32.xlu0 %v3144, 127
  %v3720 = vpop.permute.xlu0 %3719
  %3721 = vrot.lane.b32.xlu0 %v3148, 127
  %v3722 = vpop.permute.xlu0 %3721
  %3723 = vrot.lane.b32.xlu0 %v3185, 127
  %v3724 = vpop.permute.xlu0 %3723
  %3725 = vrot.lane.b32.xlu0 %v3189, 127
  %v3726 = vpop.permute.xlu0 %3725
  %3727 = vrot.lane.b32.xlu0 %v3195, 127
  %v3728 = vpop.permute.xlu0 %3727
  %3729 = vrot.lane.b32.xlu0 %v3199, 127
  %v3730 = vpop.permute.xlu0 %3729
  %3731 = vrot.lane.b32.xlu0 %v3187, 127
  %v3732 = vpop.permute.xlu0 %3731
  %3733 = vrot.lane.b32.xlu0 %v3191, 127
  %v3734 = vpop.permute.xlu0 %3733
  %3735 = vrot.lane.b32.xlu0 %v3197, 127
  %v3736 = vpop.permute.xlu0 %3735
  %3737 = vrot.lane.b32.xlu0 %v3201, 127
  %v3738 = vpop.permute.xlu0 %3737
  %v3739 = vsel %vm420, %v3724, %v3732
  %v3740 = vsel %vm420, %v3726, %v3734
  %v3741 = vsel %vm420, %v3728, %v3736
  %v3742 = vsel %vm420, %v3730, %v3738
  %v3743 = vsel %vm420, %v3716, %v3724
  %v3744 = vsel %vm420, %v3718, %v3726
  %v3745 = vsel %vm420, %v3720, %v3728
  %v3746 = vsel %vm420, %v3722, %v3730
  %v3747 = vsel %vm420, %v3708, %v3716
  %v3748 = vsel %vm420, %v3710, %v3718
  %v3749 = vsel %vm420, %v3712, %v3720
  %v3750 = vsel %vm420, %v3714, %v3722
  %v3751 = vsel %vm420, %v3732, %v3708
  %v3752 = vsel %vm420, %v3734, %v3710
  %v3753 = vsel %vm420, %v3736, %v3712
  %v3754 = vsel %vm420, %v3738, %v3714
  %v3755 = vmul.f32 %v3747, %v134
  %v3756 = vmul.f32 %v3743, %v135
  %v3757 = vmul.f32 %v3739, %v136
  %v3758 = vmul.f32 %v3751, %v137
  %v3759 = vmul.f32 %v3748, %v134
  %v3760 = vmul.f32 %v3744, %v135
  %v3761 = vmul.f32 %v3740, %v136
  %v3762 = vmul.f32 %v3752, %v137
  %v3763 = vmul.f32 %v3749, %v134
  %v3764 = vmul.f32 %v3745, %v135
  %v3765 = vmul.f32 %v3741, %v136
  %v3766 = vmul.f32 %v3753, %v137
  %v3767 = vmul.f32 %v3750, %v134
  %v3768 = vmul.f32 %v3746, %v135
  %v3769 = vmul.f32 %v3742, %v136
  %v3770 = vmul.f32 %v3754, %v137
  %v3771 = vmul.f32 %v745, %v134
  %v3772 = vmul.f32 %v743, %v135
  %v3773 = vmul.f32 %v741, %v136
  %v3774 = vmul.f32 %v747, %v137
  %v3775 = vmul.f32 %v746, %v134
  %v3776 = vmul.f32 %v744, %v135
  %v3777 = vmul.f32 %v742, %v136
  %v3778 = vmul.f32 %v748, %v137
  %v3779 = vpack.c.bf16 %v3759, %v3755
  %v3780 = vpack.c.bf16 %v3760, %v3756
  %v3781 = vpack.c.bf16 %v3761, %v3757
  %v3782 = vpack.c.bf16 %v3762, %v3758
  %v3783 = vpack.c.bf16 %v3767, %v3763
  %v3784 = vpack.c.bf16 %v3768, %v3764
  %v3785 = vpack.c.bf16 %v3769, %v3765
  %v3786 = vpack.c.bf16 %v3770, %v3766
  %v3787 = vpack.c.bf16 %v3775, %v3771
  %v3788 = vpack.c.bf16 %v3776, %v3772
  %v3789 = vpack.c.bf16 %v3777, %v3773
  %v3790 = vpack.c.bf16 %v3778, %v3774
  %3791 = vst [vmem:[#allocation2 + $0x1e0] sm:$0xff] %v3779
  %3792 = vst [vmem:[#allocation2 + $0x1e8] sm:$0xff] %v3780
  %3793 = vst [vmem:[#allocation2 + $0x1f0] sm:$0xff] %v3781
  %3794 = vst [vmem:[#allocation2 + $0x1f8] sm:$0xff] %v3782
  %3795 = vst [vmem:[#allocation2 + $0x200] sm:$0xff] %v3783
  %3796 = vst [vmem:[#allocation2 + $0x208] sm:$0xff] %v3784
  %3797 = vst [vmem:[#allocation2 + $0x210] sm:$0xff] %v3785
  %3798 = vst [vmem:[#allocation2 + $0x218] sm:$0xff] %v3786
  %3799 = vst [vmem:[#allocation2 + $0x220] sm:$0xff] %v3787
  %3800 = vst [vmem:[#allocation2 + $0x228] sm:$0xff] %v3788
  %3801 = vst [vmem:[#allocation2 + $0x230] sm:$0xff] %v3789
  %3802 = vst [vmem:[#allocation2 + $0x238] sm:$0xff] %v3790
  %3803 = vrot.lane.b32.xlu0 %v3132, 113
  %v3804 = vpop.permute.xlu0 %3803
  %3805 = vrot.lane.b32.xlu0 %v3136, 113
  %v3806 = vpop.permute.xlu0 %3805
  %3807 = vrot.lane.b32.xlu0 %v3142, 113
  %v3808 = vpop.permute.xlu0 %3807
  %3809 = vrot.lane.b32.xlu0 %v3146, 113
  %v3810 = vpop.permute.xlu0 %3809
  %3811 = vrot.lane.b32.xlu0 %v717, 113
  %v3812 = vpop.permute.xlu0 %3811
  %3813 = vrot.lane.b32.xlu0 %v721, 113
  %v3814 = vpop.permute.xlu0 %3813
  %3815 = vrot.lane.b32.xlu0 %v3134, 113
  %v3816 = vpop.permute.xlu0 %3815
  %3817 = vrot.lane.b32.xlu0 %v3138, 113
  %v3818 = vpop.permute.xlu0 %3817
  %3819 = vrot.lane.b32.xlu0 %v3144, 113
  %v3820 = vpop.permute.xlu0 %3819
  %3821 = vrot.lane.b32.xlu0 %v3148, 113
  %v3822 = vpop.permute.xlu0 %3821
  %3823 = vrot.lane.b32.xlu0 %v718, 113
  %v3824 = vpop.permute.xlu0 %3823
  %3825 = vrot.lane.b32.xlu0 %v722, 113
  %v3826 = vpop.permute.xlu0 %3825
  %3827 = vrot.lane.b32.xlu0 %v3185, 113
  %v3828 = vpop.permute.xlu0 %3827
  %3829 = vrot.lane.b32.xlu0 %v3189, 113
  %v3830 = vpop.permute.xlu0 %3829
  %3831 = vrot.lane.b32.xlu0 %v3195, 113
  %v3832 = vpop.permute.xlu0 %3831
  %3833 = vrot.lane.b32.xlu0 %v3199, 113
  %v3834 = vpop.permute.xlu0 %3833
  %3835 = vrot.lane.b32.xlu0 %v719, 113
  %v3836 = vpop.permute.xlu0 %3835
  %3837 = vrot.lane.b32.xlu0 %v723, 113
  %v3838 = vpop.permute.xlu0 %3837
  %3839 = vrot.lane.b32.xlu0 %v3187, 113
  %v3840 = vpop.permute.xlu0 %3839
  %3841 = vrot.lane.b32.xlu0 %v3191, 113
  %v3842 = vpop.permute.xlu0 %3841
  %3843 = vrot.lane.b32.xlu0 %v3197, 113
  %v3844 = vpop.permute.xlu0 %3843
  %3845 = vrot.lane.b32.xlu0 %v3201, 113
  %v3846 = vpop.permute.xlu0 %3845
  %3847 = vrot.lane.b32.xlu0 %v720, 113
  %v3848 = vpop.permute.xlu0 %3847
  %3849 = vrot.lane.b32.xlu0 %v724, 113
  %v3850 = vpop.permute.xlu0 %3849
  %v3851 = vsel %vm461, %v3828, %v3840
  %v3852 = vsel %vm461, %v3830, %v3842
  %v3853 = vsel %vm461, %v3832, %v3844
  %v3854 = vsel %vm461, %v3834, %v3846
  %v3855 = vsel %vm461, %v3836, %v3848
  %v3856 = vsel %vm461, %v3838, %v3850
  %v3857 = vsel %vm461, %v3816, %v3828
  %v3858 = vsel %vm461, %v3818, %v3830
  %v3859 = vsel %vm461, %v3820, %v3832
  %v3860 = vsel %vm461, %v3822, %v3834
  %v3861 = vsel %vm461, %v3824, %v3836
  %v3862 = vsel %vm461, %v3826, %v3838
  %v3863 = vsel %vm461, %v3804, %v3816
  %v3864 = vsel %vm461, %v3806, %v3818
  %v3865 = vsel %vm461, %v3808, %v3820
  %v3866 = vsel %vm461, %v3810, %v3822
  %v3867 = vsel %vm461, %v3812, %v3824
  %v3868 = vsel %vm461, %v3814, %v3826
  %v3869 = vsel %vm461, %v3840, %v3804
  %v3870 = vsel %vm461, %v3842, %v3806
  %v3871 = vsel %vm461, %v3844, %v3808
  %v3872 = vsel %vm461, %v3846, %v3810
  %v3873 = vsel %vm461, %v3848, %v3812
  %v3874 = vsel %vm461, %v3850, %v3814
  %v3875 = vmul.f32 %v3863, %v146
  %v3876 = vmul.f32 %v3857, %v147
  %v3877 = vmul.f32 %v3851, %v148
  %v3878 = vmul.f32 %v3869, %v149
  %v3879 = vmul.f32 %v3864, %v146
  %v3880 = vmul.f32 %v3858, %v147
  %v3881 = vmul.f32 %v3852, %v148
  %v3882 = vmul.f32 %v3870, %v149
  %v3883 = vmul.f32 %v3865, %v146
  %v3884 = vmul.f32 %v3859, %v147
  %v3885 = vmul.f32 %v3853, %v148
  %v3886 = vmul.f32 %v3871, %v149
  %v3887 = vmul.f32 %v3866, %v146
  %v3888 = vmul.f32 %v3860, %v147
  %v3889 = vmul.f32 %v3854, %v148
  %v3890 = vmul.f32 %v3872, %v149
  %v3891 = vmul.f32 %v3867, %v146
  %v3892 = vmul.f32 %v3861, %v147
  %v3893 = vmul.f32 %v3855, %v148
  %v3894 = vmul.f32 %v3873, %v149
  %v3895 = vmul.f32 %v3868, %v146
  %v3896 = vmul.f32 %v3862, %v147
  %v3897 = vmul.f32 %v3856, %v148
  %v3898 = vmul.f32 %v3874, %v149
  %v3899 = vpack.c.bf16 %v3879, %v3875
  %v3900 = vpack.c.bf16 %v3880, %v3876
  %v3901 = vpack.c.bf16 %v3881, %v3877
  %v3902 = vpack.c.bf16 %v3882, %v3878
  %v3903 = vpack.c.bf16 %v3887, %v3883
  %v3904 = vpack.c.bf16 %v3888, %v3884
  %v3905 = vpack.c.bf16 %v3889, %v3885
  %v3906 = vpack.c.bf16 %v3890, %v3886
  %v3907 = vpack.c.bf16 %v3895, %v3891
  %v3908 = vpack.c.bf16 %v3896, %v3892
  %v3909 = vpack.c.bf16 %v3897, %v3893
  %v3910 = vpack.c.bf16 %v3898, %v3894
  %3911 = vst [vmem:[#allocation2 + $0x240] sm:$0xff] %v3899
  %3912 = vst [vmem:[#allocation2 + $0x248] sm:$0xff] %v3900
  %3913 = vst [vmem:[#allocation2 + $0x250] sm:$0xff] %v3901
  %3914 = vst [vmem:[#allocation2 + $0x258] sm:$0xff] %v3902
  %3915 = vst [vmem:[#allocation2 + $0x260] sm:$0xff] %v3903
  %3916 = vst [vmem:[#allocation2 + $0x268] sm:$0xff] %v3904
  %3917 = vst [vmem:[#allocation2 + $0x270] sm:$0xff] %v3905
  %3918 = vst [vmem:[#allocation2 + $0x278] sm:$0xff] %v3906
  %3919 = vst [vmem:[#allocation2 + $0x280] sm:$0xff] %v3907
  %3920 = vst [vmem:[#allocation2 + $0x288] sm:$0xff] %v3908
  %3921 = vst [vmem:[#allocation2 + $0x290] sm:$0xff] %v3909
  %3922 = vst [vmem:[#allocation2 + $0x298] sm:$0xff] %v3910
  %3923 = vrot.lane.b32.xlu0 %v3132, 112
  %v3924 = vpop.permute.xlu0 %3923
  %3925 = vrot.lane.b32.xlu0 %v3136, 112
  %v3926 = vpop.permute.xlu0 %3925
  %3927 = vrot.lane.b32.xlu0 %v3142, 112
  %v3928 = vpop.permute.xlu0 %3927
  %3929 = vrot.lane.b32.xlu0 %v3146, 112
  %v3930 = vpop.permute.xlu0 %3929
  %3931 = vrot.lane.b32.xlu0 %v717, 112
  %v3932 = vpop.permute.xlu0 %3931
  %3933 = vrot.lane.b32.xlu0 %v721, 112
  %v3934 = vpop.permute.xlu0 %3933
  %3935 = vrot.lane.b32.xlu0 %v3134, 112
  %v3936 = vpop.permute.xlu0 %3935
  %3937 = vrot.lane.b32.xlu0 %v3138, 112
  %v3938 = vpop.permute.xlu0 %3937
  %3939 = vrot.lane.b32.xlu0 %v3144, 112
  %v3940 = vpop.permute.xlu0 %3939
  %3941 = vrot.lane.b32.xlu0 %v3148, 112
  %v3942 = vpop.permute.xlu0 %3941
  %3943 = vrot.lane.b32.xlu0 %v718, 112
  %v3944 = vpop.permute.xlu0 %3943
  %3945 = vrot.lane.b32.xlu0 %v722, 112
  %v3946 = vpop.permute.xlu0 %3945
  %3947 = vrot.lane.b32.xlu0 %v3185, 112
  %v3948 = vpop.permute.xlu0 %3947
  %3949 = vrot.lane.b32.xlu0 %v3189, 112
  %v3950 = vpop.permute.xlu0 %3949
  %3951 = vrot.lane.b32.xlu0 %v3195, 112
  %v3952 = vpop.permute.xlu0 %3951
  %3953 = vrot.lane.b32.xlu0 %v3199, 112
  %v3954 = vpop.permute.xlu0 %3953
  %3955 = vrot.lane.b32.xlu0 %v719, 112
  %v3956 = vpop.permute.xlu0 %3955
  %3957 = vrot.lane.b32.xlu0 %v723, 112
  %v3958 = vpop.permute.xlu0 %3957
  %3959 = vrot.lane.b32.xlu0 %v3187, 112
  %v3960 = vpop.permute.xlu0 %3959
  %3961 = vrot.lane.b32.xlu0 %v3191, 112
  %v3962 = vpop.permute.xlu0 %3961
  %3963 = vrot.lane.b32.xlu0 %v3197, 112
  %v3964 = vpop.permute.xlu0 %3963
  %3965 = vrot.lane.b32.xlu0 %v3201, 112
  %v3966 = vpop.permute.xlu0 %3965
  %3967 = vrot.lane.b32.xlu0 %v720, 112
  %v3968 = vpop.permute.xlu0 %3967
  %3969 = vrot.lane.b32.xlu0 %v724, 112
  %v3970 = vpop.permute.xlu0 %3969
  %v3971 = vsel %vm502, %v3948, %v3960
  %v3972 = vsel %vm502, %v3950, %v3962
  %v3973 = vsel %vm502, %v3952, %v3964
  %v3974 = vsel %vm502, %v3954, %v3966
  %v3975 = vsel %vm502, %v3956, %v3968
  %v3976 = vsel %vm502, %v3958, %v3970
  %v3977 = vsel %vm502, %v3936, %v3948
  %v3978 = vsel %vm502, %v3938, %v3950
  %v3979 = vsel %vm502, %v3940, %v3952
  %v3980 = vsel %vm502, %v3942, %v3954
  %v3981 = vsel %vm502, %v3944, %v3956
  %v3982 = vsel %vm502, %v3946, %v3958
  %v3983 = vsel %vm502, %v3924, %v3936
  %v3984 = vsel %vm502, %v3926, %v3938
  %v3985 = vsel %vm502, %v3928, %v3940
  %v3986 = vsel %vm502, %v3930, %v3942
  %v3987 = vsel %vm502, %v3932, %v3944
  %v3988 = vsel %vm502, %v3934, %v3946
  %v3989 = vsel %vm502, %v3960, %v3924
  %v3990 = vsel %vm502, %v3962, %v3926
  %v3991 = vsel %vm502, %v3964, %v3928
  %v3992 = vsel %vm502, %v3966, %v3930
  %v3993 = vsel %vm502, %v3968, %v3932
  %v3994 = vsel %vm502, %v3970, %v3934
  %v3995 = vmul.f32 %v3983, %v154
  %v3996 = vmul.f32 %v3977, %v155
  %v3997 = vmul.f32 %v3971, %v156
  %v3998 = vmul.f32 %v3989, %v157
  %v3999 = vmul.f32 %v3984, %v154
  %v4000 = vmul.f32 %v3978, %v155
  %v4001 = vmul.f32 %v3972, %v156
  %v4002 = vmul.f32 %v3990, %v157
  %v4003 = vmul.f32 %v3985, %v154
  %v4004 = vmul.f32 %v3979, %v155
  %v4005 = vmul.f32 %v3973, %v156
  %v4006 = vmul.f32 %v3991, %v157
  %v4007 = vmul.f32 %v3986, %v154
  %v4008 = vmul.f32 %v3980, %v155
  %v4009 = vmul.f32 %v3974, %v156
  %v4010 = vmul.f32 %v3992, %v157
  %v4011 = vmul.f32 %v3987, %v154
  %v4012 = vmul.f32 %v3981, %v155
  %v4013 = vmul.f32 %v3975, %v156
  %v4014 = vmul.f32 %v3993, %v157
  %v4015 = vmul.f32 %v3988, %v154
  %v4016 = vmul.f32 %v3982, %v155
  %v4017 = vmul.f32 %v3976, %v156
  %v4018 = vmul.f32 %v3994, %v157
  %v4019 = vpack.c.bf16 %v3999, %v3995
  %v4020 = vpack.c.bf16 %v4000, %v3996
  %v4021 = vpack.c.bf16 %v4001, %v3997
  %v4022 = vpack.c.bf16 %v4002, %v3998
  %v4023 = vpack.c.bf16 %v4007, %v4003
  %v4024 = vpack.c.bf16 %v4008, %v4004
  %v4025 = vpack.c.bf16 %v4009, %v4005
  %v4026 = vpack.c.bf16 %v4010, %v4006
  %v4027 = vpack.c.bf16 %v4015, %v4011
  %v4028 = vpack.c.bf16 %v4016, %v4012
  %v4029 = vpack.c.bf16 %v4017, %v4013
  %v4030 = vpack.c.bf16 %v4018, %v4014
  %4031 = vst [vmem:[#allocation2 + $0x2a0] sm:$0xff] %v4019
  %4032 = vst [vmem:[#allocation2 + $0x2a8] sm:$0xff] %v4020
  %4033 = vst [vmem:[#allocation2 + $0x2b0] sm:$0xff] %v4021
  %4034 = vst [vmem:[#allocation2 + $0x2b8] sm:$0xff] %v4022
  %4035 = vst [vmem:[#allocation2 + $0x2c0] sm:$0xff] %v4023
  %4036 = vst [vmem:[#allocation2 + $0x2c8] sm:$0xff] %v4024
  %4037 = vst [vmem:[#allocation2 + $0x2d0] sm:$0xff] %v4025
  %4038 = vst [vmem:[#allocation2 + $0x2d8] sm:$0xff] %v4026
  %4039 = vst [vmem:[#allocation2 + $0x2e0] sm:$0xff] %v4027
  %4040 = vst [vmem:[#allocation2 + $0x2e8] sm:$0xff] %v4028
  %4041 = vst [vmem:[#allocation2 + $0x2f0] sm:$0xff] %v4029
  %4042 = vst [vmem:[#allocation2 + $0x2f8] sm:$0xff] %v4030
  %4043 = vrot.lane.b32.xlu0 %v3132, 111
  %v4044 = vpop.permute.xlu0 %4043
  %4045 = vrot.lane.b32.xlu0 %v3136, 111
  %v4046 = vpop.permute.xlu0 %4045
  %4047 = vrot.lane.b32.xlu0 %v3142, 111
  %v4048 = vpop.permute.xlu0 %4047
  %4049 = vrot.lane.b32.xlu0 %v3146, 111
  %v4050 = vpop.permute.xlu0 %4049
  %4051 = vrot.lane.b32.xlu0 %v717, 111
  %v4052 = vpop.permute.xlu0 %4051
  %4053 = vrot.lane.b32.xlu0 %v721, 111
  %v4054 = vpop.permute.xlu0 %4053
  %4055 = vrot.lane.b32.xlu0 %v3134, 111
  %v4056 = vpop.permute.xlu0 %4055
  %4057 = vrot.lane.b32.xlu0 %v3138, 111
  %v4058 = vpop.permute.xlu0 %4057
  %4059 = vrot.lane.b32.xlu0 %v3144, 111
  %v4060 = vpop.permute.xlu0 %4059
  %4061 = vrot.lane.b32.xlu0 %v3148, 111
  %v4062 = vpop.permute.xlu0 %4061
  %4063 = vrot.lane.b32.xlu0 %v718, 111
  %v4064 = vpop.permute.xlu0 %4063
  %4065 = vrot.lane.b32.xlu0 %v722, 111
  %v4066 = vpop.permute.xlu0 %4065
  %4067 = vrot.lane.b32.xlu0 %v3185, 111
  %v4068 = vpop.permute.xlu0 %4067
  %4069 = vrot.lane.b32.xlu0 %v3189, 111
  %v4070 = vpop.permute.xlu0 %4069
  %4071 = vrot.lane.b32.xlu0 %v3195, 111
  %v4072 = vpop.permute.xlu0 %4071
  %4073 = vrot.lane.b32.xlu0 %v3199, 111
  %v4074 = vpop.permute.xlu0 %4073
  %4075 = vrot.lane.b32.xlu0 %v719, 111
  %v4076 = vpop.permute.xlu0 %4075
  %4077 = vrot.lane.b32.xlu0 %v723, 111
  %v4078 = vpop.permute.xlu0 %4077
  %4079 = vrot.lane.b32.xlu0 %v3187, 111
  %v4080 = vpop.permute.xlu0 %4079
  %4081 = vrot.lane.b32.xlu0 %v3191, 111
  %v4082 = vpop.permute.xlu0 %4081
  %4083 = vrot.lane.b32.xlu0 %v3197, 111
  %v4084 = vpop.permute.xlu0 %4083
  %4085 = vrot.lane.b32.xlu0 %v3201, 111
  %v4086 = vpop.permute.xlu0 %4085
  %4087 = vrot.lane.b32.xlu0 %v720, 111
  %v4088 = vpop.permute.xlu0 %4087
  %4089 = vrot.lane.b32.xlu0 %v724, 111
  %v4090 = vpop.permute.xlu0 %4089
  %v4091 = vsel %vm543, %v4068, %v4080
  %v4092 = vsel %vm543, %v4070, %v4082
  %v4093 = vsel %vm543, %v4072, %v4084
  %v4094 = vsel %vm543, %v4074, %v4086
  %v4095 = vsel %vm543, %v4076, %v4088
  %v4096 = vsel %vm543, %v4078, %v4090
  %v4097 = vsel %vm543, %v4056, %v4068
  %v4098 = vsel %vm543, %v4058, %v4070
  %v4099 = vsel %vm543, %v4060, %v4072
  %v4100 = vsel %vm543, %v4062, %v4074
  %v4101 = vsel %vm543, %v4064, %v4076
  %v4102 = vsel %vm543, %v4066, %v4078
  %v4103 = vsel %vm543, %v4044, %v4056
  %v4104 = vsel %vm543, %v4046, %v4058
  %v4105 = vsel %vm543, %v4048, %v4060
  %v4106 = vsel %vm543, %v4050, %v4062
  %v4107 = vsel %vm543, %v4052, %v4064
  %v4108 = vsel %vm543, %v4054, %v4066
  %v4109 = vsel %vm543, %v4080, %v4044
  %v4110 = vsel %vm543, %v4082, %v4046
  %v4111 = vsel %vm543, %v4084, %v4048
  %v4112 = vsel %vm543, %v4086, %v4050
  %v4113 = vsel %vm543, %v4088, %v4052
  %v4114 = vsel %vm543, %v4090, %v4054
  %v4115 = vmul.f32 %v4103, %v166
  %v4116 = vmul.f32 %v4097, %v167
  %v4117 = vmul.f32 %v4091, %v168
  %v4118 = vmul.f32 %v4109, %v169
  %v4119 = vmul.f32 %v4104, %v166
  %v4120 = vmul.f32 %v4098, %v167
  %v4121 = vmul.f32 %v4092, %v168
  %v4122 = vmul.f32 %v4110, %v169
  %v4123 = vmul.f32 %v4105, %v166
  %v4124 = vmul.f32 %v4099, %v167
  %v4125 = vmul.f32 %v4093, %v168
  %v4126 = vmul.f32 %v4111, %v169
  %v4127 = vmul.f32 %v4106, %v166
  %v4128 = vmul.f32 %v4100, %v167
  %v4129 = vmul.f32 %v4094, %v168
  %v4130 = vmul.f32 %v4112, %v169
  %v4131 = vmul.f32 %v4107, %v166
  %v4132 = vmul.f32 %v4101, %v167
  %v4133 = vmul.f32 %v4095, %v168
  %v4134 = vmul.f32 %v4113, %v169
  %v4135 = vmul.f32 %v4108, %v166
  %v4136 = vmul.f32 %v4102, %v167
  %v4137 = vmul.f32 %v4096, %v168
  %v4138 = vmul.f32 %v4114, %v169
  %v4139 = vpack.c.bf16 %v4119, %v4115
  %v4140 = vpack.c.bf16 %v4120, %v4116
  %v4141 = vpack.c.bf16 %v4121, %v4117
  %v4142 = vpack.c.bf16 %v4122, %v4118
  %v4143 = vpack.c.bf16 %v4127, %v4123
  %v4144 = vpack.c.bf16 %v4128, %v4124
  %v4145 = vpack.c.bf16 %v4129, %v4125
  %v4146 = vpack.c.bf16 %v4130, %v4126
  %v4147 = vpack.c.bf16 %v4135, %v4131
  %v4148 = vpack.c.bf16 %v4136, %v4132
  %v4149 = vpack.c.bf16 %v4137, %v4133
  %v4150 = vpack.c.bf16 %v4138, %v4134
  %4151 = vst [vmem:[#allocation2 + $0x300] sm:$0xff] %v4139
  %4152 = vst [vmem:[#allocation2 + $0x308] sm:$0xff] %v4140
  %4153 = vst [vmem:[#allocation2 + $0x310] sm:$0xff] %v4141
  %4154 = vst [vmem:[#allocation2 + $0x318] sm:$0xff] %v4142
  %4155 = vst [vmem:[#allocation2 + $0x320] sm:$0xff] %v4143
  %4156 = vst [vmem:[#allocation2 + $0x328] sm:$0xff] %v4144
  %4157 = vst [vmem:[#allocation2 + $0x330] sm:$0xff] %v4145
  %4158 = vst [vmem:[#allocation2 + $0x338] sm:$0xff] %v4146
  %4159 = vst [vmem:[#allocation2 + $0x340] sm:$0xff] %v4147
  %4160 = vst [vmem:[#allocation2 + $0x348] sm:$0xff] %v4148
  %4161 = vst [vmem:[#allocation2 + $0x350] sm:$0xff] %v4149
  %4162 = vst [vmem:[#allocation2 + $0x358] sm:$0xff] %v4150
  %v4163 = vld [vmem:[%s9] sm:$0xff]
  %v4164 = vld [vmem:[%s9 + $0x8] sm:$0xff]
  %v4165 = vld [vmem:[%s9 + $0x10] sm:$0xff]
  %v4166 = vld [vmem:[%s9 + $0x18] sm:$0xff]
  %v4167 = vld [vmem:[#allocation2] sm:$0xff]
  %v4168 = vld [vmem:[#allocation2 + $0x8] sm:$0xff]
  %v4169 = vld [vmem:[#allocation2 + $0x10] sm:$0xff]
  %v4170 = vld [vmem:[#allocation2 + $0x18] sm:$0xff]
  %v4171 = vld [vmem:[#allocation2 + $0x20] sm:$0xff]
  %v4172 = vld [vmem:[#allocation2 + $0x28] sm:$0xff]
  %v4173 = vld [vmem:[#allocation2 + $0x30] sm:$0xff]
  %v4174 = vld [vmem:[#allocation2 + $0x38] sm:$0xff]
  %v4175 = vld [vmem:[#allocation2 + $0x40] sm:$0xff]
  %v4176 = vld [vmem:[#allocation2 + $0x48] sm:$0xff]
  %v4177 = vld [vmem:[#allocation2 + $0x50] sm:$0xff]
  %v4178 = vld [vmem:[#allocation2 + $0x58] sm:$0xff]
  %v4179 = vld [vmem:[#allocation2 + $0x60] sm:$0xff]
  %v4180 = vld [vmem:[#allocation2 + $0x68] sm:$0xff]
  %v4181 = vld [vmem:[#allocation2 + $0x70] sm:$0xff]
  %v4182 = vld [vmem:[#allocation2 + $0x78] sm:$0xff]
  %v4183 = vld [vmem:[#allocation2 + $0x80] sm:$0xff]
  %v4184 = vld [vmem:[#allocation2 + $0x88] sm:$0xff]
  %v4185 = vld [vmem:[#allocation2 + $0x90] sm:$0xff]
  %v4186 = vld [vmem:[#allocation2 + $0x98] sm:$0xff]
  %v4187 = vld [vmem:[#allocation2 + $0xa0] sm:$0xff]
  %v4188 = vld [vmem:[#allocation2 + $0xa8] sm:$0xff]
  %v4189 = vld [vmem:[#allocation2 + $0xb0] sm:$0xff]
  %v4190 = vld [vmem:[#allocation2 + $0xb8] sm:$0xff]
  %v4191 = vld [vmem:[#allocation2 + $0xc0] sm:$0xff]
  %v4192 = vld [vmem:[#allocation2 + $0xc8] sm:$0xff]
  %v4193 = vld [vmem:[#allocation2 + $0xd0] sm:$0xff]
  %v4194 = vld [vmem:[#allocation2 + $0xd8] sm:$0xff]
  %v4195 = vld [vmem:[#allocation2 + $0xe0] sm:$0xff]
  %v4196 = vld [vmem:[#allocation2 + $0xe8] sm:$0xff]
  %v4197 = vld [vmem:[#allocation2 + $0xf0] sm:$0xff]
  %v4198 = vld [vmem:[#allocation2 + $0xf8] sm:$0xff]
  %v4199 = vld [vmem:[#allocation2 + $0x100] sm:$0xff]
  %v4200 = vld [vmem:[#allocation2 + $0x108] sm:$0xff]
  %v4201 = vld [vmem:[#allocation2 + $0x110] sm:$0xff]
  %v4202 = vld [vmem:[#allocation2 + $0x118] sm:$0xff]
  %v4203 = vld [vmem:[#allocation2 + $0x120] sm:$0xff]
  %v4204 = vld [vmem:[#allocation2 + $0x128] sm:$0xff]
  %v4205 = vld [vmem:[#allocation2 + $0x130] sm:$0xff]
  %v4206 = vld [vmem:[#allocation2 + $0x138] sm:$0xff]
  %v4207 = vld [vmem:[#allocation2 + $0x140] sm:$0xff]
  %v4208 = vld [vmem:[#allocation2 + $0x148] sm:$0xff]
  %v4209 = vld [vmem:[#allocation2 + $0x150] sm:$0xff]
  %v4210 = vld [vmem:[#allocation2 + $0x158] sm:$0xff]
  %v4211 = vld [vmem:[#allocation2 + $0x160] sm:$0xff]
  %v4212 = vld [vmem:[#allocation2 + $0x168] sm:$0xff]
  %v4213 = vld [vmem:[#allocation2 + $0x170] sm:$0xff]
  %v4214 = vld [vmem:[#allocation2 + $0x178] sm:$0xff]
  %v4215 = vld [vmem:[#allocation2 + $0x180] sm:$0xff]
  %v4216 = vld [vmem:[#allocation2 + $0x188] sm:$0xff]
  %v4217 = vld [vmem:[#allocation2 + $0x190] sm:$0xff]
  %v4218 = vld [vmem:[#allocation2 + $0x198] sm:$0xff]
  %v4219 = vld [vmem:[#allocation2 + $0x1a0] sm:$0xff]
  %v4220 = vld [vmem:[#allocation2 + $0x1a8] sm:$0xff]
  %v4221 = vld [vmem:[#allocation2 + $0x1b0] sm:$0xff]
  %v4222 = vld [vmem:[#allocation2 + $0x1b8] sm:$0xff]
  %v4223 = vld [vmem:[#allocation2 + $0x1c0] sm:$0xff]
  %v4224 = vld [vmem:[#allocation2 + $0x1c8] sm:$0xff]
  %v4225 = vld [vmem:[#allocation2 + $0x1d0] sm:$0xff]
  %v4226 = vld [vmem:[#allocation2 + $0x1d8] sm:$0xff]
  %v4227 = vld [vmem:[#allocation2 + $0x1e0] sm:$0xff]
  %v4228 = vld [vmem:[#allocation2 + $0x1e8] sm:$0xff]
  %v4229 = vld [vmem:[#allocation2 + $0x1f0] sm:$0xff]
  %v4230 = vld [vmem:[#allocation2 + $0x1f8] sm:$0xff]
  %v4231 = vld [vmem:[#allocation2 + $0x200] sm:$0xff]
  %v4232 = vld [vmem:[#allocation2 + $0x208] sm:$0xff]
  %v4233 = vld [vmem:[#allocation2 + $0x210] sm:$0xff]
  %v4234 = vld [vmem:[#allocation2 + $0x218] sm:$0xff]
  %v4235 = vld [vmem:[#allocation2 + $0x220] sm:$0xff]
  %v4236 = vld [vmem:[#allocation2 + $0x228] sm:$0xff]
  %v4237 = vld [vmem:[#allocation2 + $0x230] sm:$0xff]
  %v4238 = vld [vmem:[#allocation2 + $0x238] sm:$0xff]
  %v4239 = vld [vmem:[#allocation2 + $0x240] sm:$0xff]
  %v4240 = vld [vmem:[#allocation2 + $0x248] sm:$0xff]
  %v4241 = vld [vmem:[#allocation2 + $0x250] sm:$0xff]
  %v4242 = vld [vmem:[#allocation2 + $0x258] sm:$0xff]
  %v4243 = vld [vmem:[#allocation2 + $0x260] sm:$0xff]
  %v4244 = vld [vmem:[#allocation2 + $0x268] sm:$0xff]
  %v4245 = vld [vmem:[#allocation2 + $0x270] sm:$0xff]
  %v4246 = vld [vmem:[#allocation2 + $0x278] sm:$0xff]
  %v4247 = vld [vmem:[#allocation2 + $0x280] sm:$0xff]
  %v4248 = vld [vmem:[#allocation2 + $0x288] sm:$0xff]
  %v4249 = vld [vmem:[#allocation2 + $0x290] sm:$0xff]
  %v4250 = vld [vmem:[#allocation2 + $0x298] sm:$0xff]
  %v4251 = vld [vmem:[#allocation2 + $0x2a0] sm:$0xff]
  %v4252 = vld [vmem:[#allocation2 + $0x2a8] sm:$0xff]
  %v4253 = vld [vmem:[#allocation2 + $0x2b0] sm:$0xff]
  %v4254 = vld [vmem:[#allocation2 + $0x2b8] sm:$0xff]
  %v4255 = vld [vmem:[#allocation2 + $0x2c0] sm:$0xff]
  %v4256 = vld [vmem:[#allocation2 + $0x2c8] sm:$0xff]
  %v4257 = vld [vmem:[#allocation2 + $0x2d0] sm:$0xff]
  %v4258 = vld [vmem:[#allocation2 + $0x2d8] sm:$0xff]
  %v4259 = vld [vmem:[#allocation2 + $0x2e0] sm:$0xff]
  %v4260 = vld [vmem:[#allocation2 + $0x2e8] sm:$0xff]
  %v4261 = vld [vmem:[#allocation2 + $0x2f0] sm:$0xff]
  %v4262 = vld [vmem:[#allocation2 + $0x2f8] sm:$0xff]
  %v4263 = vld [vmem:[#allocation2 + $0x300] sm:$0xff]
  %v4264 = vld [vmem:[#allocation2 + $0x308] sm:$0xff]
  %v4265 = vld [vmem:[#allocation2 + $0x310] sm:$0xff]
  %v4266 = vld [vmem:[#allocation2 + $0x318] sm:$0xff]
  %v4267 = vld [vmem:[#allocation2 + $0x320] sm:$0xff]
  %v4268 = vld [vmem:[#allocation2 + $0x328] sm:$0xff]
  %v4269 = vld [vmem:[#allocation2 + $0x330] sm:$0xff]
  %v4270 = vld [vmem:[#allocation2 + $0x338] sm:$0xff]
  %v4271 = vld [vmem:[#allocation2 + $0x340] sm:$0xff]
  %v4272 = vld [vmem:[#allocation2 + $0x348] sm:$0xff]
  %v4273 = vld [vmem:[#allocation2 + $0x350] sm:$0xff]
  %v4274 = vld [vmem:[#allocation2 + $0x358] sm:$0xff]
  %v4275 = vld [vmem:[%s10] sm:$0xff]
  %v4276 = vld [vmem:[%s10 + $0x8] sm:$0xff]
  %4278 = vset.pattern.permute.xlu0 0
  %4279 = vperm.xlu0 %4278, %v4275
  %v4280 = vpop.permute.xlu0 %4279
  %4283 = vset.pattern.permute.xlu0 0
  %4284 = vperm.xlu0 %4283, %v4276
  %v4285 = vpop.permute.xlu0 %4284
  %v4291 = vunpack.c.l.b16 %v4163
  %v4292 = vunpack.c.h.b16 %v4163
  %v4293 = vunpack.c.l.b16 %v4164
  %v4294 = vunpack.c.h.b16 %v4164
  %v4295 = vunpack.c.l.b16 %v4165
  %v4296 = vunpack.c.h.b16 %v4165
  %v4297 = vunpack.c.l.b16 %v4166
  %v4298 = vunpack.c.h.b16 %v4166
  %v4299 = vpack.c.b16 %v4295, %v4291
  %v4300 = vpack.c.b16 %v4296, %v4292
  %v4301 = vpack.c.b16 %v4297, %v4293
  %v4302 = vpack.c.b16 %v4298, %v4294
  %vm4306 = vcmask 392192
  %v4308 = vsel %vm4306, %v4302, 0
  %4310 = vmatprep.subr.bf16.mxu0 %v4168
  %4311 = vmatpush1.bf16.msra.mxu0 %v4167
  %4312 = vmatprep.subr.bf16.mxu0 %v4172
  %4313 = vmatpush1.bf16.msra.mxu0 %v4171
  %4314 = vmatprep.subr.bf16.mxu0 %v4176
  %4315 = vmatpush1.bf16.msra.mxu0 %v4175
  %4316 = vmatprep.subr.bf16.mxu0 %v4180
  %4317 = vmatpush1.bf16.msra.mxu0 %v4179
  %4318 = vmatprep.subr.bf16.mxu0 %v4184
  %4319 = vmatpush1.bf16.msra.mxu0 %v4183
  %4320 = vmatprep.subr.bf16.mxu0 %v4188
  %4321 = vmatpush1.bf16.msra.mxu0 %v4187
  %4322 = vmatprep.subr.bf16.mxu0 %v4192
  %4323 = vmatpush1.bf16.msra.mxu0 %v4191
  %4324 = vmatprep.subr.bf16.mxu0 %v4196
  %4325 = vmatpush1.bf16.msra.mxu0 %v4195
  %4326 = vmatprep.subr.bf16.mxu0 %v4200
  %4327 = vmatpush1.bf16.msra.mxu0 %v4199
  %4328 = vmatprep.subr.bf16.mxu0 %v4204
  %4329 = vmatpush1.bf16.msra.mxu0 %v4203
  %4330 = vmatprep.subr.bf16.mxu0 %v4208
  %4331 = vmatpush1.bf16.msra.mxu0 %v4207
  %4332 = vmatprep.subr.bf16.mxu0 %v4212
  %4333 = vmatpush1.bf16.msra.mxu0 %v4211
  %4334 = vmatprep.subr.bf16.mxu0 %v4216
  %4335 = vmatpush1.bf16.msra.mxu0 %v4215
  %4336 = vmatprep.subr.bf16.mxu0 %v4220
  %4337 = vmatpush1.bf16.msra.mxu0 %v4219
  %4338 = vmatprep.subr.bf16.mxu0 %v4224
  %4339 = vmatpush1.bf16.msra.mxu0 %v4223
  %4340 = vmatprep.subr.bf16.mxu0 %v4228
  %4341 = vmatpush1.bf16.msra.mxu0 %v4227
  %4342 = vmatprep.mubr.bf16.mxu0 %v4300
  %4343 = vmatmul.mubr.bf16.gmra.mrb[0].mxu0 %v4299
  %v4344 = vpop.f32.mrb[0].mxu0
  %v4345 = vadd.f32 %v4280, %v4344
  %v4346 = vpop.f32.mrb[0].mxu0
  %v4347 = vadd.f32 %v4280, %v4346
  %v4348 = vpop.f32.mrb[0].mxu0
  %v4349 = vadd.f32 %v4285, %v4348
  %v4350 = vpop.f32.mrb[0].mxu0
  %v4351 = vadd.f32 %v4285, %v4350
  %4352 = vdwg.mxu0
  %4353 = vmatprep.subr.bf16.mxu0 %v4232
  %4354 = vmatpush1.bf16.msra.mxu0 %v4231
  %4355 = vmatprep.subr.bf16.mxu0 %v4236
  %4356 = vmatpush1.bf16.msra.mxu0 %v4235
  %4357 = vmatprep.subr.bf16.mxu0 %v4240
  %4358 = vmatpush1.bf16.msra.mxu0 %v4239
  %4359 = vmatprep.subr.bf16.mxu0 %v4244
  %4360 = vmatpush1.bf16.msra.mxu0 %v4243
  %4361 = vmatprep.subr.bf16.mxu0 %v4248
  %4362 = vmatpush1.bf16.msra.mxu0 %v4247
  %4363 = vmatprep.subr.bf16.mxu0 %v4252
  %4364 = vmatpush1.bf16.msra.mxu0 %v4251
  %4365 = vmatprep.subr.bf16.mxu0 %v4256
  %4366 = vmatpush1.bf16.msra.mxu0 %v4255
  %4367 = vmatprep.subr.bf16.mxu0 %v4260
  %4368 = vmatpush1.bf16.msra.mxu0 %v4259
  %4369 = vmatprep.subr.bf16.mxu0 %v4264
  %4370 = vmatpush1.bf16.msra.mxu0 %v4263
  %4371 = vmatprep.subr.bf16.mxu0 %v4268
  %4372 = vmatpush1.bf16.msra.mxu0 %v4267
  %4373 = vmatprep.subr.bf16.mxu0 %v4272
  %4374 = vmatpush1.bf16.msra.mxu0 %v4271
  %4375 = vmatprep.subr.bf16.mxu0 0
  %4376 = vmatpush1.bf16.msra.mxu0 0
  %4377 = vmatprep.subr.bf16.mxu0 0
  %4378 = vmatpush1.bf16.msra.mxu0 0
  %4379 = vmatprep.subr.bf16.mxu0 0
  %4380 = vmatpush1.bf16.msra.mxu0 0
  %4381 = vmatprep.subr.bf16.mxu0 0
  %4382 = vmatpush1.bf16.msra.mxu0 0
  %4383 = vmatprep.subr.bf16.mxu0 0
  %4384 = vmatpush1.bf16.msra.mxu0 0
  %4385 = vmatprep.mubr.bf16.mxu0 %v4308
  %4386 = vmatmul.mubr.bf16.gmra.mrb[0].mxu0 %v4301
  %v4387 = vpop.f32.mrb[0].mxu0
  %v4388 = vadd.f32 %v4345, %v4387
  %v4389 = vpop.f32.mrb[0].mxu0
  %v4390 = vadd.f32 %v4347, %v4389
  %v4391 = vpop.f32.mrb[0].mxu0
  %v4392 = vadd.f32 %v4349, %v4391
  %v4393 = vpop.f32.mrb[0].mxu0
  %v4394 = vadd.f32 %v4351, %v4393
  %4395 = vdwg.mxu0
  %4396 = vmatprep.subr.bf16.mxu0 %v4170
  %4397 = vmatpush1.bf16.msra.mxu0 %v4169
  %4398 = vmatprep.subr.bf16.mxu0 %v4174
  %4399 = vmatpush1.bf16.msra.mxu0 %v4173
  %4400 = vmatprep.subr.bf16.mxu0 %v4178
  %4401 = vmatpush1.bf16.msra.mxu0 %v4177
  %4402 = vmatprep.subr.bf16.mxu0 %v4182
  %4403 = vmatpush1.bf16.msra.mxu0 %v4181
  %4404 = vmatprep.subr.bf16.mxu0 %v4186
  %4405 = vmatpush1.bf16.msra.mxu0 %v4185
  %4406 = vmatprep.subr.bf16.mxu0 %v4190
  %4407 = vmatpush1.bf16.msra.mxu0 %v4189
  %4408 = vmatprep.subr.bf16.mxu0 %v4194
  %4409 = vmatpush1.bf16.msra.mxu0 %v4193
  %4410 = vmatprep.subr.bf16.mxu0 %v4198
  %4411 = vmatpush1.bf16.msra.mxu0 %v4197
  %4412 = vmatprep.subr.bf16.mxu0 %v4202
  %4413 = vmatpush1.bf16.msra.mxu0 %v4201
  %4414 = vmatprep.subr.bf16.mxu0 %v4206
  %4415 = vmatpush1.bf16.msra.mxu0 %v4205
  %4416 = vmatprep.subr.bf16.mxu0 %v4210
  %4417 = vmatpush1.bf16.msra.mxu0 %v4209
  %4418 = vmatprep.subr.bf16.mxu0 %v4214
  %4419 = vmatpush1.bf16.msra.mxu0 %v4213
  %4420 = vmatprep.subr.bf16.mxu0 %v4218
  %4421 = vmatpush1.bf16.msra.mxu0 %v4217
  %4422 = vmatprep.subr.bf16.mxu0 %v4222
  %4423 = vmatpush1.bf16.msra.mxu0 %v4221
  %4424 = vmatprep.subr.bf16.mxu0 %v4226
  %4425 = vmatpush1.bf16.msra.mxu0 %v4225
  %4426 = vmatprep.subr.bf16.mxu0 %v4230
  %4427 = vmatpush1.bf16.msra.mxu0 %v4229
  %4428 = vmatprep.mubr.bf16.mxu0 %v4300
  %4429 = vmatmul.mubr.bf16.gmra.mrb[0].mxu0 %v4299
  %v4430 = vpop.f32.mrb[0].mxu0
  %v4431 = vadd.f32 %v4280, %v4430
  %v4432 = vpop.f32.mrb[0].mxu0
  %v4433 = vadd.f32 %v4280, %v4432
  %v4434 = vpop.f32.mrb[0].mxu0
  %v4435 = vadd.f32 %v4285, %v4434
  %v4436 = vpop.f32.mrb[0].mxu0
  %v4437 = vadd.f32 %v4285, %v4436
  %4438 = vdwg.mxu0
  %4439 = vmatprep.subr.bf16.mxu0 %v4234
  %4440 = vmatpush1.bf16.msra.mxu0 %v4233
  %4441 = vmatprep.subr.bf16.mxu0 %v4238
  %4442 = vmatpush1.bf16.msra.mxu0 %v4237
  %4443 = vmatprep.subr.bf16.mxu0 %v4242
  %4444 = vmatpush1.bf16.msra.mxu0 %v4241
  %4445 = vmatprep.subr.bf16.mxu0 %v4246
  %4446 = vmatpush1.bf16.msra.mxu0 %v4245
  %4447 = vmatprep.subr.bf16.mxu0 %v4250
  %4448 = vmatpush1.bf16.msra.mxu0 %v4249
  %4449 = vmatprep.subr.bf16.mxu0 %v4254
  %4450 = vmatpush1.bf16.msra.mxu0 %v4253
  %4451 = vmatprep.subr.bf16.mxu0 %v4258
  %4452 = vmatpush1.bf16.msra.mxu0 %v4257
  %4453 = vmatprep.subr.bf16.mxu0 %v4262
  %4454 = vmatpush1.bf16.msra.mxu0 %v4261
  %4455 = vmatprep.subr.bf16.mxu0 %v4266
  %4456 = vmatpush1.bf16.msra.mxu0 %v4265
  %4457 = vmatprep.subr.bf16.mxu0 %v4270
  %4458 = vmatpush1.bf16.msra.mxu0 %v4269
  %4459 = vmatprep.subr.bf16.mxu0 %v4274
  %4460 = vmatpush1.bf16.msra.mxu0 %v4273
  %4461 = vmatprep.subr.bf16.mxu0 0
  %4462 = vmatpush1.bf16.msra.mxu0 0
  %4463 = vmatprep.subr.bf16.mxu0 0
  %4464 = vmatpush1.bf16.msra.mxu0 0
  %4465 = vmatprep.subr.bf16.mxu0 0
  %4466 = vmatpush1.bf16.msra.mxu0 0
  %4467 = vmatprep.subr.bf16.mxu0 0
  %4468 = vmatpush1.bf16.msra.mxu0 0
  %4469 = vmatprep.subr.bf16.mxu0 0
  %4470 = vmatpush1.bf16.msra.mxu0 0
  %4471 = vmatprep.mubr.bf16.mxu0 %v4308
  %4472 = vmatmul.mubr.bf16.gmra.mrb[0].mxu0 %v4301
  %v4473 = vpop.f32.mrb[0].mxu0
  %v4474 = vadd.f32 %v4431, %v4473
  %v4475 = vpop.f32.mrb[0].mxu0
  %v4476 = vadd.f32 %v4433, %v4475
  %v4477 = vpop.f32.mrb[0].mxu0
  %v4478 = vadd.f32 %v4435, %v4477
  %v4479 = vpop.f32.mrb[0].mxu0
  %v4480 = vadd.f32 %v4437, %v4479
  %4481 = vdwg.mxu0
  %v4482 = vmax.f32 %v4388, 0.0
  %v4483 = vmax.f32 %v4390, 0.0
  %v4484 = vmax.f32 %v4474, 0.0
  %v4485 = vmax.f32 %v4476, 0.0
  %v4486 = vmax.f32 %v4392, 0.0
  %v4487 = vmax.f32 %v4394, 0.0
  %v4488 = vmax.f32 %v4478, 0.0
  %v4489 = vmax.f32 %v4480, 0.0
  %4490 = vrot.lane.b32.xlu0 %v4482, 17
  %v4491 = vpop.permute.xlu0 %4490
  %4492 = vrot.lane.b32.xlu0 %v4486, 17
  %v4493 = vpop.permute.xlu0 %4492
  %4494 = vrot.lane.b32.xlu0 %v4483, 17
  %v4495 = vpop.permute.xlu0 %4494
  %4496 = vrot.lane.b32.xlu0 %v4487, 17
  %v4497 = vpop.permute.xlu0 %4496
  %4498 = vrot.lane.b32.xlu0 %v4484, 17
  %v4499 = vpop.permute.xlu0 %4498
  %4500 = vrot.lane.b32.xlu0 %v4488, 17
  %v4501 = vpop.permute.xlu0 %4500
  %4502 = vrot.lane.b32.xlu0 %v4485, 17
  %v4503 = vpop.permute.xlu0 %4502
  %4504 = vrot.lane.b32.xlu0 %v4489, 17
  %v4505 = vpop.permute.xlu0 %4504
  %v4506 = vsel %vm248, %v4499, %v4503
  %v4507 = vsel %vm248, %v4501, %v4505
  %v4508 = vsel %vm248, %v4495, %v4499
  %v4509 = vsel %vm248, %v4497, %v4501
  %v4510 = vsel %vm248, %v4491, %v4495
  %v4511 = vsel %vm248, %v4493, %v4497
  %v4512 = vsel %vm248, %v4503, %v4491
  %v4513 = vsel %vm248, %v4505, %v4493
  %v4514 = vmul.f32 %v4512, %v98
  %v4515 = vmul.f32 %v4510, %v99
  %v4516 = vmul.f32 %v4508, %v100
  %v4517 = vmul.f32 %v4506, %v101
  %v4518 = vmul.f32 %v4513, %v98
  %v4519 = vmul.f32 %v4511, %v99
  %v4520 = vmul.f32 %v4509, %v100
  %v4521 = vmul.f32 %v4507, %v101
  %v4522 = vpack.c.bf16 %v4518, %v4514
  %v4523 = vpack.c.bf16 %v4519, %v4515
  %v4524 = vpack.c.bf16 %v4520, %v4516
  %v4525 = vpack.c.bf16 %v4521, %v4517
  %4526 = vst [vmem:[#allocation2] sm:$0xff] %v4522
  %4527 = vst [vmem:[#allocation2 + $0x8] sm:$0xff] %v4523
  %4528 = vst [vmem:[#allocation2 + $0x10] sm:$0xff] %v4524
  %4529 = vst [vmem:[#allocation2 + $0x18] sm:$0xff] %v4525
  %4530 = vrot.lane.b32.xlu0 %v4482, 16
  %v4531 = vpop.permute.xlu0 %4530
  %4532 = vrot.lane.b32.xlu0 %v4486, 16
  %v4533 = vpop.permute.xlu0 %4532
  %4534 = vrot.lane.b32.xlu0 %v4483, 16
  %v4535 = vpop.permute.xlu0 %4534
  %4536 = vrot.lane.b32.xlu0 %v4487, 16
  %v4537 = vpop.permute.xlu0 %4536
  %4538 = vrot.lane.b32.xlu0 %v4484, 16
  %v4539 = vpop.permute.xlu0 %4538
  %4540 = vrot.lane.b32.xlu0 %v4488, 16
  %v4541 = vpop.permute.xlu0 %4540
  %4542 = vrot.lane.b32.xlu0 %v4485, 16
  %v4543 = vpop.permute.xlu0 %4542
  %4544 = vrot.lane.b32.xlu0 %v4489, 16
  %v4545 = vpop.permute.xlu0 %4544
  %v4546 = vsel %vm289, %v4539, %v4543
  %v4547 = vsel %vm289, %v4541, %v4545
  %v4548 = vsel %vm289, %v4535, %v4539
  %v4549 = vsel %vm289, %v4537, %v4541
  %v4550 = vsel %vm289, %v4531, %v4535
  %v4551 = vsel %vm289, %v4533, %v4537
  %v4552 = vsel %vm289, %v4543, %v4531
  %v4553 = vsel %vm289, %v4545, %v4533
  %v4554 = vmul.f32 %v4552, %v106
  %v4555 = vmul.f32 %v4550, %v107
  %v4556 = vmul.f32 %v4548, %v108
  %v4557 = vmul.f32 %v4546, %v109
  %v4558 = vmul.f32 %v4553, %v106
  %v4559 = vmul.f32 %v4551, %v107
  %v4560 = vmul.f32 %v4549, %v108
  %v4561 = vmul.f32 %v4547, %v109
  %v4562 = vpack.c.bf16 %v4558, %v4554
  %v4563 = vpack.c.bf16 %v4559, %v4555
  %v4564 = vpack.c.bf16 %v4560, %v4556
  %v4565 = vpack.c.bf16 %v4561, %v4557
  %4566 = vst [vmem:[#allocation2 + $0x20] sm:$0xff] %v4562
  %4567 = vst [vmem:[#allocation2 + $0x28] sm:$0xff] %v4563
  %4568 = vst [vmem:[#allocation2 + $0x30] sm:$0xff] %v4564
  %4569 = vst [vmem:[#allocation2 + $0x38] sm:$0xff] %v4565
  %4570 = vrot.lane.b32.xlu0 %v4482, 15
  %v4571 = vpop.permute.xlu0 %4570
  %4572 = vrot.lane.b32.xlu0 %v4486, 15
  %v4573 = vpop.permute.xlu0 %4572
  %4574 = vrot.lane.b32.xlu0 %v4483, 15
  %v4575 = vpop.permute.xlu0 %4574
  %4576 = vrot.lane.b32.xlu0 %v4487, 15
  %v4577 = vpop.permute.xlu0 %4576
  %4578 = vrot.lane.b32.xlu0 %v4484, 15
  %v4579 = vpop.permute.xlu0 %4578
  %4580 = vrot.lane.b32.xlu0 %v4488, 15
  %v4581 = vpop.permute.xlu0 %4580
  %4582 = vrot.lane.b32.xlu0 %v4485, 15
  %v4583 = vpop.permute.xlu0 %4582
  %4584 = vrot.lane.b32.xlu0 %v4489, 15
  %v4585 = vpop.permute.xlu0 %4584
  %v4586 = vsel %vm330, %v4579, %v4583
  %v4587 = vsel %vm330, %v4581, %v4585
  %v4588 = vsel %vm330, %v4575, %v4579
  %v4589 = vsel %vm330, %v4577, %v4581
  %v4590 = vsel %vm330, %v4571, %v4575
  %v4591 = vsel %vm330, %v4573, %v4577
  %v4592 = vsel %vm330, %v4583, %v4571
  %v4593 = vsel %vm330, %v4585, %v4573
  %v4594 = vmul.f32 %v4592, %v118
  %v4595 = vmul.f32 %v4590, %v119
  %v4596 = vmul.f32 %v4588, %v120
  %v4597 = vmul.f32 %v4586, %v121
  %v4598 = vmul.f32 %v4593, %v118
  %v4599 = vmul.f32 %v4591, %v119
  %v4600 = vmul.f32 %v4589, %v120
  %v4601 = vmul.f32 %v4587, %v121
  %v4602 = vpack.c.bf16 %v4598, %v4594
  %v4603 = vpack.c.bf16 %v4599, %v4595
  %v4604 = vpack.c.bf16 %v4600, %v4596
  %v4605 = vpack.c.bf16 %v4601, %v4597
  %4606 = vst [vmem:[#allocation2 + $0x40] sm:$0xff] %v4602
  %4607 = vst [vmem:[#allocation2 + $0x48] sm:$0xff] %v4603
  %4608 = vst [vmem:[#allocation2 + $0x50] sm:$0xff] %v4604
  %4609 = vst [vmem:[#allocation2 + $0x58] sm:$0xff] %v4605
  %4610 = vrot.lane.b32.xlu0 %v4482, 1
  %v4611 = vpop.permute.xlu0 %4610
  %4612 = vrot.lane.b32.xlu0 %v4486, 1
  %v4613 = vpop.permute.xlu0 %4612
  %4614 = vrot.lane.b32.xlu0 %v4483, 1
  %v4615 = vpop.permute.xlu0 %4614
  %4616 = vrot.lane.b32.xlu0 %v4487, 1
  %v4617 = vpop.permute.xlu0 %4616
  %4618 = vrot.lane.b32.xlu0 %v4484, 1
  %v4619 = vpop.permute.xlu0 %4618
  %4620 = vrot.lane.b32.xlu0 %v4488, 1
  %v4621 = vpop.permute.xlu0 %4620
  %4622 = vrot.lane.b32.xlu0 %v4485, 1
  %v4623 = vpop.permute.xlu0 %4622
  %4624 = vrot.lane.b32.xlu0 %v4489, 1
  %v4625 = vpop.permute.xlu0 %4624
  %v4626 = vsel %vm371, %v4619, %v4623
  %v4627 = vsel %vm371, %v4621, %v4625
  %v4628 = vsel %vm371, %v4615, %v4619
  %v4629 = vsel %vm371, %v4617, %v4621
  %v4630 = vsel %vm371, %v4611, %v4615
  %v4631 = vsel %vm371, %v4613, %v4617
  %v4632 = vsel %vm371, %v4623, %v4611
  %v4633 = vsel %vm371, %v4625, %v4613
  %v4634 = vmul.f32 %v4632, %v126
  %v4635 = vmul.f32 %v4630, %v127
  %v4636 = vmul.f32 %v4628, %v128
  %v4637 = vmul.f32 %v4626, %v129
  %v4638 = vmul.f32 %v4633, %v126
  %v4639 = vmul.f32 %v4631, %v127
  %v4640 = vmul.f32 %v4629, %v128
  %v4641 = vmul.f32 %v4627, %v129
  %v4642 = vpack.c.bf16 %v4638, %v4634
  %v4643 = vpack.c.bf16 %v4639, %v4635
  %v4644 = vpack.c.bf16 %v4640, %v4636
  %v4645 = vpack.c.bf16 %v4641, %v4637
  %4646 = vst [vmem:[#allocation2 + $0x60] sm:$0xff] %v4642
  %4647 = vst [vmem:[#allocation2 + $0x68] sm:$0xff] %v4643
  %4648 = vst [vmem:[#allocation2 + $0x70] sm:$0xff] %v4644
  %4649 = vst [vmem:[#allocation2 + $0x78] sm:$0xff] %v4645
  %v4650 = vpack.c.bf16 %v4486, %v4482
  %v4651 = vpack.c.bf16 %v4487, %v4483
  %v4652 = vpack.c.bf16 %v4488, %v4484
  %v4653 = vpack.c.bf16 %v4489, %v4485
  %4654 = vst [vmem:[#allocation2 + $0x80] sm:$0xff] %v4650
  %4655 = vst [vmem:[#allocation2 + $0x88] sm:$0xff] %v4651
  %4656 = vst [vmem:[#allocation2 + $0x90] sm:$0xff] %v4652
  %4657 = vst [vmem:[#allocation2 + $0x98] sm:$0xff] %v4653
  %4658 = vrot.lane.b32.xlu0 %v4482, 127
  %v4659 = vpop.permute.xlu0 %4658
  %4660 = vrot.lane.b32.xlu0 %v4486, 127
  %v4661 = vpop.permute.xlu0 %4660
  %4662 = vrot.lane.b32.xlu0 %v4483, 127
  %v4663 = vpop.permute.xlu0 %4662
  %4664 = vrot.lane.b32.xlu0 %v4487, 127
  %v4665 = vpop.permute.xlu0 %4664
  %4666 = vrot.lane.b32.xlu0 %v4484, 127
  %v4667 = vpop.permute.xlu0 %4666
  %4668 = vrot.lane.b32.xlu0 %v4488, 127
  %v4669 = vpop.permute.xlu0 %4668
  %4670 = vrot.lane.b32.xlu0 %v4485, 127
  %v4671 = vpop.permute.xlu0 %4670
  %4672 = vrot.lane.b32.xlu0 %v4489, 127
  %v4673 = vpop.permute.xlu0 %4672
  %v4674 = vsel %vm420, %v4667, %v4671
  %v4675 = vsel %vm420, %v4669, %v4673
  %v4676 = vsel %vm420, %v4663, %v4667
  %v4677 = vsel %vm420, %v4665, %v4669
  %v4678 = vsel %vm420, %v4659, %v4663
  %v4679 = vsel %vm420, %v4661, %v4665
  %v4680 = vsel %vm420, %v4671, %v4659
  %v4681 = vsel %vm420, %v4673, %v4661
  %v4682 = vmul.f32 %v4678, %v134
  %v4683 = vmul.f32 %v4676, %v135
  %v4684 = vmul.f32 %v4674, %v136
  %v4685 = vmul.f32 %v4680, %v137
  %v4686 = vmul.f32 %v4679, %v134
  %v4687 = vmul.f32 %v4677, %v135
  %v4688 = vmul.f32 %v4675, %v136
  %v4689 = vmul.f32 %v4681, %v137
  %v4690 = vpack.c.bf16 %v4686, %v4682
  %v4691 = vpack.c.bf16 %v4687, %v4683
  %v4692 = vpack.c.bf16 %v4688, %v4684
  %v4693 = vpack.c.bf16 %v4689, %v4685
  %4694 = vst [vmem:[#allocation2 + $0xa0] sm:$0xff] %v4690
  %4695 = vst [vmem:[#allocation2 + $0xa8] sm:$0xff] %v4691
  %4696 = vst [vmem:[#allocation2 + $0xb0] sm:$0xff] %v4692
  %4697 = vst [vmem:[#allocation2 + $0xb8] sm:$0xff] %v4693
  %4698 = vrot.lane.b32.xlu0 %v4482, 113
  %v4699 = vpop.permute.xlu0 %4698
  %4700 = vrot.lane.b32.xlu0 %v4486, 113
  %v4701 = vpop.permute.xlu0 %4700
  %4702 = vrot.lane.b32.xlu0 %v4483, 113
  %v4703 = vpop.permute.xlu0 %4702
  %4704 = vrot.lane.b32.xlu0 %v4487, 113
  %v4705 = vpop.permute.xlu0 %4704
  %4706 = vrot.lane.b32.xlu0 %v4484, 113
  %v4707 = vpop.permute.xlu0 %4706
  %4708 = vrot.lane.b32.xlu0 %v4488, 113
  %v4709 = vpop.permute.xlu0 %4708
  %4710 = vrot.lane.b32.xlu0 %v4485, 113
  %v4711 = vpop.permute.xlu0 %4710
  %4712 = vrot.lane.b32.xlu0 %v4489, 113
  %v4713 = vpop.permute.xlu0 %4712
  %v4714 = vsel %vm461, %v4707, %v4711
  %v4715 = vsel %vm461, %v4709, %v4713
  %v4716 = vsel %vm461, %v4703, %v4707
  %v4717 = vsel %vm461, %v4705, %v4709
  %v4718 = vsel %vm461, %v4699, %v4703
  %v4719 = vsel %vm461, %v4701, %v4705
  %v4720 = vsel %vm461, %v4711, %v4699
  %v4721 = vsel %vm461, %v4713, %v4701
  %v4722 = vmul.f32 %v4718, %v146
  %v4723 = vmul.f32 %v4716, %v147
  %v4724 = vmul.f32 %v4714, %v148
  %v4725 = vmul.f32 %v4720, %v149
  %v4726 = vmul.f32 %v4719, %v146
  %v4727 = vmul.f32 %v4717, %v147
  %v4728 = vmul.f32 %v4715, %v148
  %v4729 = vmul.f32 %v4721, %v149
  %v4730 = vpack.c.bf16 %v4726, %v4722
  %v4731 = vpack.c.bf16 %v4727, %v4723
  %v4732 = vpack.c.bf16 %v4728, %v4724
  %v4733 = vpack.c.bf16 %v4729, %v4725
  %4734 = vst [vmem:[#allocation2 + $0xc0] sm:$0xff] %v4730
  %4735 = vst [vmem:[#allocation2 + $0xc8] sm:$0xff] %v4731
  %4736 = vst [vmem:[#allocation2 + $0xd0] sm:$0xff] %v4732
  %4737 = vst [vmem:[#allocation2 + $0xd8] sm:$0xff] %v4733
  %4738 = vrot.lane.b32.xlu0 %v4482, 112
  %v4739 = vpop.permute.xlu0 %4738
  %4740 = vrot.lane.b32.xlu0 %v4486, 112
  %v4741 = vpop.permute.xlu0 %4740
  %4742 = vrot.lane.b32.xlu0 %v4483, 112
  %v4743 = vpop.permute.xlu0 %4742
  %4744 = vrot.lane.b32.xlu0 %v4487, 112
  %v4745 = vpop.permute.xlu0 %4744
  %4746 = vrot.lane.b32.xlu0 %v4484, 112
  %v4747 = vpop.permute.xlu0 %4746
  %4748 = vrot.lane.b32.xlu0 %v4488, 112
  %v4749 = vpop.permute.xlu0 %4748
  %4750 = vrot.lane.b32.xlu0 %v4485, 112
  %v4751 = vpop.permute.xlu0 %4750
  %4752 = vrot.lane.b32.xlu0 %v4489, 112
  %v4753 = vpop.permute.xlu0 %4752
  %v4754 = vsel %vm502, %v4747, %v4751
  %v4755 = vsel %vm502, %v4749, %v4753
  %v4756 = vsel %vm502, %v4743, %v4747
  %v4757 = vsel %vm502, %v4745, %v4749
  %v4758 = vsel %vm502, %v4739, %v4743
  %v4759 = vsel %vm502, %v4741, %v4745
  %v4760 = vsel %vm502, %v4751, %v4739
  %v4761 = vsel %vm502, %v4753, %v4741
  %v4762 = vmul.f32 %v4758, %v154
  %v4763 = vmul.f32 %v4756, %v155
  %v4764 = vmul.f32 %v4754, %v156
  %v4765 = vmul.f32 %v4760, %v157
  %v4766 = vmul.f32 %v4759, %v154
  %v4767 = vmul.f32 %v4757, %v155
  %v4768 = vmul.f32 %v4755, %v156
  %v4769 = vmul.f32 %v4761, %v157
  %v4770 = vpack.c.bf16 %v4766, %v4762
  %v4771 = vpack.c.bf16 %v4767, %v4763
  %v4772 = vpack.c.bf16 %v4768, %v4764
  %v4773 = vpack.c.bf16 %v4769, %v4765
  %4774 = vst [vmem:[#allocation2 + $0xe0] sm:$0xff] %v4770
  %4775 = vst [vmem:[#allocation2 + $0xe8] sm:$0xff] %v4771
  %4776 = vst [vmem:[#allocation2 + $0xf0] sm:$0xff] %v4772
  %4777 = vst [vmem:[#allocation2 + $0xf8] sm:$0xff] %v4773
  %4778 = vrot.lane.b32.xlu0 %v4482, 111
  %v4779 = vpop.permute.xlu0 %4778
  %4780 = vrot.lane.b32.xlu0 %v4486, 111
  %v4781 = vpop.permute.xlu0 %4780
  %4782 = vrot.lane.b32.xlu0 %v4483, 111
  %v4783 = vpop.permute.xlu0 %4782
  %4784 = vrot.lane.b32.xlu0 %v4487, 111
  %v4785 = vpop.permute.xlu0 %4784
  %4786 = vrot.lane.b32.xlu0 %v4484, 111
  %v4787 = vpop.permute.xlu0 %4786
  %4788 = vrot.lane.b32.xlu0 %v4488, 111
  %v4789 = vpop.permute.xlu0 %4788
  %4790 = vrot.lane.b32.xlu0 %v4485, 111
  %v4791 = vpop.permute.xlu0 %4790
  %4792 = vrot.lane.b32.xlu0 %v4489, 111
  %v4793 = vpop.permute.xlu0 %4792
  %v4794 = vsel %vm543, %v4787, %v4791
  %v4795 = vsel %vm543, %v4789, %v4793
  %v4796 = vsel %vm543, %v4783, %v4787
  %v4797 = vsel %vm543, %v4785, %v4789
  %v4798 = vsel %vm543, %v4779, %v4783
  %v4799 = vsel %vm543, %v4781, %v4785
  %v4800 = vsel %vm543, %v4791, %v4779
  %v4801 = vsel %vm543, %v4793, %v4781
  %v4802 = vmul.f32 %v4798, %v166
  %v4803 = vmul.f32 %v4796, %v167
  %v4804 = vmul.f32 %v4794, %v168
  %v4805 = vmul.f32 %v4800, %v169
  %v4806 = vmul.f32 %v4799, %v166
  %v4807 = vmul.f32 %v4797, %v167
  %v4808 = vmul.f32 %v4795, %v168
  %v4809 = vmul.f32 %v4801, %v169
  %v4810 = vpack.c.bf16 %v4806, %v4802
  %v4811 = vpack.c.bf16 %v4807, %v4803
  %v4812 = vpack.c.bf16 %v4808, %v4804
  %v4813 = vpack.c.bf16 %v4809, %v4805
  %4814 = vst [vmem:[#allocation2 + $0x100] sm:$0xff] %v4810
  %4815 = vst [vmem:[#allocation2 + $0x108] sm:$0xff] %v4811
  %4816 = vst [vmem:[#allocation2 + $0x110] sm:$0xff] %v4812
  %4817 = vst [vmem:[#allocation2 + $0x118] sm:$0xff] %v4813
  %v4818 = vld [vmem:[%s11] sm:$0x3]
  %v4819 = vld [vmem:[#allocation2] sm:$0xff]
  %v4820 = vld [vmem:[#allocation2 + $0x8] sm:$0xff]
  %v4821 = vld [vmem:[#allocation2 + $0x10] sm:$0xff]
  %v4822 = vld [vmem:[#allocation2 + $0x18] sm:$0xff]
  %v4823 = vld [vmem:[#allocation2 + $0x20] sm:$0xff]
  %v4824 = vld [vmem:[#allocation2 + $0x28] sm:$0xff]
  %v4825 = vld [vmem:[#allocation2 + $0x30] sm:$0xff]
  %v4826 = vld [vmem:[#allocation2 + $0x38] sm:$0xff]
  %v4827 = vld [vmem:[#allocation2 + $0x40] sm:$0xff]
  %v4828 = vld [vmem:[#allocation2 + $0x48] sm:$0xff]
  %v4829 = vld [vmem:[#allocation2 + $0x50] sm:$0xff]
  %v4830 = vld [vmem:[#allocation2 + $0x58] sm:$0xff]
  %v4831 = vld [vmem:[#allocation2 + $0x60] sm:$0xff]
  %v4832 = vld [vmem:[#allocation2 + $0x68] sm:$0xff]
  %v4833 = vld [vmem:[#allocation2 + $0x70] sm:$0xff]
  %v4834 = vld [vmem:[#allocation2 + $0x78] sm:$0xff]
  %v4835 = vld [vmem:[#allocation2 + $0x80] sm:$0xff]
  %v4836 = vld [vmem:[#allocation2 + $0x88] sm:$0xff]
  %v4837 = vld [vmem:[#allocation2 + $0x90] sm:$0xff]
  %v4838 = vld [vmem:[#allocation2 + $0x98] sm:$0xff]
  %v4839 = vld [vmem:[#allocation2 + $0xa0] sm:$0xff]
  %v4840 = vld [vmem:[#allocation2 + $0xa8] sm:$0xff]
  %v4841 = vld [vmem:[#allocation2 + $0xb0] sm:$0xff]
  %v4842 = vld [vmem:[#allocation2 + $0xb8] sm:$0xff]
  %v4843 = vld [vmem:[#allocation2 + $0xc0] sm:$0xff]
  %v4844 = vld [vmem:[#allocation2 + $0xc8] sm:$0xff]
  %v4845 = vld [vmem:[#allocation2 + $0xd0] sm:$0xff]
  %v4846 = vld [vmem:[#allocation2 + $0xd8] sm:$0xff]
  %v4847 = vld [vmem:[#allocation2 + $0xe0] sm:$0xff]
  %v4848 = vld [vmem:[#allocation2 + $0xe8] sm:$0xff]
  %v4849 = vld [vmem:[#allocation2 + $0xf0] sm:$0xff]
  %v4850 = vld [vmem:[#allocation2 + $0xf8] sm:$0xff]
  %v4851 = vld [vmem:[#allocation2 + $0x100] sm:$0xff]
  %v4852 = vld [vmem:[#allocation2 + $0x108] sm:$0xff]
  %v4853 = vld [vmem:[#allocation2 + $0x110] sm:$0xff]
  %v4854 = vld [vmem:[#allocation2 + $0x118] sm:$0xff]
  %v4855 = vld [vmem:[%s12] sm:$0x3]
  %4857 = vset.pattern.permute.xlu0 0
  %4858 = vperm.xlu0 %4857, %v4855
  %v4859 = vpop.permute.xlu0 %4858
  %v4863 = vunpack.c.l.s4 1966171168
  %v4864 = vunpack.c.0.s8 %v4863
  %v4865 = vlaneseq
  %v4866 = vshrl.u32 %v4865, 7
  %v4867 = vsub.s32 %v4864, %v4866
  %v4868 = vrot.slane %v4818, %v4867
  %v4869 = vcombine.high %v4868, %v4868
  %v4871 = vunpack.c.l.s4 1966171168
  %v4872 = vunpack.c.0.s8 %v4871
  %v4873 = vlaneseq
  %v4874 = vshrl.u32 %v4873, 7
  %v4875 = vsub.s32 %v4872, %v4874
  %v4876 = vrot.slane %v4868, %v4875
  %v4878 = vunpack.c.l.s4 1966171168
  %v4879 = vunpack.c.0.s8 %v4878
  %v4880 = vlaneseq
  %v4881 = vshrl.u32 %v4880, 7
  %v4882 = vsub.s32 %v4879, %v4881
  %v4883 = vrot.slane %v4869, %v4882
  %v4886 = vsel %vm627, %v4883, 0
  %4888 = vmatprep.subr.bf16.mxu0 %v4820
  %4889 = vmatpush1.bf16.msra.mxu0 %v4819
  %4890 = vmatprep.subr.bf16.mxu0 %v4824
  %4891 = vmatpush1.bf16.msra.mxu0 %v4823
  %4892 = vmatprep.subr.bf16.mxu0 %v4828
  %4893 = vmatpush1.bf16.msra.mxu0 %v4827
  %4894 = vmatprep.subr.bf16.mxu0 %v4832
  %4895 = vmatpush1.bf16.msra.mxu0 %v4831
  %4896 = vmatprep.subr.bf16.mxu0 %v4836
  %4897 = vmatpush1.bf16.msra.mxu0 %v4835
  %4898 = vmatprep.subr.bf16.mxu0 %v4840
  %4899 = vmatpush1.bf16.msra.mxu0 %v4839
  %4900 = vmatprep.subr.bf16.mxu0 %v4844
  %4901 = vmatpush1.bf16.msra.mxu0 %v4843
  %4902 = vmatprep.subr.bf16.mxu0 %v4848
  %4903 = vmatpush1.bf16.msra.mxu0 %v4847
  %4904 = vmatprep.subr.bf16.mxu0 %v4852
  %4905 = vmatpush1.bf16.msra.mxu0 %v4851
  %4906 = vmatprep.subr.bf16.mxu0 0
  %4907 = vmatpush1.bf16.msra.mxu0 0
  %4908 = vmatprep.subr.bf16.mxu0 0
  %4909 = vmatpush1.bf16.msra.mxu0 0
  %4910 = vmatprep.subr.bf16.mxu0 0
  %4911 = vmatpush1.bf16.msra.mxu0 0
  %4912 = vmatprep.subr.bf16.mxu0 0
  %4913 = vmatpush1.bf16.msra.mxu0 0
  %4914 = vmatprep.subr.bf16.mxu0 0
  %4915 = vmatpush1.bf16.msra.mxu0 0
  %4916 = vmatprep.subr.bf16.mxu0 0
  %4917 = vmatpush1.bf16.msra.mxu0 0
  %4918 = vmatprep.subr.bf16.mxu0 0
  %4919 = vmatpush1.bf16.msra.mxu0 0
  %4920 = vmatprep.mubr.bf16.mxu0 %v4886
  %4921 = vmatmul.mubr.bf16.gmra.mrb[0].mxu0 %v4876
  %v4922 = vpop.f32.mrb[0].mxu0
  %v4923 = vadd.f32 %v4859, %v4922
  %v4924 = vpop.f32.mrb[0].mxu0
  %v4925 = vadd.f32 %v4859, %v4924
  %v4926 = vpop.f32.mrb[0].mxu0
  %v4927 = vpop.f32.mrb[0].mxu0
  %4928 = vdwg.mxu0
  %4929 = vmatprep.subr.bf16.mxu0 %v4822
  %4930 = vmatpush1.bf16.msra.mxu0 %v4821
  %4931 = vmatprep.subr.bf16.mxu0 %v4826
  %4932 = vmatpush1.bf16.msra.mxu0 %v4825
  %4933 = vmatprep.subr.bf16.mxu0 %v4830
  %4934 = vmatpush1.bf16.msra.mxu0 %v4829
  %4935 = vmatprep.subr.bf16.mxu0 %v4834
  %4936 = vmatpush1.bf16.msra.mxu0 %v4833
  %4937 = vmatprep.subr.bf16.mxu0 %v4838
  %4938 = vmatpush1.bf16.msra.mxu0 %v4837
  %4939 = vmatprep.subr.bf16.mxu0 %v4842
  %4940 = vmatpush1.bf16.msra.mxu0 %v4841
  %4941 = vmatprep.subr.bf16.mxu0 %v4846
  %4942 = vmatpush1.bf16.msra.mxu0 %v4845
  %4943 = vmatprep.subr.bf16.mxu0 %v4850
  %4944 = vmatpush1.bf16.msra.mxu0 %v4849
  %4945 = vmatprep.subr.bf16.mxu0 %v4854
  %4946 = vmatpush1.bf16.msra.mxu0 %v4853
  %4947 = vmatprep.subr.bf16.mxu0 0
  %4948 = vmatpush1.bf16.msra.mxu0 0
  %4949 = vmatprep.subr.bf16.mxu0 0
  %4950 = vmatpush1.bf16.msra.mxu0 0
  %4951 = vmatprep.subr.bf16.mxu0 0
  %4952 = vmatpush1.bf16.msra.mxu0 0
  %4953 = vmatprep.subr.bf16.mxu0 0
  %4954 = vmatpush1.bf16.msra.mxu0 0
  %4955 = vmatprep.subr.bf16.mxu0 0
  %4956 = vmatpush1.bf16.msra.mxu0 0
  %4957 = vmatprep.subr.bf16.mxu0 0
  %4958 = vmatpush1.bf16.msra.mxu0 0
  %4959 = vmatprep.subr.bf16.mxu0 0
  %4960 = vmatpush1.bf16.msra.mxu0 0
  %4961 = vmatprep.mubr.bf16.mxu0 %v4886
  %4962 = vmatmul.mubr.bf16.gmra.mrb[0].mxu0 %v4876
  %v4963 = vpop.f32.mrb[0].mxu0
  %v4964 = vadd.f32 %v4859, %v4963
  %v4965 = vpop.f32.mrb[0].mxu0
  %v4966 = vadd.f32 %v4859, %v4965
  %v4967 = vpop.f32.mrb[0].mxu0
  %v4968 = vpop.f32.mrb[0].mxu0
  %4969 = vdwg.mxu0
  %v4974 = vcombine.low %v4923, %v4925
  %v4975 = vcombine.low %v4964, %v4966
  %v4977 = vunpack.c.l.s4 1983009808
  %v4978 = vunpack.c.0.s8 %v4977
  %v4979 = vlaneseq
  %v4980 = vshrl.u32 %v4979, 7
  %v4981 = vsub.s32 %v4978, %v4980
  %v4982 = vrot.slane %v4974, %v4981
  %v4984 = vunpack.c.l.s4 1983009808
  %v4985 = vunpack.c.0.s8 %v4984
  %v4986 = vlaneseq
  %v4987 = vshrl.u32 %v4986, 7
  %v4988 = vsub.s32 %v4985, %v4987
  %v4989 = vrot.slane %v4975, %v4988
  %v4990 = vcombine.low %v4982, %v4989
  %4992 = vst [vmem:[%s17] sm:$0xff] %v4990
  // Predicated region
  $region70: #{net_forward.1} parent=0 // pred_check
    _
  $region71: #{net_forward.1} parent=0 // pred_check_branch
    %4994 = sbr.rel (0) target = $region73
  $region72: #{net_forward.1} parent=0 // pred_region
    _
  $region73: #{net_forward.1} parent=0 // pred_fallthru
    _
  // Predicated region
  $region74: #{net_forward.1} parent=0 // pred_check
    _
  $region75: #{net_forward.1} parent=0 // pred_check_branch
    %4996 = sbr.rel (0) target = $region77
  $region76: #{net_forward.1} parent=0 // pred_region
    _
  $region77: #{net_forward.1} parent=0 // pred_fallthru
    _

</llo_original>
